<compile_context>
chip_gen: v5e
topology: v5e:2x2
jax: 0.10.0
libtpu: 0.0.40
codegen_flags: <defaults>
</compile_context>

<pallas_src>
import functools

import jax
import jax.numpy as jnp
from jax import lax
from jax.experimental import pallas as pl
from jax.experimental.pallas import tpu as pltpu


# ------------------------------ Pallas kernel --------------------------------

def _bilstm_model_kernel(x_ref, w1_ih_ref, b1_ref, w1_hh_ref,
                         w2_ih_ref, b2_ref, w2_hh_ref,
                         w2b_ih_ref, b2b_ref, fc_w_ref, fc_b_ref,
                         out_ref, *, seq_len, batch, hidden):
    """Whole BitcoinBiLSTM forward in a single kernel.

    x_ref      (T*B, D)      time-major flattened input (batch already padded)
    w1_ih_ref  (4, D, 2H)    layer-1 input weights per torch gate [i,f,g,o];
                             columns = [fwd H | bwd H]
    b1_ref     (4, 1, 2H)    layer-1 fused bias (b_ih + b_hh) per gate
    w1_hh_ref  (4, 2H, 2H)   layer-1 per-gate block-diagonal recurrent weights
    w2_ih_ref  (4, 2H, H)    layer-2 fwd input weights per gate
    b2_ref     (4, 1, H)
    w2_hh_ref  (4, H, H)     layer-2 fwd recurrent weights per gate
    w2b_ih_ref (2H, 4H)      layer-2 bwd input weights (only its step at T-1)
    b2b_ref    (1, 4H)
    fc_w_ref   (2H, 128)     zero-padded columns 5..127
    fc_b_ref   (1, 128)
    out_ref    (B, 128)
    """
    T, B, H = seq_len, batch, hidden
    H2 = 2 * H
    f32 = jnp.float32

    x = x_ref[...]                                              # (T*B, D)
    lane = lax.broadcasted_iota(jnp.int32, (B, H2), 1)
    is_fwd = lane < H                                           # lanes [:H]=fwd, [H:]=bwd

    # ---- Layer 1: hoisted per-gate input projections (off the carry chain) --
    # At loop step t the fwd direction consumes x[t], the bwd direction x[T-1-t];
    # the combine is a lane-masked select done once per (gate, step), outside
    # the recurrence.
    pre1 = []
    for k in range(4):                                          # torch order i,f,g,o
        pk = jnp.dot(x, w1_ih_ref[k], preferred_element_type=f32) + b1_ref[k]  # (T*B, 2H)
        rows = [pk[t * B:(t + 1) * B, :] for t in range(T)]
        pre1.append([jnp.where(is_fwd, rows[t], rows[T - 1 - t]) for t in range(T)])

    w1hh = [w1_hh_ref[k] for k in range(4)]                     # 4 x (2H, 2H)

    h1 = jnp.zeros((B, H2), f32)
    c1 = jnp.zeros((B, H2), f32)
    h1_steps = []
    for t in range(T):      # fully unrolled; every slab lane-aligned with h1/c1
        ig = jax.nn.sigmoid(pre1[0][t] + jnp.dot(h1, w1hh[0], preferred_element_type=f32))
        fg = jax.nn.sigmoid(pre1[1][t] + jnp.dot(h1, w1hh[1], preferred_element_type=f32))
        gg = jnp.tanh(      pre1[2][t] + jnp.dot(h1, w1hh[2], preferred_element_type=f32))
        og = jax.nn.sigmoid(pre1[3][t] + jnp.dot(h1, w1hh[3], preferred_element_type=f32))
        c1 = fg * c1 + ig * gg
        h1 = og * jnp.tanh(c1)
        h1_steps.append(h1)                                     # no stores in the loop

    # dropout1 (eval identity) + ReLU; reassemble y1 in ORIGINAL time order:
    # fwd half of time t comes from step t, bwd half from step T-1-t.
    relu_h1 = [jnp.maximum(h, 0.0) for h in h1_steps]
    y1_rows = [jnp.where(is_fwd, relu_h1[t], relu_h1[T - 1 - t]) for t in range(T)]
    y1 = jnp.concatenate(y1_rows, axis=0)                       # (T*B, 2H)

    # ---- Layer 2 forward: only the final hidden state feeds the FC ----------
    pre2 = []
    for k in range(4):
        pk = jnp.dot(y1, w2_ih_ref[k], preferred_element_type=f32) + b2_ref[k]  # (T*B, H)
        pre2.append([pk[t * B:(t + 1) * B, :] for t in range(T)])
    w2hh = [w2_hh_ref[k] for k in range(4)]                     # 4 x (H, H)

    h2 = jnp.zeros((B, H), f32)
    c2 = jnp.zeros((B, H), f32)
    for t in range(T):
        ig = jax.nn.sigmoid(pre2[0][t] + jnp.dot(h2, w2hh[0], preferred_element_type=f32))
        fg = jax.nn.sigmoid(pre2[1][t] + jnp.dot(h2, w2hh[1], preferred_element_type=f32))
        gg = jnp.tanh(      pre2[2][t] + jnp.dot(h2, w2hh[2], preferred_element_type=f32))
        og = jax.nn.sigmoid(pre2[3][t] + jnp.dot(h2, w2hh[3], preferred_element_type=f32))
        c2 = fg * c2 + ig * gg
        h2 = og * jnp.tanh(c2)
    h2f = jnp.maximum(h2, 0.0)

    # ---- Layer 2 backward: only its output at original time T-1 is used, and
    # it starts from h0 = c0 = 0, so there is no recurrent matmul at all. -----
    gb = (jnp.dot(y1_rows[T - 1], w2b_ih_ref[...], preferred_element_type=f32)
          + b2b_ref[...])                                       # (B, 4H) torch order
    ib = jax.nn.sigmoid(gb[:, :H])
    ggb = jnp.tanh(gb[:, 2 * H:3 * H])
    ob = jax.nn.sigmoid(gb[:, 3 * H:])
    h2b = jnp.maximum(ob * jnp.tanh(ib * ggb), 0.0)             # f * c0 == 0

    # ---- FC head: 128-lane padded columns -> single unmasked store ----------
    last = jnp.concatenate([h2f, h2b], axis=1)                  # (B, 2H)
    out_ref[...] = (jnp.dot(last, fc_w_ref[...], preferred_element_type=f32)
                    + fc_b_ref[...])


# -------------------------------- wrapper -------------------------------------

_VMEM = pl.BlockSpec(memory_space=pltpu.MemorySpace.VMEM)


@jax.jit
def bitcoin_bilstm_forward(kparams, x):
    """x: (B, T, input_size) batch_first float32.  Returns (B, 5)."""
    B, T, D = x.shape
    H = kparams["w2_hh"].shape[-1]
    # Fill the sublane dimension: pad batch to a multiple of 8 so the serial
    # recurrence runs on full sublanes; padded rows are discarded afterwards.
    B_pad = max(8, -(-B // 8) * 8)
    x_p = jnp.zeros((B_pad, T, D), x.dtype).at[:B].set(x)
    x2d = jnp.transpose(x_p, (1, 0, 2)).reshape(T * B_pad, D)   # time-major rows

    kern = functools.partial(_bilstm_model_kernel,
                             seq_len=T, batch=B_pad, hidden=H)
    out = pl.pallas_call(
        kern,
        out_shape=jax.ShapeDtypeStruct((B_pad, 128), jnp.float32),
        in_specs=[_VMEM] * 11,
        out_specs=_VMEM,
    )(x2d, kparams["w1_ih"], kparams["b1"], kparams["w1_hh"],
      kparams["w2_ih"], kparams["b2"], kparams["w2_hh"],
      kparams["w2b_ih"], kparams["b2b"], kparams["fc_w"], kparams["fc_b"])
    return out[:B, :5]


# ---------------------- parameter building / repacking ------------------------

def make_torch_params(key, input_size, hidden):
    """Parameters in exact PyTorch nn.LSTM / nn.Linear layouts."""
    def lstm_dir(k, in_dim):
        kk = 1.0 / (hidden ** 0.5)
        k1, k2, k3, k4 = jax.random.split(k, 4)
        return dict(
            w_ih=jax.random.uniform(k1, (4 * hidden, in_dim), jnp.float32, -kk, kk),
            w_hh=jax.random.uniform(k2, (4 * hidden, hidden), jnp.float32, -kk, kk),
            b_ih=jax.random.uniform(k3, (4 * hidden,), jnp.float32, -kk, kk),
            b_hh=jax.random.uniform(k4, (4 * hidden,), jnp.float32, -kk, kk))
    keys = jax.random.split(key, 6)
    kfc = 1.0 / ((2 * hidden) ** 0.5)
    return dict(
        l1_f=lstm_dir(keys[0], input_size), l1_b=lstm_dir(keys[1], input_size),
        l2_f=lstm_dir(keys[2], 2 * hidden), l2_b=lstm_dir(keys[3], 2 * hidden),
        fc_w=jax.random.uniform(keys[4], (5, 2 * hidden), jnp.float32, -kfc, kfc),
        fc_b=jax.random.uniform(keys[5], (5,), jnp.float32, -kfc, kfc))


def prepare_kernel_params(tp, hidden):
    """Repack torch-layout params into the per-gate, lane-aligned kernel layout.

    Torch gate row order [i, f, g, o] is kept; no gate reordering is needed
    because every gate gets its own weight block / projection.
    (Note: the zero-padded block-diagonal layer-1 layout is only appropriate at
    small H; at H >= 128 run the two directions as separate compact matmuls.)
    """
    H = hidden

    def g(w, k):                              # (4H, X) torch -> gate-k rows (H, X)
        return w[k * H:(k + 1) * H, :]

    zero_hh = jnp.zeros((H, H), jnp.float32)
    w1_ih, b1, w1_hh = [], [], []
    for k in range(4):
        w1_ih.append(jnp.concatenate([g(tp["l1_f"]["w_ih"], k).T,
                                      g(tp["l1_b"]["w_ih"], k).T], axis=1))     # (D, 2H)
        bf = (tp["l1_f"]["b_ih"] + tp["l1_f"]["b_hh"])[k * H:(k + 1) * H]
        bb = (tp["l1_b"]["b_ih"] + tp["l1_b"]["b_hh"])[k * H:(k + 1) * H]
        b1.append(jnp.concatenate([bf, bb])[None, :])                           # (1, 2H)
        top = jnp.concatenate([g(tp["l1_f"]["w_hh"], k).T, zero_hh], axis=1)
        bot = jnp.concatenate([zero_hh, g(tp["l1_b"]["w_hh"], k).T], axis=1)
        w1_hh.append(jnp.concatenate([top, bot], axis=0))                       # (2H, 2H)

    w2_ih = [g(tp["l2_f"]["w_ih"], k).T for k in range(4)]                      # (2H, H)
    b2f = tp["l2_f"]["b_ih"] + tp["l2_f"]["b_hh"]
    b2 = [b2f[k * H:(k + 1) * H][None, :] for k in range(4)]                    # (1, H)
    w2_hh = [g(tp["l2_f"]["w_hh"], k).T for k in range(4)]                      # (H, H)

    fc_w = jnp.zeros((2 * H, 128), jnp.float32).at[:, :5].set(tp["fc_w"].T)
    fc_b = jnp.zeros((1, 128), jnp.float32).at[:, :5].set(tp["fc_b"][None, :])

    return dict(
        w1_ih=jnp.stack(w1_ih), b1=jnp.stack(b1), w1_hh=jnp.stack(w1_hh),
        w2_ih=jnp.stack(w2_ih), b2=jnp.stack(b2), w2_hh=jnp.stack(w2_hh),
        w2b_ih=tp["l2_b"]["w_ih"].T,
        b2b=(tp["l2_b"]["b_ih"] + tp["l2_b"]["b_hh"])[None, :],
        fc_w=fc_w, fc_b=fc_b)


# ------------------------- pure-JAX reference (check) -------------------------

def _lstm_ref_dir(x_tm, p, apply_relu):
    H = p["w_hh"].shape[1]
    B = x_tm.shape[1]
    w_ih_t, w_hh_t = p["w_ih"].T, p["w_hh"].T
    b = (p["b_ih"] + p["b_hh"])[None, :]

    def step(carry, x_t):
        h, c = carry
        gates = (jnp.dot(x_t, w_ih_t, precision=lax.Precision.HIGHEST)
                 + jnp.dot(h, w_hh_t, precision=lax.Precision.HIGHEST) + b)
        i = jax.nn.sigmoid(gates[:, :H])
        f = jax.nn.sigmoid(gates[:, H:2 * H])
        g = jnp.tanh(gates[:, 2 * H:3 * H])
        o = jax.nn.sigmoid(gates[:, 3 * H:])
        c = f * c + i * g
        h = o * jnp.tanh(c)
        out = jnp.maximum(h, 0.0) if apply_relu else h
        return (h, c), out

    init = (jnp.zeros((B, H), jnp.float32), jnp.zeros((B, H), jnp.float32))
    _, ys = lax.scan(step, init, x_tm)
    return ys


@jax.jit
def reference_forward(tp, x):
    x_tm = jnp.transpose(x, (1, 0, 2))
    y1 = jnp.concatenate([_lstm_ref_dir(x_tm, tp["l1_f"], True),
                          _lstm_ref_dir(x_tm[::-1], tp["l1_b"], True)[::-1]],
                         axis=-1)
    y2 = jnp.concatenate([_lstm_ref_dir(y1, tp["l2_f"], True),
                          _lstm_ref_dir(y1[::-1], tp["l2_b"], True)[::-1]],
                         axis=-1)
    return (jnp.dot(y2[-1], tp["fc_w"].T, precision=lax.Precision.HIGHEST)
            + tp["fc_b"][None, :])


# ----------------------------------- main --------------------------------------

if __name__ == "__main__":
    BATCH, SEQ, INPUT_SIZE, HIDDEN = 2, 8, 8, 32

    key = jax.random.PRNGKey(0)
    pkey, xkey = jax.random.split(key)
    torch_params = make_torch_params(pkey, INPUT_SIZE, HIDDEN)
    kernel_params = prepare_kernel_params(torch_params, HIDDEN)
    x = jax.random.normal(xkey, (BATCH, SEQ, INPUT_SIZE), jnp.float32)

    out = jax.block_until_ready(bitcoin_bilstm_forward(kernel_params, x))
    ref = jax.block_until_ready(reference_forward(torch_params, x))

    assert out.shape == (BATCH, 5), out.shape
    assert jnp.allclose(out, ref, atol=2e-4, rtol=2e-4), (out, ref)
    print("KERNEL_OK")
</pallas_src>

<mosaic_0001>
module attributes {stable_mosaic.version = 11 : i64} {
  func.func @_bilstm_model_kernel(%arg0: memref<64x8xf32, #tpu.memory_space<vmem>>, %arg1: memref<4x8x64xf32, #tpu.memory_space<vmem>>, %arg2: memref<4x1x64xf32, #tpu.memory_space<vmem>>, %arg3: memref<4x64x64xf32, #tpu.memory_space<vmem>>, %arg4: memref<4x64x32xf32, #tpu.memory_space<vmem>>, %arg5: memref<4x1x32xf32, #tpu.memory_space<vmem>>, %arg6: memref<4x32x32xf32, #tpu.memory_space<vmem>>, %arg7: memref<64x128xf32, #tpu.memory_space<vmem>>, %arg8: memref<1x128xf32, #tpu.memory_space<vmem>>, %arg9: memref<64x128xf32, #tpu.memory_space<vmem>>, %arg10: memref<1x128xf32, #tpu.memory_space<vmem>>, %arg11: memref<8x128xf32, #tpu.memory_space<vmem>>) attributes {dimension_semantics = [], scalar_prefetch = 0 : i64, scratch_operands = 0 : i64, tpu.core_type = #tpu.core_type<tc>} {
    %c0 = arith.constant 0 : index
    %c0_0 = arith.constant 0 : index
    %0 = vector.load %arg0[%c0, %c0_0] : memref<64x8xf32, #tpu.memory_space<vmem>>, vector<64x8xf32>
    %1 = tpu.iota {dimensions = array<i32: 1>} : vector<8x64xi32>
    %c32_i32 = arith.constant 32 : i32
    %2 = vector.broadcast %c32_i32 : i32 to vector<8x64xi32>
    %3 = arith.cmpi slt, %1, %2 : vector<8x64xi32>
    %c0_1 = arith.constant 0 : index
    %c0_2 = arith.constant 0 : index
    %c0_3 = arith.constant 0 : index
    %4 = vector.load %arg1[%c0_1, %c0_2, %c0_3] : memref<4x8x64xf32, #tpu.memory_space<vmem>>, vector<1x8x64xf32>
    %5 = vector.shape_cast %4 : vector<1x8x64xf32> to vector<8x64xf32>
    %cst = arith.constant dense<0.000000e+00> : vector<64x64xf32>
    %6 = tpu.matmul %0, %5, %cst {dimension_numbers = #tpu.dot_dimension_numbers<[1], [0], [0], [1], [0, 0, 1, 1], [], []>} : vector<64x8xf32>, vector<8x64xf32>, vector<64x64xf32> -> vector<64x64xf32>
    %c0_4 = arith.constant 0 : index
    %c0_5 = arith.constant 0 : index
    %c0_6 = arith.constant 0 : index
    %7 = vector.load %arg2[%c0_4, %c0_5, %c0_6] : memref<4x1x64xf32, #tpu.memory_space<vmem>>, vector<1x1x64xf32>
    %8 = vector.shape_cast %7 : vector<1x1x64xf32> to vector<1x64xf32>
    %9 = vector.broadcast %8 : vector<1x64xf32> to vector<64x64xf32>
    %10 = arith.addf %6, %9 : vector<64x64xf32>
    %11 = vector.extract_strided_slice %10 {offsets = [0, 0], sizes = [8, 64], strides = [1, 1]} : vector<64x64xf32> to vector<8x64xf32>
    %12 = vector.extract_strided_slice %10 {offsets = [8, 0], sizes = [8, 64], strides = [1, 1]} : vector<64x64xf32> to vector<8x64xf32>
    %13 = vector.extract_strided_slice %10 {offsets = [16, 0], sizes = [8, 64], strides = [1, 1]} : vector<64x64xf32> to vector<8x64xf32>
    %14 = vector.extract_strided_slice %10 {offsets = [24, 0], sizes = [8, 64], strides = [1, 1]} : vector<64x64xf32> to vector<8x64xf32>
    %15 = vector.extract_strided_slice %10 {offsets = [32, 0], sizes = [8, 64], strides = [1, 1]} : vector<64x64xf32> to vector<8x64xf32>
    %16 = vector.extract_strided_slice %10 {offsets = [40, 0], sizes = [8, 64], strides = [1, 1]} : vector<64x64xf32> to vector<8x64xf32>
    %17 = vector.extract_strided_slice %10 {offsets = [48, 0], sizes = [8, 64], strides = [1, 1]} : vector<64x64xf32> to vector<8x64xf32>
    %18 = vector.extract_strided_slice %10 {offsets = [56, 0], sizes = [8, 64], strides = [1, 1]} : vector<64x64xf32> to vector<8x64xf32>
    %19 = arith.select %3, %11, %18 : vector<8x64xi1>, vector<8x64xf32>
    %20 = arith.select %3, %12, %17 : vector<8x64xi1>, vector<8x64xf32>
    %21 = arith.select %3, %13, %16 : vector<8x64xi1>, vector<8x64xf32>
    %22 = arith.select %3, %14, %15 : vector<8x64xi1>, vector<8x64xf32>
    %23 = arith.select %3, %15, %14 : vector<8x64xi1>, vector<8x64xf32>
    %24 = arith.select %3, %16, %13 : vector<8x64xi1>, vector<8x64xf32>
    %25 = arith.select %3, %17, %12 : vector<8x64xi1>, vector<8x64xf32>
    %26 = arith.select %3, %18, %11 : vector<8x64xi1>, vector<8x64xf32>
    %c1 = arith.constant 1 : index
    %c0_7 = arith.constant 0 : index
    %c0_8 = arith.constant 0 : index
    %27 = vector.load %arg1[%c1, %c0_7, %c0_8] : memref<4x8x64xf32, #tpu.memory_space<vmem>>, vector<1x8x64xf32>
    %28 = vector.shape_cast %27 : vector<1x8x64xf32> to vector<8x64xf32>
    %cst_9 = arith.constant dense<0.000000e+00> : vector<64x64xf32>
    %29 = tpu.matmul %0, %28, %cst_9 {dimension_numbers = #tpu.dot_dimension_numbers<[1], [0], [0], [1], [0, 0, 1, 1], [], []>} : vector<64x8xf32>, vector<8x64xf32>, vector<64x64xf32> -> vector<64x64xf32>
    %c1_10 = arith.constant 1 : index
    %c0_11 = arith.constant 0 : index
    %c0_12 = arith.constant 0 : index
    %30 = vector.load %arg2[%c1_10, %c0_11, %c0_12] : memref<4x1x64xf32, #tpu.memory_space<vmem>>, vector<1x1x64xf32>
    %31 = vector.shape_cast %30 : vector<1x1x64xf32> to vector<1x64xf32>
    %32 = vector.broadcast %31 : vector<1x64xf32> to vector<64x64xf32>
    %33 = arith.addf %29, %32 : vector<64x64xf32>
    %34 = vector.extract_strided_slice %33 {offsets = [0, 0], sizes = [8, 64], strides = [1, 1]} : vector<64x64xf32> to vector<8x64xf32>
    %35 = vector.extract_strided_slice %33 {offsets = [8, 0], sizes = [8, 64], strides = [1, 1]} : vector<64x64xf32> to vector<8x64xf32>
    %36 = vector.extract_strided_slice %33 {offsets = [16, 0], sizes = [8, 64], strides = [1, 1]} : vector<64x64xf32> to vector<8x64xf32>
    %37 = vector.extract_strided_slice %33 {offsets = [24, 0], sizes = [8, 64], strides = [1, 1]} : vector<64x64xf32> to vector<8x64xf32>
    %38 = vector.extract_strided_slice %33 {offsets = [32, 0], sizes = [8, 64], strides = [1, 1]} : vector<64x64xf32> to vector<8x64xf32>
    %39 = vector.extract_strided_slice %33 {offsets = [40, 0], sizes = [8, 64], strides = [1, 1]} : vector<64x64xf32> to vector<8x64xf32>
    %40 = vector.extract_strided_slice %33 {offsets = [48, 0], sizes = [8, 64], strides = [1, 1]} : vector<64x64xf32> to vector<8x64xf32>
    %41 = vector.extract_strided_slice %33 {offsets = [56, 0], sizes = [8, 64], strides = [1, 1]} : vector<64x64xf32> to vector<8x64xf32>
    %42 = arith.select %3, %34, %41 : vector<8x64xi1>, vector<8x64xf32>
    %43 = arith.select %3, %35, %40 : vector<8x64xi1>, vector<8x64xf32>
    %44 = arith.select %3, %36, %39 : vector<8x64xi1>, vector<8x64xf32>
    %45 = arith.select %3, %37, %38 : vector<8x64xi1>, vector<8x64xf32>
    %46 = arith.select %3, %38, %37 : vector<8x64xi1>, vector<8x64xf32>
    %47 = arith.select %3, %39, %36 : vector<8x64xi1>, vector<8x64xf32>
    %48 = arith.select %3, %40, %35 : vector<8x64xi1>, vector<8x64xf32>
    %49 = arith.select %3, %41, %34 : vector<8x64xi1>, vector<8x64xf32>
    %c2 = arith.constant 2 : index
    %c0_13 = arith.constant 0 : index
    %c0_14 = arith.constant 0 : index
    %50 = vector.load %arg1[%c2, %c0_13, %c0_14] : memref<4x8x64xf32, #tpu.memory_space<vmem>>, vector<1x8x64xf32>
    %51 = vector.shape_cast %50 : vector<1x8x64xf32> to vector<8x64xf32>
    %cst_15 = arith.constant dense<0.000000e+00> : vector<64x64xf32>
    %52 = tpu.matmul %0, %51, %cst_15 {dimension_numbers = #tpu.dot_dimension_numbers<[1], [0], [0], [1], [0, 0, 1, 1], [], []>} : vector<64x8xf32>, vector<8x64xf32>, vector<64x64xf32> -> vector<64x64xf32>
    %c2_16 = arith.constant 2 : index
    %c0_17 = arith.constant 0 : index
    %c0_18 = arith.constant 0 : index
    %53 = vector.load %arg2[%c2_16, %c0_17, %c0_18] : memref<4x1x64xf32, #tpu.memory_space<vmem>>, vector<1x1x64xf32>
    %54 = vector.shape_cast %53 : vector<1x1x64xf32> to vector<1x64xf32>
    %55 = vector.broadcast %54 : vector<1x64xf32> to vector<64x64xf32>
    %56 = arith.addf %52, %55 : vector<64x64xf32>
    %57 = vector.extract_strided_slice %56 {offsets = [0, 0], sizes = [8, 64], strides = [1, 1]} : vector<64x64xf32> to vector<8x64xf32>
    %58 = vector.extract_strided_slice %56 {offsets = [8, 0], sizes = [8, 64], strides = [1, 1]} : vector<64x64xf32> to vector<8x64xf32>
    %59 = vector.extract_strided_slice %56 {offsets = [16, 0], sizes = [8, 64], strides = [1, 1]} : vector<64x64xf32> to vector<8x64xf32>
    %60 = vector.extract_strided_slice %56 {offsets = [24, 0], sizes = [8, 64], strides = [1, 1]} : vector<64x64xf32> to vector<8x64xf32>
    %61 = vector.extract_strided_slice %56 {offsets = [32, 0], sizes = [8, 64], strides = [1, 1]} : vector<64x64xf32> to vector<8x64xf32>
    %62 = vector.extract_strided_slice %56 {offsets = [40, 0], sizes = [8, 64], strides = [1, 1]} : vector<64x64xf32> to vector<8x64xf32>
    %63 = vector.extract_strided_slice %56 {offsets = [48, 0], sizes = [8, 64], strides = [1, 1]} : vector<64x64xf32> to vector<8x64xf32>
    %64 = vector.extract_strided_slice %56 {offsets = [56, 0], sizes = [8, 64], strides = [1, 1]} : vector<64x64xf32> to vector<8x64xf32>
    %65 = arith.select %3, %57, %64 : vector<8x64xi1>, vector<8x64xf32>
    %66 = arith.select %3, %58, %63 : vector<8x64xi1>, vector<8x64xf32>
    %67 = arith.select %3, %59, %62 : vector<8x64xi1>, vector<8x64xf32>
    %68 = arith.select %3, %60, %61 : vector<8x64xi1>, vector<8x64xf32>
    %69 = arith.select %3, %61, %60 : vector<8x64xi1>, vector<8x64xf32>
    %70 = arith.select %3, %62, %59 : vector<8x64xi1>, vector<8x64xf32>
    %71 = arith.select %3, %63, %58 : vector<8x64xi1>, vector<8x64xf32>
    %72 = arith.select %3, %64, %57 : vector<8x64xi1>, vector<8x64xf32>
    %c3 = arith.constant 3 : index
    %c0_19 = arith.constant 0 : index
    %c0_20 = arith.constant 0 : index
    %73 = vector.load %arg1[%c3, %c0_19, %c0_20] : memref<4x8x64xf32, #tpu.memory_space<vmem>>, vector<1x8x64xf32>
    %74 = vector.shape_cast %73 : vector<1x8x64xf32> to vector<8x64xf32>
    %cst_21 = arith.constant dense<0.000000e+00> : vector<64x64xf32>
    %75 = tpu.matmul %0, %74, %cst_21 {dimension_numbers = #tpu.dot_dimension_numbers<[1], [0], [0], [1], [0, 0, 1, 1], [], []>} : vector<64x8xf32>, vector<8x64xf32>, vector<64x64xf32> -> vector<64x64xf32>
    %c3_22 = arith.constant 3 : index
    %c0_23 = arith.constant 0 : index
    %c0_24 = arith.constant 0 : index
    %76 = vector.load %arg2[%c3_22, %c0_23, %c0_24] : memref<4x1x64xf32, #tpu.memory_space<vmem>>, vector<1x1x64xf32>
    %77 = vector.shape_cast %76 : vector<1x1x64xf32> to vector<1x64xf32>
    %78 = vector.broadcast %77 : vector<1x64xf32> to vector<64x64xf32>
    %79 = arith.addf %75, %78 : vector<64x64xf32>
    %80 = vector.extract_strided_slice %79 {offsets = [0, 0], sizes = [8, 64], strides = [1, 1]} : vector<64x64xf32> to vector<8x64xf32>
    %81 = vector.extract_strided_slice %79 {offsets = [8, 0], sizes = [8, 64], strides = [1, 1]} : vector<64x64xf32> to vector<8x64xf32>
    %82 = vector.extract_strided_slice %79 {offsets = [16, 0], sizes = [8, 64], strides = [1, 1]} : vector<64x64xf32> to vector<8x64xf32>
    %83 = vector.extract_strided_slice %79 {offsets = [24, 0], sizes = [8, 64], strides = [1, 1]} : vector<64x64xf32> to vector<8x64xf32>
    %84 = vector.extract_strided_slice %79 {offsets = [32, 0], sizes = [8, 64], strides = [1, 1]} : vector<64x64xf32> to vector<8x64xf32>
    %85 = vector.extract_strided_slice %79 {offsets = [40, 0], sizes = [8, 64], strides = [1, 1]} : vector<64x64xf32> to vector<8x64xf32>
    %86 = vector.extract_strided_slice %79 {offsets = [48, 0], sizes = [8, 64], strides = [1, 1]} : vector<64x64xf32> to vector<8x64xf32>
    %87 = vector.extract_strided_slice %79 {offsets = [56, 0], sizes = [8, 64], strides = [1, 1]} : vector<64x64xf32> to vector<8x64xf32>
    %88 = arith.select %3, %80, %87 : vector<8x64xi1>, vector<8x64xf32>
    %89 = arith.select %3, %81, %86 : vector<8x64xi1>, vector<8x64xf32>
    %90 = arith.select %3, %82, %85 : vector<8x64xi1>, vector<8x64xf32>
    %91 = arith.select %3, %83, %84 : vector<8x64xi1>, vector<8x64xf32>
    %92 = arith.select %3, %84, %83 : vector<8x64xi1>, vector<8x64xf32>
    %93 = arith.select %3, %85, %82 : vector<8x64xi1>, vector<8x64xf32>
    %94 = arith.select %3, %86, %81 : vector<8x64xi1>, vector<8x64xf32>
    %95 = arith.select %3, %87, %80 : vector<8x64xi1>, vector<8x64xf32>
    %c0_25 = arith.constant 0 : index
    %c0_26 = arith.constant 0 : index
    %c0_27 = arith.constant 0 : index
    %96 = vector.load %arg3[%c0_25, %c0_26, %c0_27] : memref<4x64x64xf32, #tpu.memory_space<vmem>>, vector<1x64x64xf32>
    %97 = vector.shape_cast %96 : vector<1x64x64xf32> to vector<64x64xf32>
    %c1_28 = arith.constant 1 : index
    %c0_29 = arith.constant 0 : index
    %c0_30 = arith.constant 0 : index
    %98 = vector.load %arg3[%c1_28, %c0_29, %c0_30] : memref<4x64x64xf32, #tpu.memory_space<vmem>>, vector<1x64x64xf32>
    %99 = vector.shape_cast %98 : vector<1x64x64xf32> to vector<64x64xf32>
    %c2_31 = arith.constant 2 : index
    %c0_32 = arith.constant 0 : index
    %c0_33 = arith.constant 0 : index
    %100 = vector.load %arg3[%c2_31, %c0_32, %c0_33] : memref<4x64x64xf32, #tpu.memory_space<vmem>>, vector<1x64x64xf32>
    %101 = vector.shape_cast %100 : vector<1x64x64xf32> to vector<64x64xf32>
    %c3_34 = arith.constant 3 : index
    %c0_35 = arith.constant 0 : index
    %c0_36 = arith.constant 0 : index
    %102 = vector.load %arg3[%c3_34, %c0_35, %c0_36] : memref<4x64x64xf32, #tpu.memory_space<vmem>>, vector<1x64x64xf32>
    %103 = vector.shape_cast %102 : vector<1x64x64xf32> to vector<64x64xf32>
    %cst_37 = arith.constant 0.000000e+00 : f32
    %104 = vector.broadcast %cst_37 : f32 to vector<8x64xf32>
    %cst_38 = arith.constant 0.000000e+00 : f32
    %105 = vector.broadcast %cst_38 : f32 to vector<8x64xf32>
    %cst_39 = arith.constant dense<0.000000e+00> : vector<8x64xf32>
    %106 = tpu.matmul %104, %97, %cst_39 {dimension_numbers = #tpu.dot_dimension_numbers<[1], [0], [0], [1], [0, 0, 1, 1], [], []>} : vector<8x64xf32>, vector<64x64xf32>, vector<8x64xf32> -> vector<8x64xf32>
    %107 = arith.addf %19, %106 : vector<8x64xf32>
    %108 = arith.negf %107 : vector<8x64xf32>
    %109 = math.exp %108 : vector<8x64xf32>
    %cst_40 = arith.constant 1.000000e+00 : f32
    %110 = vector.broadcast %cst_40 : f32 to vector<8x64xf32>
    %111 = arith.addf %110, %109 : vector<8x64xf32>
    %112 = arith.divf %110, %111 : vector<8x64xf32>
    %cst_41 = arith.constant dense<0.000000e+00> : vector<8x64xf32>
    %113 = tpu.matmul %104, %99, %cst_41 {dimension_numbers = #tpu.dot_dimension_numbers<[1], [0], [0], [1], [0, 0, 1, 1], [], []>} : vector<8x64xf32>, vector<64x64xf32>, vector<8x64xf32> -> vector<8x64xf32>
    %114 = arith.addf %42, %113 : vector<8x64xf32>
    %115 = arith.negf %114 : vector<8x64xf32>
    %116 = math.exp %115 : vector<8x64xf32>
    %cst_42 = arith.constant 1.000000e+00 : f32
    %117 = vector.broadcast %cst_42 : f32 to vector<8x64xf32>
    %118 = arith.addf %117, %116 : vector<8x64xf32>
    %119 = arith.divf %117, %118 : vector<8x64xf32>
    %cst_43 = arith.constant dense<0.000000e+00> : vector<8x64xf32>
    %120 = tpu.matmul %104, %101, %cst_43 {dimension_numbers = #tpu.dot_dimension_numbers<[1], [0], [0], [1], [0, 0, 1, 1], [], []>} : vector<8x64xf32>, vector<64x64xf32>, vector<8x64xf32> -> vector<8x64xf32>
    %121 = arith.addf %65, %120 : vector<8x64xf32>
    %122 = math.tanh %121 : vector<8x64xf32>
    %cst_44 = arith.constant dense<0.000000e+00> : vector<8x64xf32>
    %123 = tpu.matmul %104, %103, %cst_44 {dimension_numbers = #tpu.dot_dimension_numbers<[1], [0], [0], [1], [0, 0, 1, 1], [], []>} : vector<8x64xf32>, vector<64x64xf32>, vector<8x64xf32> -> vector<8x64xf32>
    %124 = arith.addf %88, %123 : vector<8x64xf32>
    %125 = arith.negf %124 : vector<8x64xf32>
    %126 = math.exp %125 : vector<8x64xf32>
    %cst_45 = arith.constant 1.000000e+00 : f32
    %127 = vector.broadcast %cst_45 : f32 to vector<8x64xf32>
    %128 = arith.addf %127, %126 : vector<8x64xf32>
    %129 = arith.divf %127, %128 : vector<8x64xf32>
    %130 = arith.mulf %119, %105 : vector<8x64xf32>
    %131 = arith.mulf %112, %122 : vector<8x64xf32>
    %132 = arith.addf %130, %131 : vector<8x64xf32>
    %133 = math.tanh %132 : vector<8x64xf32>
    %134 = arith.mulf %129, %133 : vector<8x64xf32>
    %cst_46 = arith.constant dense<0.000000e+00> : vector<8x64xf32>
    %135 = tpu.matmul %134, %97, %cst_46 {dimension_numbers = #tpu.dot_dimension_numbers<[1], [0], [0], [1], [0, 0, 1, 1], [], []>} : vector<8x64xf32>, vector<64x64xf32>, vector<8x64xf32> -> vector<8x64xf32>
    %136 = arith.addf %20, %135 : vector<8x64xf32>
    %137 = arith.negf %136 : vector<8x64xf32>
    %138 = math.exp %137 : vector<8x64xf32>
    %cst_47 = arith.constant 1.000000e+00 : f32
    %139 = vector.broadcast %cst_47 : f32 to vector<8x64xf32>
    %140 = arith.addf %139, %138 : vector<8x64xf32>
    %141 = arith.divf %139, %140 : vector<8x64xf32>
    %cst_48 = arith.constant dense<0.000000e+00> : vector<8x64xf32>
    %142 = tpu.matmul %134, %99, %cst_48 {dimension_numbers = #tpu.dot_dimension_numbers<[1], [0], [0], [1], [0, 0, 1, 1], [], []>} : vector<8x64xf32>, vector<64x64xf32>, vector<8x64xf32> -> vector<8x64xf32>
    %143 = arith.addf %43, %142 : vector<8x64xf32>
    %144 = arith.negf %143 : vector<8x64xf32>
    %145 = math.exp %144 : vector<8x64xf32>
    %cst_49 = arith.constant 1.000000e+00 : f32
    %146 = vector.broadcast %cst_49 : f32 to vector<8x64xf32>
    %147 = arith.addf %146, %145 : vector<8x64xf32>
    %148 = arith.divf %146, %147 : vector<8x64xf32>
    %cst_50 = arith.constant dense<0.000000e+00> : vector<8x64xf32>
    %149 = tpu.matmul %134, %101, %cst_50 {dimension_numbers = #tpu.dot_dimension_numbers<[1], [0], [0], [1], [0, 0, 1, 1], [], []>} : vector<8x64xf32>, vector<64x64xf32>, vector<8x64xf32> -> vector<8x64xf32>
    %150 = arith.addf %66, %149 : vector<8x64xf32>
    %151 = math.tanh %150 : vector<8x64xf32>
    %cst_51 = arith.constant dense<0.000000e+00> : vector<8x64xf32>
    %152 = tpu.matmul %134, %103, %cst_51 {dimension_numbers = #tpu.dot_dimension_numbers<[1], [0], [0], [1], [0, 0, 1, 1], [], []>} : vector<8x64xf32>, vector<64x64xf32>, vector<8x64xf32> -> vector<8x64xf32>
    %153 = arith.addf %89, %152 : vector<8x64xf32>
    %154 = arith.negf %153 : vector<8x64xf32>
    %155 = math.exp %154 : vector<8x64xf32>
    %cst_52 = arith.constant 1.000000e+00 : f32
    %156 = vector.broadcast %cst_52 : f32 to vector<8x64xf32>
    %157 = arith.addf %156, %155 : vector<8x64xf32>
    %158 = arith.divf %156, %157 : vector<8x64xf32>
    %159 = arith.mulf %148, %132 : vector<8x64xf32>
    %160 = arith.mulf %141, %151 : vector<8x64xf32>
    %161 = arith.addf %159, %160 : vector<8x64xf32>
    %162 = math.tanh %161 : vector<8x64xf32>
    %163 = arith.mulf %158, %162 : vector<8x64xf32>
    %cst_53 = arith.constant dense<0.000000e+00> : vector<8x64xf32>
    %164 = tpu.matmul %163, %97, %cst_53 {dimension_numbers = #tpu.dot_dimension_numbers<[1], [0], [0], [1], [0, 0, 1, 1], [], []>} : vector<8x64xf32>, vector<64x64xf32>, vector<8x64xf32> -> vector<8x64xf32>
    %165 = arith.addf %21, %164 : vector<8x64xf32>
    %166 = arith.negf %165 : vector<8x64xf32>
    %167 = math.exp %166 : vector<8x64xf32>
    %cst_54 = arith.constant 1.000000e+00 : f32
    %168 = vector.broadcast %cst_54 : f32 to vector<8x64xf32>
    %169 = arith.addf %168, %167 : vector<8x64xf32>
    %170 = arith.divf %168, %169 : vector<8x64xf32>
    %cst_55 = arith.constant dense<0.000000e+00> : vector<8x64xf32>
    %171 = tpu.matmul %163, %99, %cst_55 {dimension_numbers = #tpu.dot_dimension_numbers<[1], [0], [0], [1], [0, 0, 1, 1], [], []>} : vector<8x64xf32>, vector<64x64xf32>, vector<8x64xf32> -> vector<8x64xf32>
    %172 = arith.addf %44, %171 : vector<8x64xf32>
    %173 = arith.negf %172 : vector<8x64xf32>
    %174 = math.exp %173 : vector<8x64xf32>
    %cst_56 = arith.constant 1.000000e+00 : f32
    %175 = vector.broadcast %cst_56 : f32 to vector<8x64xf32>
    %176 = arith.addf %175, %174 : vector<8x64xf32>
    %177 = arith.divf %175, %176 : vector<8x64xf32>
    %cst_57 = arith.constant dense<0.000000e+00> : vector<8x64xf32>
    %178 = tpu.matmul %163, %101, %cst_57 {dimension_numbers = #tpu.dot_dimension_numbers<[1], [0], [0], [1], [0, 0, 1, 1], [], []>} : vector<8x64xf32>, vector<64x64xf32>, vector<8x64xf32> -> vector<8x64xf32>
    %179 = arith.addf %67, %178 : vector<8x64xf32>
    %180 = math.tanh %179 : vector<8x64xf32>
    %cst_58 = arith.constant dense<0.000000e+00> : vector<8x64xf32>
    %181 = tpu.matmul %163, %103, %cst_58 {dimension_numbers = #tpu.dot_dimension_numbers<[1], [0], [0], [1], [0, 0, 1, 1], [], []>} : vector<8x64xf32>, vector<64x64xf32>, vector<8x64xf32> -> vector<8x64xf32>
    %182 = arith.addf %90, %181 : vector<8x64xf32>
    %183 = arith.negf %182 : vector<8x64xf32>
    %184 = math.exp %183 : vector<8x64xf32>
    %cst_59 = arith.constant 1.000000e+00 : f32
    %185 = vector.broadcast %cst_59 : f32 to vector<8x64xf32>
    %186 = arith.addf %185, %184 : vector<8x64xf32>
    %187 = arith.divf %185, %186 : vector<8x64xf32>
    %188 = arith.mulf %177, %161 : vector<8x64xf32>
    %189 = arith.mulf %170, %180 : vector<8x64xf32>
    %190 = arith.addf %188, %189 : vector<8x64xf32>
    %191 = math.tanh %190 : vector<8x64xf32>
    %192 = arith.mulf %187, %191 : vector<8x64xf32>
    %cst_60 = arith.constant dense<0.000000e+00> : vector<8x64xf32>
    %193 = tpu.matmul %192, %97, %cst_60 {dimension_numbers = #tpu.dot_dimension_numbers<[1], [0], [0], [1], [0, 0, 1, 1], [], []>} : vector<8x64xf32>, vector<64x64xf32>, vector<8x64xf32> -> vector<8x64xf32>
    %194 = arith.addf %22, %193 : vector<8x64xf32>
    %195 = arith.negf %194 : vector<8x64xf32>
    %196 = math.exp %195 : vector<8x64xf32>
    %cst_61 = arith.constant 1.000000e+00 : f32
    %197 = vector.broadcast %cst_61 : f32 to vector<8x64xf32>
    %198 = arith.addf %197, %196 : vector<8x64xf32>
    %199 = arith.divf %197, %198 : vector<8x64xf32>
    %cst_62 = arith.constant dense<0.000000e+00> : vector<8x64xf32>
    %200 = tpu.matmul %192, %99, %cst_62 {dimension_numbers = #tpu.dot_dimension_numbers<[1], [0], [0], [1], [0, 0, 1, 1], [], []>} : vector<8x64xf32>, vector<64x64xf32>, vector<8x64xf32> -> vector<8x64xf32>
    %201 = arith.addf %45, %200 : vector<8x64xf32>
    %202 = arith.negf %201 : vector<8x64xf32>
    %203 = math.exp %202 : vector<8x64xf32>
    %cst_63 = arith.constant 1.000000e+00 : f32
    %204 = vector.broadcast %cst_63 : f32 to vector<8x64xf32>
    %205 = arith.addf %204, %203 : vector<8x64xf32>
    %206 = arith.divf %204, %205 : vector<8x64xf32>
    %cst_64 = arith.constant dense<0.000000e+00> : vector<8x64xf32>
    %207 = tpu.matmul %192, %101, %cst_64 {dimension_numbers = #tpu.dot_dimension_numbers<[1], [0], [0], [1], [0, 0, 1, 1], [], []>} : vector<8x64xf32>, vector<64x64xf32>, vector<8x64xf32> -> vector<8x64xf32>
    %208 = arith.addf %68, %207 : vector<8x64xf32>
    %209 = math.tanh %208 : vector<8x64xf32>
    %cst_65 = arith.constant dense<0.000000e+00> : vector<8x64xf32>
    %210 = tpu.matmul %192, %103, %cst_65 {dimension_numbers = #tpu.dot_dimension_numbers<[1], [0], [0], [1], [0, 0, 1, 1], [], []>} : vector<8x64xf32>, vector<64x64xf32>, vector<8x64xf32> -> vector<8x64xf32>
    %211 = arith.addf %91, %210 : vector<8x64xf32>
    %212 = arith.negf %211 : vector<8x64xf32>
    %213 = math.exp %212 : vector<8x64xf32>
    %cst_66 = arith.constant 1.000000e+00 : f32
    %214 = vector.broadcast %cst_66 : f32 to vector<8x64xf32>
    %215 = arith.addf %214, %213 : vector<8x64xf32>
    %216 = arith.divf %214, %215 : vector<8x64xf32>
    %217 = arith.mulf %206, %190 : vector<8x64xf32>
    %218 = arith.mulf %199, %209 : vector<8x64xf32>
    %219 = arith.addf %217, %218 : vector<8x64xf32>
    %220 = math.tanh %219 : vector<8x64xf32>
    %221 = arith.mulf %216, %220 : vector<8x64xf32>
    %cst_67 = arith.constant dense<0.000000e+00> : vector<8x64xf32>
    %222 = tpu.matmul %221, %97, %cst_67 {dimension_numbers = #tpu.dot_dimension_numbers<[1], [0], [0], [1], [0, 0, 1, 1], [], []>} : vector<8x64xf32>, vector<64x64xf32>, vector<8x64xf32> -> vector<8x64xf32>
    %223 = arith.addf %23, %222 : vector<8x64xf32>
    %224 = arith.negf %223 : vector<8x64xf32>
    %225 = math.exp %224 : vector<8x64xf32>
    %cst_68 = arith.constant 1.000000e+00 : f32
    %226 = vector.broadcast %cst_68 : f32 to vector<8x64xf32>
    %227 = arith.addf %226, %225 : vector<8x64xf32>
    %228 = arith.divf %226, %227 : vector<8x64xf32>
    %cst_69 = arith.constant dense<0.000000e+00> : vector<8x64xf32>
    %229 = tpu.matmul %221, %99, %cst_69 {dimension_numbers = #tpu.dot_dimension_numbers<[1], [0], [0], [1], [0, 0, 1, 1], [], []>} : vector<8x64xf32>, vector<64x64xf32>, vector<8x64xf32> -> vector<8x64xf32>
    %230 = arith.addf %46, %229 : vector<8x64xf32>
    %231 = arith.negf %230 : vector<8x64xf32>
    %232 = math.exp %231 : vector<8x64xf32>
    %cst_70 = arith.constant 1.000000e+00 : f32
    %233 = vector.broadcast %cst_70 : f32 to vector<8x64xf32>
    %234 = arith.addf %233, %232 : vector<8x64xf32>
    %235 = arith.divf %233, %234 : vector<8x64xf32>
    %cst_71 = arith.constant dense<0.000000e+00> : vector<8x64xf32>
    %236 = tpu.matmul %221, %101, %cst_71 {dimension_numbers = #tpu.dot_dimension_numbers<[1], [0], [0], [1], [0, 0, 1, 1], [], []>} : vector<8x64xf32>, vector<64x64xf32>, vector<8x64xf32> -> vector<8x64xf32>
    %237 = arith.addf %69, %236 : vector<8x64xf32>
    %238 = math.tanh %237 : vector<8x64xf32>
    %cst_72 = arith.constant dense<0.000000e+00> : vector<8x64xf32>
    %239 = tpu.matmul %221, %103, %cst_72 {dimension_numbers = #tpu.dot_dimension_numbers<[1], [0], [0], [1], [0, 0, 1, 1], [], []>} : vector<8x64xf32>, vector<64x64xf32>, vector<8x64xf32> -> vector<8x64xf32>
    %240 = arith.addf %92, %239 : vector<8x64xf32>
    %241 = arith.negf %240 : vector<8x64xf32>
    %242 = math.exp %241 : vector<8x64xf32>
    %cst_73 = arith.constant 1.000000e+00 : f32
    %243 = vector.broadcast %cst_73 : f32 to vector<8x64xf32>
    %244 = arith.addf %243, %242 : vector<8x64xf32>
    %245 = arith.divf %243, %244 : vector<8x64xf32>
    %246 = arith.mulf %235, %219 : vector<8x64xf32>
    %247 = arith.mulf %228, %238 : vector<8x64xf32>
    %248 = arith.addf %246, %247 : vector<8x64xf32>
    %249 = math.tanh %248 : vector<8x64xf32>
    %250 = arith.mulf %245, %249 : vector<8x64xf32>
    %cst_74 = arith.constant dense<0.000000e+00> : vector<8x64xf32>
    %251 = tpu.matmul %250, %97, %cst_74 {dimension_numbers = #tpu.dot_dimension_numbers<[1], [0], [0], [1], [0, 0, 1, 1], [], []>} : vector<8x64xf32>, vector<64x64xf32>, vector<8x64xf32> -> vector<8x64xf32>
    %252 = arith.addf %24, %251 : vector<8x64xf32>
    %253 = arith.negf %252 : vector<8x64xf32>
    %254 = math.exp %253 : vector<8x64xf32>
    %cst_75 = arith.constant 1.000000e+00 : f32
    %255 = vector.broadcast %cst_75 : f32 to vector<8x64xf32>
    %256 = arith.addf %255, %254 : vector<8x64xf32>
    %257 = arith.divf %255, %256 : vector<8x64xf32>
    %cst_76 = arith.constant dense<0.000000e+00> : vector<8x64xf32>
    %258 = tpu.matmul %250, %99, %cst_76 {dimension_numbers = #tpu.dot_dimension_numbers<[1], [0], [0], [1], [0, 0, 1, 1], [], []>} : vector<8x64xf32>, vector<64x64xf32>, vector<8x64xf32> -> vector<8x64xf32>
    %259 = arith.addf %47, %258 : vector<8x64xf32>
    %260 = arith.negf %259 : vector<8x64xf32>
    %261 = math.exp %260 : vector<8x64xf32>
    %cst_77 = arith.constant 1.000000e+00 : f32
    %262 = vector.broadcast %cst_77 : f32 to vector<8x64xf32>
    %263 = arith.addf %262, %261 : vector<8x64xf32>
    %264 = arith.divf %262, %263 : vector<8x64xf32>
    %cst_78 = arith.constant dense<0.000000e+00> : vector<8x64xf32>
    %265 = tpu.matmul %250, %101, %cst_78 {dimension_numbers = #tpu.dot_dimension_numbers<[1], [0], [0], [1], [0, 0, 1, 1], [], []>} : vector<8x64xf32>, vector<64x64xf32>, vector<8x64xf32> -> vector<8x64xf32>
    %266 = arith.addf %70, %265 : vector<8x64xf32>
    %267 = math.tanh %266 : vector<8x64xf32>
    %cst_79 = arith.constant dense<0.000000e+00> : vector<8x64xf32>
    %268 = tpu.matmul %250, %103, %cst_79 {dimension_numbers = #tpu.dot_dimension_numbers<[1], [0], [0], [1], [0, 0, 1, 1], [], []>} : vector<8x64xf32>, vector<64x64xf32>, vector<8x64xf32> -> vector<8x64xf32>
    %269 = arith.addf %93, %268 : vector<8x64xf32>
    %270 = arith.negf %269 : vector<8x64xf32>
    %271 = math.exp %270 : vector<8x64xf32>
    %cst_80 = arith.constant 1.000000e+00 : f32
    %272 = vector.broadcast %cst_80 : f32 to vector<8x64xf32>
    %273 = arith.addf %272, %271 : vector<8x64xf32>
    %274 = arith.divf %272, %273 : vector<8x64xf32>
    %275 = arith.mulf %264, %248 : vector<8x64xf32>
    %276 = arith.mulf %257, %267 : vector<8x64xf32>
    %277 = arith.addf %275, %276 : vector<8x64xf32>
    %278 = math.tanh %277 : vector<8x64xf32>
    %279 = arith.mulf %274, %278 : vector<8x64xf32>
    %cst_81 = arith.constant dense<0.000000e+00> : vector<8x64xf32>
    %280 = tpu.matmul %279, %97, %cst_81 {dimension_numbers = #tpu.dot_dimension_numbers<[1], [0], [0], [1], [0, 0, 1, 1], [], []>} : vector<8x64xf32>, vector<64x64xf32>, vector<8x64xf32> -> vector<8x64xf32>
    %281 = arith.addf %25, %280 : vector<8x64xf32>
    %282 = arith.negf %281 : vector<8x64xf32>
    %283 = math.exp %282 : vector<8x64xf32>
    %cst_82 = arith.constant 1.000000e+00 : f32
    %284 = vector.broadcast %cst_82 : f32 to vector<8x64xf32>
    %285 = arith.addf %284, %283 : vector<8x64xf32>
    %286 = arith.divf %284, %285 : vector<8x64xf32>
    %cst_83 = arith.constant dense<0.000000e+00> : vector<8x64xf32>
    %287 = tpu.matmul %279, %99, %cst_83 {dimension_numbers = #tpu.dot_dimension_numbers<[1], [0], [0], [1], [0, 0, 1, 1], [], []>} : vector<8x64xf32>, vector<64x64xf32>, vector<8x64xf32> -> vector<8x64xf32>
    %288 = arith.addf %48, %287 : vector<8x64xf32>
    %289 = arith.negf %288 : vector<8x64xf32>
    %290 = math.exp %289 : vector<8x64xf32>
    %cst_84 = arith.constant 1.000000e+00 : f32
    %291 = vector.broadcast %cst_84 : f32 to vector<8x64xf32>
    %292 = arith.addf %291, %290 : vector<8x64xf32>
    %293 = arith.divf %291, %292 : vector<8x64xf32>
    %cst_85 = arith.constant dense<0.000000e+00> : vector<8x64xf32>
    %294 = tpu.matmul %279, %101, %cst_85 {dimension_numbers = #tpu.dot_dimension_numbers<[1], [0], [0], [1], [0, 0, 1, 1], [], []>} : vector<8x64xf32>, vector<64x64xf32>, vector<8x64xf32> -> vector<8x64xf32>
    %295 = arith.addf %71, %294 : vector<8x64xf32>
    %296 = math.tanh %295 : vector<8x64xf32>
    %cst_86 = arith.constant dense<0.000000e+00> : vector<8x64xf32>
    %297 = tpu.matmul %279, %103, %cst_86 {dimension_numbers = #tpu.dot_dimension_numbers<[1], [0], [0], [1], [0, 0, 1, 1], [], []>} : vector<8x64xf32>, vector<64x64xf32>, vector<8x64xf32> -> vector<8x64xf32>
    %298 = arith.addf %94, %297 : vector<8x64xf32>
    %299 = arith.negf %298 : vector<8x64xf32>
    %300 = math.exp %299 : vector<8x64xf32>
    %cst_87 = arith.constant 1.000000e+00 : f32
    %301 = vector.broadcast %cst_87 : f32 to vector<8x64xf32>
    %302 = arith.addf %301, %300 : vector<8x64xf32>
    %303 = arith.divf %301, %302 : vector<8x64xf32>
    %304 = arith.mulf %293, %277 : vector<8x64xf32>
    %305 = arith.mulf %286, %296 : vector<8x64xf32>
    %306 = arith.addf %304, %305 : vector<8x64xf32>
    %307 = math.tanh %306 : vector<8x64xf32>
    %308 = arith.mulf %303, %307 : vector<8x64xf32>
    %cst_88 = arith.constant dense<0.000000e+00> : vector<8x64xf32>
    %309 = tpu.matmul %308, %97, %cst_88 {dimension_numbers = #tpu.dot_dimension_numbers<[1], [0], [0], [1], [0, 0, 1, 1], [], []>} : vector<8x64xf32>, vector<64x64xf32>, vector<8x64xf32> -> vector<8x64xf32>
    %310 = arith.addf %26, %309 : vector<8x64xf32>
    %311 = arith.negf %310 : vector<8x64xf32>
    %312 = math.exp %311 : vector<8x64xf32>
    %cst_89 = arith.constant 1.000000e+00 : f32
    %313 = vector.broadcast %cst_89 : f32 to vector<8x64xf32>
    %314 = arith.addf %313, %312 : vector<8x64xf32>
    %315 = arith.divf %313, %314 : vector<8x64xf32>
    %cst_90 = arith.constant dense<0.000000e+00> : vector<8x64xf32>
    %316 = tpu.matmul %308, %99, %cst_90 {dimension_numbers = #tpu.dot_dimension_numbers<[1], [0], [0], [1], [0, 0, 1, 1], [], []>} : vector<8x64xf32>, vector<64x64xf32>, vector<8x64xf32> -> vector<8x64xf32>
    %317 = arith.addf %49, %316 : vector<8x64xf32>
    %318 = arith.negf %317 : vector<8x64xf32>
    %319 = math.exp %318 : vector<8x64xf32>
    %cst_91 = arith.constant 1.000000e+00 : f32
    %320 = vector.broadcast %cst_91 : f32 to vector<8x64xf32>
    %321 = arith.addf %320, %319 : vector<8x64xf32>
    %322 = arith.divf %320, %321 : vector<8x64xf32>
    %cst_92 = arith.constant dense<0.000000e+00> : vector<8x64xf32>
    %323 = tpu.matmul %308, %101, %cst_92 {dimension_numbers = #tpu.dot_dimension_numbers<[1], [0], [0], [1], [0, 0, 1, 1], [], []>} : vector<8x64xf32>, vector<64x64xf32>, vector<8x64xf32> -> vector<8x64xf32>
    %324 = arith.addf %72, %323 : vector<8x64xf32>
    %325 = math.tanh %324 : vector<8x64xf32>
    %cst_93 = arith.constant dense<0.000000e+00> : vector<8x64xf32>
    %326 = tpu.matmul %308, %103, %cst_93 {dimension_numbers = #tpu.dot_dimension_numbers<[1], [0], [0], [1], [0, 0, 1, 1], [], []>} : vector<8x64xf32>, vector<64x64xf32>, vector<8x64xf32> -> vector<8x64xf32>
    %327 = arith.addf %95, %326 : vector<8x64xf32>
    %328 = arith.negf %327 : vector<8x64xf32>
    %329 = math.exp %328 : vector<8x64xf32>
    %cst_94 = arith.constant 1.000000e+00 : f32
    %330 = vector.broadcast %cst_94 : f32 to vector<8x64xf32>
    %331 = arith.addf %330, %329 : vector<8x64xf32>
    %332 = arith.divf %330, %331 : vector<8x64xf32>
    %333 = arith.mulf %322, %306 : vector<8x64xf32>
    %334 = arith.mulf %315, %325 : vector<8x64xf32>
    %335 = arith.addf %333, %334 : vector<8x64xf32>
    %336 = math.tanh %335 : vector<8x64xf32>
    %337 = arith.mulf %332, %336 : vector<8x64xf32>
    %cst_95 = arith.constant 0.000000e+00 : f32
    %338 = vector.broadcast %cst_95 : f32 to vector<8x64xf32>
    %339 = arith.maximumf %134, %338 : vector<8x64xf32>
    %cst_96 = arith.constant 0.000000e+00 : f32
    %340 = vector.broadcast %cst_96 : f32 to vector<8x64xf32>
    %341 = arith.maximumf %163, %340 : vector<8x64xf32>
    %cst_97 = arith.constant 0.000000e+00 : f32
    %342 = vector.broadcast %cst_97 : f32 to vector<8x64xf32>
    %343 = arith.maximumf %192, %342 : vector<8x64xf32>
    %cst_98 = arith.constant 0.000000e+00 : f32
    %344 = vector.broadcast %cst_98 : f32 to vector<8x64xf32>
    %345 = arith.maximumf %221, %344 : vector<8x64xf32>
    %cst_99 = arith.constant 0.000000e+00 : f32
    %346 = vector.broadcast %cst_99 : f32 to vector<8x64xf32>
    %347 = arith.maximumf %250, %346 : vector<8x64xf32>
    %cst_100 = arith.constant 0.000000e+00 : f32
    %348 = vector.broadcast %cst_100 : f32 to vector<8x64xf32>
    %349 = arith.maximumf %279, %348 : vector<8x64xf32>
    %cst_101 = arith.constant 0.000000e+00 : f32
    %350 = vector.broadcast %cst_101 : f32 to vector<8x64xf32>
    %351 = arith.maximumf %308, %350 : vector<8x64xf32>
    %cst_102 = arith.constant 0.000000e+00 : f32
    %352 = vector.broadcast %cst_102 : f32 to vector<8x64xf32>
    %353 = arith.maximumf %337, %352 : vector<8x64xf32>
    %354 = arith.select %3, %339, %353 : vector<8x64xi1>, vector<8x64xf32>
    %355 = arith.select %3, %341, %351 : vector<8x64xi1>, vector<8x64xf32>
    %356 = arith.select %3, %343, %349 : vector<8x64xi1>, vector<8x64xf32>
    %357 = arith.select %3, %345, %347 : vector<8x64xi1>, vector<8x64xf32>
    %358 = arith.select %3, %347, %345 : vector<8x64xi1>, vector<8x64xf32>
    %359 = arith.select %3, %349, %343 : vector<8x64xi1>, vector<8x64xf32>
    %360 = arith.select %3, %351, %341 : vector<8x64xi1>, vector<8x64xf32>
    %361 = arith.select %3, %353, %339 : vector<8x64xi1>, vector<8x64xf32>
    %362 = tpu.concatenate %354, %355, %356, %357, %358, %359, %360, %361 in 0 : vector<8x64xf32>, vector<8x64xf32>, vector<8x64xf32>, vector<8x64xf32>, vector<8x64xf32>, vector<8x64xf32>, vector<8x64xf32>, vector<8x64xf32> -> vector<64x64xf32>
    %c0_103 = arith.constant 0 : index
    %c0_104 = arith.constant 0 : index
    %c0_105 = arith.constant 0 : index
    %363 = vector.load %arg4[%c0_103, %c0_104, %c0_105] : memref<4x64x32xf32, #tpu.memory_space<vmem>>, vector<1x64x32xf32>
    %364 = vector.shape_cast %363 : vector<1x64x32xf32> to vector<64x32xf32>
    %cst_106 = arith.constant dense<0.000000e+00> : vector<64x32xf32>
    %365 = tpu.matmul %362, %364, %cst_106 {dimension_numbers = #tpu.dot_dimension_numbers<[1], [0], [0], [1], [0, 0, 1, 1], [], []>} : vector<64x64xf32>, vector<64x32xf32>, vector<64x32xf32> -> vector<64x32xf32>
    %c0_107 = arith.constant 0 : index
    %c0_108 = arith.constant 0 : index
    %c0_109 = arith.constant 0 : index
    %366 = vector.load %arg5[%c0_107, %c0_108, %c0_109] : memref<4x1x32xf32, #tpu.memory_space<vmem>>, vector<1x1x32xf32>
    %367 = vector.shape_cast %366 : vector<1x1x32xf32> to vector<1x32xf32>
    %368 = vector.broadcast %367 : vector<1x32xf32> to vector<64x32xf32>
    %369 = arith.addf %365, %368 : vector<64x32xf32>
    %370 = vector.extract_strided_slice %369 {offsets = [0, 0], sizes = [8, 32], strides = [1, 1]} : vector<64x32xf32> to vector<8x32xf32>
    %371 = vector.extract_strided_slice %369 {offsets = [8, 0], sizes = [8, 32], strides = [1, 1]} : vector<64x32xf32> to vector<8x32xf32>
    %372 = vector.extract_strided_slice %369 {offsets = [16, 0], sizes = [8, 32], strides = [1, 1]} : vector<64x32xf32> to vector<8x32xf32>
    %373 = vector.extract_strided_slice %369 {offsets = [24, 0], sizes = [8, 32], strides = [1, 1]} : vector<64x32xf32> to vector<8x32xf32>
    %374 = vector.extract_strided_slice %369 {offsets = [32, 0], sizes = [8, 32], strides = [1, 1]} : vector<64x32xf32> to vector<8x32xf32>
    %375 = vector.extract_strided_slice %369 {offsets = [40, 0], sizes = [8, 32], strides = [1, 1]} : vector<64x32xf32> to vector<8x32xf32>
    %376 = vector.extract_strided_slice %369 {offsets = [48, 0], sizes = [8, 32], strides = [1, 1]} : vector<64x32xf32> to vector<8x32xf32>
    %377 = vector.extract_strided_slice %369 {offsets = [56, 0], sizes = [8, 32], strides = [1, 1]} : vector<64x32xf32> to vector<8x32xf32>
    %c1_110 = arith.constant 1 : index
    %c0_111 = arith.constant 0 : index
    %c0_112 = arith.constant 0 : index
    %378 = vector.load %arg4[%c1_110, %c0_111, %c0_112] : memref<4x64x32xf32, #tpu.memory_space<vmem>>, vector<1x64x32xf32>
    %379 = vector.shape_cast %378 : vector<1x64x32xf32> to vector<64x32xf32>
    %cst_113 = arith.constant dense<0.000000e+00> : vector<64x32xf32>
    %380 = tpu.matmul %362, %379, %cst_113 {dimension_numbers = #tpu.dot_dimension_numbers<[1], [0], [0], [1], [0, 0, 1, 1], [], []>} : vector<64x64xf32>, vector<64x32xf32>, vector<64x32xf32> -> vector<64x32xf32>
    %c1_114 = arith.constant 1 : index
    %c0_115 = arith.constant 0 : index
    %c0_116 = arith.constant 0 : index
    %381 = vector.load %arg5[%c1_114, %c0_115, %c0_116] : memref<4x1x32xf32, #tpu.memory_space<vmem>>, vector<1x1x32xf32>
    %382 = vector.shape_cast %381 : vector<1x1x32xf32> to vector<1x32xf32>
    %383 = vector.broadcast %382 : vector<1x32xf32> to vector<64x32xf32>
    %384 = arith.addf %380, %383 : vector<64x32xf32>
    %385 = vector.extract_strided_slice %384 {offsets = [0, 0], sizes = [8, 32], strides = [1, 1]} : vector<64x32xf32> to vector<8x32xf32>
    %386 = vector.extract_strided_slice %384 {offsets = [8, 0], sizes = [8, 32], strides = [1, 1]} : vector<64x32xf32> to vector<8x32xf32>
    %387 = vector.extract_strided_slice %384 {offsets = [16, 0], sizes = [8, 32], strides = [1, 1]} : vector<64x32xf32> to vector<8x32xf32>
    %388 = vector.extract_strided_slice %384 {offsets = [24, 0], sizes = [8, 32], strides = [1, 1]} : vector<64x32xf32> to vector<8x32xf32>
    %389 = vector.extract_strided_slice %384 {offsets = [32, 0], sizes = [8, 32], strides = [1, 1]} : vector<64x32xf32> to vector<8x32xf32>
    %390 = vector.extract_strided_slice %384 {offsets = [40, 0], sizes = [8, 32], strides = [1, 1]} : vector<64x32xf32> to vector<8x32xf32>
    %391 = vector.extract_strided_slice %384 {offsets = [48, 0], sizes = [8, 32], strides = [1, 1]} : vector<64x32xf32> to vector<8x32xf32>
    %392 = vector.extract_strided_slice %384 {offsets = [56, 0], sizes = [8, 32], strides = [1, 1]} : vector<64x32xf32> to vector<8x32xf32>
    %c2_117 = arith.constant 2 : index
    %c0_118 = arith.constant 0 : index
    %c0_119 = arith.constant 0 : index
    %393 = vector.load %arg4[%c2_117, %c0_118, %c0_119] : memref<4x64x32xf32, #tpu.memory_space<vmem>>, vector<1x64x32xf32>
    %394 = vector.shape_cast %393 : vector<1x64x32xf32> to vector<64x32xf32>
    %cst_120 = arith.constant dense<0.000000e+00> : vector<64x32xf32>
    %395 = tpu.matmul %362, %394, %cst_120 {dimension_numbers = #tpu.dot_dimension_numbers<[1], [0], [0], [1], [0, 0, 1, 1], [], []>} : vector<64x64xf32>, vector<64x32xf32>, vector<64x32xf32> -> vector<64x32xf32>
    %c2_121 = arith.constant 2 : index
    %c0_122 = arith.constant 0 : index
    %c0_123 = arith.constant 0 : index
    %396 = vector.load %arg5[%c2_121, %c0_122, %c0_123] : memref<4x1x32xf32, #tpu.memory_space<vmem>>, vector<1x1x32xf32>
    %397 = vector.shape_cast %396 : vector<1x1x32xf32> to vector<1x32xf32>
    %398 = vector.broadcast %397 : vector<1x32xf32> to vector<64x32xf32>
    %399 = arith.addf %395, %398 : vector<64x32xf32>
    %400 = vector.extract_strided_slice %399 {offsets = [0, 0], sizes = [8, 32], strides = [1, 1]} : vector<64x32xf32> to vector<8x32xf32>
    %401 = vector.extract_strided_slice %399 {offsets = [8, 0], sizes = [8, 32], strides = [1, 1]} : vector<64x32xf32> to vector<8x32xf32>
    %402 = vector.extract_strided_slice %399 {offsets = [16, 0], sizes = [8, 32], strides = [1, 1]} : vector<64x32xf32> to vector<8x32xf32>
    %403 = vector.extract_strided_slice %399 {offsets = [24, 0], sizes = [8, 32], strides = [1, 1]} : vector<64x32xf32> to vector<8x32xf32>
    %404 = vector.extract_strided_slice %399 {offsets = [32, 0], sizes = [8, 32], strides = [1, 1]} : vector<64x32xf32> to vector<8x32xf32>
    %405 = vector.extract_strided_slice %399 {offsets = [40, 0], sizes = [8, 32], strides = [1, 1]} : vector<64x32xf32> to vector<8x32xf32>
    %406 = vector.extract_strided_slice %399 {offsets = [48, 0], sizes = [8, 32], strides = [1, 1]} : vector<64x32xf32> to vector<8x32xf32>
    %407 = vector.extract_strided_slice %399 {offsets = [56, 0], sizes = [8, 32], strides = [1, 1]} : vector<64x32xf32> to vector<8x32xf32>
    %c3_124 = arith.constant 3 : index
    %c0_125 = arith.constant 0 : index
    %c0_126 = arith.constant 0 : index
    %408 = vector.load %arg4[%c3_124, %c0_125, %c0_126] : memref<4x64x32xf32, #tpu.memory_space<vmem>>, vector<1x64x32xf32>
    %409 = vector.shape_cast %408 : vector<1x64x32xf32> to vector<64x32xf32>
    %cst_127 = arith.constant dense<0.000000e+00> : vector<64x32xf32>
    %410 = tpu.matmul %362, %409, %cst_127 {dimension_numbers = #tpu.dot_dimension_numbers<[1], [0], [0], [1], [0, 0, 1, 1], [], []>} : vector<64x64xf32>, vector<64x32xf32>, vector<64x32xf32> -> vector<64x32xf32>
    %c3_128 = arith.constant 3 : index
    %c0_129 = arith.constant 0 : index
    %c0_130 = arith.constant 0 : index
    %411 = vector.load %arg5[%c3_128, %c0_129, %c0_130] : memref<4x1x32xf32, #tpu.memory_space<vmem>>, vector<1x1x32xf32>
    %412 = vector.shape_cast %411 : vector<1x1x32xf32> to vector<1x32xf32>
    %413 = vector.broadcast %412 : vector<1x32xf32> to vector<64x32xf32>
    %414 = arith.addf %410, %413 : vector<64x32xf32>
    %415 = vector.extract_strided_slice %414 {offsets = [0, 0], sizes = [8, 32], strides = [1, 1]} : vector<64x32xf32> to vector<8x32xf32>
    %416 = vector.extract_strided_slice %414 {offsets = [8, 0], sizes = [8, 32], strides = [1, 1]} : vector<64x32xf32> to vector<8x32xf32>
    %417 = vector.extract_strided_slice %414 {offsets = [16, 0], sizes = [8, 32], strides = [1, 1]} : vector<64x32xf32> to vector<8x32xf32>
    %418 = vector.extract_strided_slice %414 {offsets = [24, 0], sizes = [8, 32], strides = [1, 1]} : vector<64x32xf32> to vector<8x32xf32>
    %419 = vector.extract_strided_slice %414 {offsets = [32, 0], sizes = [8, 32], strides = [1, 1]} : vector<64x32xf32> to vector<8x32xf32>
    %420 = vector.extract_strided_slice %414 {offsets = [40, 0], sizes = [8, 32], strides = [1, 1]} : vector<64x32xf32> to vector<8x32xf32>
    %421 = vector.extract_strided_slice %414 {offsets = [48, 0], sizes = [8, 32], strides = [1, 1]} : vector<64x32xf32> to vector<8x32xf32>
    %422 = vector.extract_strided_slice %414 {offsets = [56, 0], sizes = [8, 32], strides = [1, 1]} : vector<64x32xf32> to vector<8x32xf32>
    %c0_131 = arith.constant 0 : index
    %c0_132 = arith.constant 0 : index
    %c0_133 = arith.constant 0 : index
    %423 = vector.load %arg6[%c0_131, %c0_132, %c0_133] : memref<4x32x32xf32, #tpu.memory_space<vmem>>, vector<1x32x32xf32>
    %424 = vector.shape_cast %423 : vector<1x32x32xf32> to vector<32x32xf32>
    %c1_134 = arith.constant 1 : index
    %c0_135 = arith.constant 0 : index
    %c0_136 = arith.constant 0 : index
    %425 = vector.load %arg6[%c1_134, %c0_135, %c0_136] : memref<4x32x32xf32, #tpu.memory_space<vmem>>, vector<1x32x32xf32>
    %426 = vector.shape_cast %425 : vector<1x32x32xf32> to vector<32x32xf32>
    %c2_137 = arith.constant 2 : index
    %c0_138 = arith.constant 0 : index
    %c0_139 = arith.constant 0 : index
    %427 = vector.load %arg6[%c2_137, %c0_138, %c0_139] : memref<4x32x32xf32, #tpu.memory_space<vmem>>, vector<1x32x32xf32>
    %428 = vector.shape_cast %427 : vector<1x32x32xf32> to vector<32x32xf32>
    %c3_140 = arith.constant 3 : index
    %c0_141 = arith.constant 0 : index
    %c0_142 = arith.constant 0 : index
    %429 = vector.load %arg6[%c3_140, %c0_141, %c0_142] : memref<4x32x32xf32, #tpu.memory_space<vmem>>, vector<1x32x32xf32>
    %430 = vector.shape_cast %429 : vector<1x32x32xf32> to vector<32x32xf32>
    %cst_143 = arith.constant 0.000000e+00 : f32
    %431 = vector.broadcast %cst_143 : f32 to vector<8x32xf32>
    %cst_144 = arith.constant 0.000000e+00 : f32
    %432 = vector.broadcast %cst_144 : f32 to vector<8x32xf32>
    %cst_145 = arith.constant dense<0.000000e+00> : vector<8x32xf32>
    %433 = tpu.matmul %431, %424, %cst_145 {dimension_numbers = #tpu.dot_dimension_numbers<[1], [0], [0], [1], [0, 0, 1, 1], [], []>} : vector<8x32xf32>, vector<32x32xf32>, vector<8x32xf32> -> vector<8x32xf32>
    %434 = arith.addf %370, %433 : vector<8x32xf32>
    %435 = arith.negf %434 : vector<8x32xf32>
    %436 = math.exp %435 : vector<8x32xf32>
    %cst_146 = arith.constant 1.000000e+00 : f32
    %437 = vector.broadcast %cst_146 : f32 to vector<8x32xf32>
    %438 = arith.addf %437, %436 : vector<8x32xf32>
    %439 = arith.divf %437, %438 : vector<8x32xf32>
    %cst_147 = arith.constant dense<0.000000e+00> : vector<8x32xf32>
    %440 = tpu.matmul %431, %426, %cst_147 {dimension_numbers = #tpu.dot_dimension_numbers<[1], [0], [0], [1], [0, 0, 1, 1], [], []>} : vector<8x32xf32>, vector<32x32xf32>, vector<8x32xf32> -> vector<8x32xf32>
    %441 = arith.addf %385, %440 : vector<8x32xf32>
    %442 = arith.negf %441 : vector<8x32xf32>
    %443 = math.exp %442 : vector<8x32xf32>
    %cst_148 = arith.constant 1.000000e+00 : f32
    %444 = vector.broadcast %cst_148 : f32 to vector<8x32xf32>
    %445 = arith.addf %444, %443 : vector<8x32xf32>
    %446 = arith.divf %444, %445 : vector<8x32xf32>
    %cst_149 = arith.constant dense<0.000000e+00> : vector<8x32xf32>
    %447 = tpu.matmul %431, %428, %cst_149 {dimension_numbers = #tpu.dot_dimension_numbers<[1], [0], [0], [1], [0, 0, 1, 1], [], []>} : vector<8x32xf32>, vector<32x32xf32>, vector<8x32xf32> -> vector<8x32xf32>
    %448 = arith.addf %400, %447 : vector<8x32xf32>
    %449 = math.tanh %448 : vector<8x32xf32>
    %cst_150 = arith.constant dense<0.000000e+00> : vector<8x32xf32>
    %450 = tpu.matmul %431, %430, %cst_150 {dimension_numbers = #tpu.dot_dimension_numbers<[1], [0], [0], [1], [0, 0, 1, 1], [], []>} : vector<8x32xf32>, vector<32x32xf32>, vector<8x32xf32> -> vector<8x32xf32>
    %451 = arith.addf %415, %450 : vector<8x32xf32>
    %452 = arith.negf %451 : vector<8x32xf32>
    %453 = math.exp %452 : vector<8x32xf32>
    %cst_151 = arith.constant 1.000000e+00 : f32
    %454 = vector.broadcast %cst_151 : f32 to vector<8x32xf32>
    %455 = arith.addf %454, %453 : vector<8x32xf32>
    %456 = arith.divf %454, %455 : vector<8x32xf32>
    %457 = arith.mulf %446, %432 : vector<8x32xf32>
    %458 = arith.mulf %439, %449 : vector<8x32xf32>
    %459 = arith.addf %457, %458 : vector<8x32xf32>
    %460 = math.tanh %459 : vector<8x32xf32>
    %461 = arith.mulf %456, %460 : vector<8x32xf32>
    %cst_152 = arith.constant dense<0.000000e+00> : vector<8x32xf32>
    %462 = tpu.matmul %461, %424, %cst_152 {dimension_numbers = #tpu.dot_dimension_numbers<[1], [0], [0], [1], [0, 0, 1, 1], [], []>} : vector<8x32xf32>, vector<32x32xf32>, vector<8x32xf32> -> vector<8x32xf32>
    %463 = arith.addf %371, %462 : vector<8x32xf32>
    %464 = arith.negf %463 : vector<8x32xf32>
    %465 = math.exp %464 : vector<8x32xf32>
    %cst_153 = arith.constant 1.000000e+00 : f32
    %466 = vector.broadcast %cst_153 : f32 to vector<8x32xf32>
    %467 = arith.addf %466, %465 : vector<8x32xf32>
    %468 = arith.divf %466, %467 : vector<8x32xf32>
    %cst_154 = arith.constant dense<0.000000e+00> : vector<8x32xf32>
    %469 = tpu.matmul %461, %426, %cst_154 {dimension_numbers = #tpu.dot_dimension_numbers<[1], [0], [0], [1], [0, 0, 1, 1], [], []>} : vector<8x32xf32>, vector<32x32xf32>, vector<8x32xf32> -> vector<8x32xf32>
    %470 = arith.addf %386, %469 : vector<8x32xf32>
    %471 = arith.negf %470 : vector<8x32xf32>
    %472 = math.exp %471 : vector<8x32xf32>
    %cst_155 = arith.constant 1.000000e+00 : f32
    %473 = vector.broadcast %cst_155 : f32 to vector<8x32xf32>
    %474 = arith.addf %473, %472 : vector<8x32xf32>
    %475 = arith.divf %473, %474 : vector<8x32xf32>
    %cst_156 = arith.constant dense<0.000000e+00> : vector<8x32xf32>
    %476 = tpu.matmul %461, %428, %cst_156 {dimension_numbers = #tpu.dot_dimension_numbers<[1], [0], [0], [1], [0, 0, 1, 1], [], []>} : vector<8x32xf32>, vector<32x32xf32>, vector<8x32xf32> -> vector<8x32xf32>
    %477 = arith.addf %401, %476 : vector<8x32xf32>
    %478 = math.tanh %477 : vector<8x32xf32>
    %cst_157 = arith.constant dense<0.000000e+00> : vector<8x32xf32>
    %479 = tpu.matmul %461, %430, %cst_157 {dimension_numbers = #tpu.dot_dimension_numbers<[1], [0], [0], [1], [0, 0, 1, 1], [], []>} : vector<8x32xf32>, vector<32x32xf32>, vector<8x32xf32> -> vector<8x32xf32>
    %480 = arith.addf %416, %479 : vector<8x32xf32>
    %481 = arith.negf %480 : vector<8x32xf32>
    %482 = math.exp %481 : vector<8x32xf32>
    %cst_158 = arith.constant 1.000000e+00 : f32
    %483 = vector.broadcast %cst_158 : f32 to vector<8x32xf32>
    %484 = arith.addf %483, %482 : vector<8x32xf32>
    %485 = arith.divf %483, %484 : vector<8x32xf32>
    %486 = arith.mulf %475, %459 : vector<8x32xf32>
    %487 = arith.mulf %468, %478 : vector<8x32xf32>
    %488 = arith.addf %486, %487 : vector<8x32xf32>
    %489 = math.tanh %488 : vector<8x32xf32>
    %490 = arith.mulf %485, %489 : vector<8x32xf32>
    %cst_159 = arith.constant dense<0.000000e+00> : vector<8x32xf32>
    %491 = tpu.matmul %490, %424, %cst_159 {dimension_numbers = #tpu.dot_dimension_numbers<[1], [0], [0], [1], [0, 0, 1, 1], [], []>} : vector<8x32xf32>, vector<32x32xf32>, vector<8x32xf32> -> vector<8x32xf32>
    %492 = arith.addf %372, %491 : vector<8x32xf32>
    %493 = arith.negf %492 : vector<8x32xf32>
    %494 = math.exp %493 : vector<8x32xf32>
    %cst_160 = arith.constant 1.000000e+00 : f32
    %495 = vector.broadcast %cst_160 : f32 to vector<8x32xf32>
    %496 = arith.addf %495, %494 : vector<8x32xf32>
    %497 = arith.divf %495, %496 : vector<8x32xf32>
    %cst_161 = arith.constant dense<0.000000e+00> : vector<8x32xf32>
    %498 = tpu.matmul %490, %426, %cst_161 {dimension_numbers = #tpu.dot_dimension_numbers<[1], [0], [0], [1], [0, 0, 1, 1], [], []>} : vector<8x32xf32>, vector<32x32xf32>, vector<8x32xf32> -> vector<8x32xf32>
    %499 = arith.addf %387, %498 : vector<8x32xf32>
    %500 = arith.negf %499 : vector<8x32xf32>
    %501 = math.exp %500 : vector<8x32xf32>
    %cst_162 = arith.constant 1.000000e+00 : f32
    %502 = vector.broadcast %cst_162 : f32 to vector<8x32xf32>
    %503 = arith.addf %502, %501 : vector<8x32xf32>
    %504 = arith.divf %502, %503 : vector<8x32xf32>
    %cst_163 = arith.constant dense<0.000000e+00> : vector<8x32xf32>
    %505 = tpu.matmul %490, %428, %cst_163 {dimension_numbers = #tpu.dot_dimension_numbers<[1], [0], [0], [1], [0, 0, 1, 1], [], []>} : vector<8x32xf32>, vector<32x32xf32>, vector<8x32xf32> -> vector<8x32xf32>
    %506 = arith.addf %402, %505 : vector<8x32xf32>
    %507 = math.tanh %506 : vector<8x32xf32>
    %cst_164 = arith.constant dense<0.000000e+00> : vector<8x32xf32>
    %508 = tpu.matmul %490, %430, %cst_164 {dimension_numbers = #tpu.dot_dimension_numbers<[1], [0], [0], [1], [0, 0, 1, 1], [], []>} : vector<8x32xf32>, vector<32x32xf32>, vector<8x32xf32> -> vector<8x32xf32>
    %509 = arith.addf %417, %508 : vector<8x32xf32>
    %510 = arith.negf %509 : vector<8x32xf32>
    %511 = math.exp %510 : vector<8x32xf32>
    %cst_165 = arith.constant 1.000000e+00 : f32
    %512 = vector.broadcast %cst_165 : f32 to vector<8x32xf32>
    %513 = arith.addf %512, %511 : vector<8x32xf32>
    %514 = arith.divf %512, %513 : vector<8x32xf32>
    %515 = arith.mulf %504, %488 : vector<8x32xf32>
    %516 = arith.mulf %497, %507 : vector<8x32xf32>
    %517 = arith.addf %515, %516 : vector<8x32xf32>
    %518 = math.tanh %517 : vector<8x32xf32>
    %519 = arith.mulf %514, %518 : vector<8x32xf32>
    %cst_166 = arith.constant dense<0.000000e+00> : vector<8x32xf32>
    %520 = tpu.matmul %519, %424, %cst_166 {dimension_numbers = #tpu.dot_dimension_numbers<[1], [0], [0], [1], [0, 0, 1, 1], [], []>} : vector<8x32xf32>, vector<32x32xf32>, vector<8x32xf32> -> vector<8x32xf32>
    %521 = arith.addf %373, %520 : vector<8x32xf32>
    %522 = arith.negf %521 : vector<8x32xf32>
    %523 = math.exp %522 : vector<8x32xf32>
    %cst_167 = arith.constant 1.000000e+00 : f32
    %524 = vector.broadcast %cst_167 : f32 to vector<8x32xf32>
    %525 = arith.addf %524, %523 : vector<8x32xf32>
    %526 = arith.divf %524, %525 : vector<8x32xf32>
    %cst_168 = arith.constant dense<0.000000e+00> : vector<8x32xf32>
    %527 = tpu.matmul %519, %426, %cst_168 {dimension_numbers = #tpu.dot_dimension_numbers<[1], [0], [0], [1], [0, 0, 1, 1], [], []>} : vector<8x32xf32>, vector<32x32xf32>, vector<8x32xf32> -> vector<8x32xf32>
    %528 = arith.addf %388, %527 : vector<8x32xf32>
    %529 = arith.negf %528 : vector<8x32xf32>
    %530 = math.exp %529 : vector<8x32xf32>
    %cst_169 = arith.constant 1.000000e+00 : f32
    %531 = vector.broadcast %cst_169 : f32 to vector<8x32xf32>
    %532 = arith.addf %531, %530 : vector<8x32xf32>
    %533 = arith.divf %531, %532 : vector<8x32xf32>
    %cst_170 = arith.constant dense<0.000000e+00> : vector<8x32xf32>
    %534 = tpu.matmul %519, %428, %cst_170 {dimension_numbers = #tpu.dot_dimension_numbers<[1], [0], [0], [1], [0, 0, 1, 1], [], []>} : vector<8x32xf32>, vector<32x32xf32>, vector<8x32xf32> -> vector<8x32xf32>
    %535 = arith.addf %403, %534 : vector<8x32xf32>
    %536 = math.tanh %535 : vector<8x32xf32>
    %cst_171 = arith.constant dense<0.000000e+00> : vector<8x32xf32>
    %537 = tpu.matmul %519, %430, %cst_171 {dimension_numbers = #tpu.dot_dimension_numbers<[1], [0], [0], [1], [0, 0, 1, 1], [], []>} : vector<8x32xf32>, vector<32x32xf32>, vector<8x32xf32> -> vector<8x32xf32>
    %538 = arith.addf %418, %537 : vector<8x32xf32>
    %539 = arith.negf %538 : vector<8x32xf32>
    %540 = math.exp %539 : vector<8x32xf32>
    %cst_172 = arith.constant 1.000000e+00 : f32
    %541 = vector.broadcast %cst_172 : f32 to vector<8x32xf32>
    %542 = arith.addf %541, %540 : vector<8x32xf32>
    %543 = arith.divf %541, %542 : vector<8x32xf32>
    %544 = arith.mulf %533, %517 : vector<8x32xf32>
    %545 = arith.mulf %526, %536 : vector<8x32xf32>
    %546 = arith.addf %544, %545 : vector<8x32xf32>
    %547 = math.tanh %546 : vector<8x32xf32>
    %548 = arith.mulf %543, %547 : vector<8x32xf32>
    %cst_173 = arith.constant dense<0.000000e+00> : vector<8x32xf32>
    %549 = tpu.matmul %548, %424, %cst_173 {dimension_numbers = #tpu.dot_dimension_numbers<[1], [0], [0], [1], [0, 0, 1, 1], [], []>} : vector<8x32xf32>, vector<32x32xf32>, vector<8x32xf32> -> vector<8x32xf32>
    %550 = arith.addf %374, %549 : vector<8x32xf32>
    %551 = arith.negf %550 : vector<8x32xf32>
    %552 = math.exp %551 : vector<8x32xf32>
    %cst_174 = arith.constant 1.000000e+00 : f32
    %553 = vector.broadcast %cst_174 : f32 to vector<8x32xf32>
    %554 = arith.addf %553, %552 : vector<8x32xf32>
    %555 = arith.divf %553, %554 : vector<8x32xf32>
    %cst_175 = arith.constant dense<0.000000e+00> : vector<8x32xf32>
    %556 = tpu.matmul %548, %426, %cst_175 {dimension_numbers = #tpu.dot_dimension_numbers<[1], [0], [0], [1], [0, 0, 1, 1], [], []>} : vector<8x32xf32>, vector<32x32xf32>, vector<8x32xf32> -> vector<8x32xf32>
    %557 = arith.addf %389, %556 : vector<8x32xf32>
    %558 = arith.negf %557 : vector<8x32xf32>
    %559 = math.exp %558 : vector<8x32xf32>
    %cst_176 = arith.constant 1.000000e+00 : f32
    %560 = vector.broadcast %cst_176 : f32 to vector<8x32xf32>
    %561 = arith.addf %560, %559 : vector<8x32xf32>
    %562 = arith.divf %560, %561 : vector<8x32xf32>
    %cst_177 = arith.constant dense<0.000000e+00> : vector<8x32xf32>
    %563 = tpu.matmul %548, %428, %cst_177 {dimension_numbers = #tpu.dot_dimension_numbers<[1], [0], [0], [1], [0, 0, 1, 1], [], []>} : vector<8x32xf32>, vector<32x32xf32>, vector<8x32xf32> -> vector<8x32xf32>
    %564 = arith.addf %404, %563 : vector<8x32xf32>
    %565 = math.tanh %564 : vector<8x32xf32>
    %cst_178 = arith.constant dense<0.000000e+00> : vector<8x32xf32>
    %566 = tpu.matmul %548, %430, %cst_178 {dimension_numbers = #tpu.dot_dimension_numbers<[1], [0], [0], [1], [0, 0, 1, 1], [], []>} : vector<8x32xf32>, vector<32x32xf32>, vector<8x32xf32> -> vector<8x32xf32>
    %567 = arith.addf %419, %566 : vector<8x32xf32>
    %568 = arith.negf %567 : vector<8x32xf32>
    %569 = math.exp %568 : vector<8x32xf32>
    %cst_179 = arith.constant 1.000000e+00 : f32
    %570 = vector.broadcast %cst_179 : f32 to vector<8x32xf32>
    %571 = arith.addf %570, %569 : vector<8x32xf32>
    %572 = arith.divf %570, %571 : vector<8x32xf32>
    %573 = arith.mulf %562, %546 : vector<8x32xf32>
    %574 = arith.mulf %555, %565 : vector<8x32xf32>
    %575 = arith.addf %573, %574 : vector<8x32xf32>
    %576 = math.tanh %575 : vector<8x32xf32>
    %577 = arith.mulf %572, %576 : vector<8x32xf32>
    %cst_180 = arith.constant dense<0.000000e+00> : vector<8x32xf32>
    %578 = tpu.matmul %577, %424, %cst_180 {dimension_numbers = #tpu.dot_dimension_numbers<[1], [0], [0], [1], [0, 0, 1, 1], [], []>} : vector<8x32xf32>, vector<32x32xf32>, vector<8x32xf32> -> vector<8x32xf32>
    %579 = arith.addf %375, %578 : vector<8x32xf32>
    %580 = arith.negf %579 : vector<8x32xf32>
    %581 = math.exp %580 : vector<8x32xf32>
    %cst_181 = arith.constant 1.000000e+00 : f32
    %582 = vector.broadcast %cst_181 : f32 to vector<8x32xf32>
    %583 = arith.addf %582, %581 : vector<8x32xf32>
    %584 = arith.divf %582, %583 : vector<8x32xf32>
    %cst_182 = arith.constant dense<0.000000e+00> : vector<8x32xf32>
    %585 = tpu.matmul %577, %426, %cst_182 {dimension_numbers = #tpu.dot_dimension_numbers<[1], [0], [0], [1], [0, 0, 1, 1], [], []>} : vector<8x32xf32>, vector<32x32xf32>, vector<8x32xf32> -> vector<8x32xf32>
    %586 = arith.addf %390, %585 : vector<8x32xf32>
    %587 = arith.negf %586 : vector<8x32xf32>
    %588 = math.exp %587 : vector<8x32xf32>
    %cst_183 = arith.constant 1.000000e+00 : f32
    %589 = vector.broadcast %cst_183 : f32 to vector<8x32xf32>
    %590 = arith.addf %589, %588 : vector<8x32xf32>
    %591 = arith.divf %589, %590 : vector<8x32xf32>
    %cst_184 = arith.constant dense<0.000000e+00> : vector<8x32xf32>
    %592 = tpu.matmul %577, %428, %cst_184 {dimension_numbers = #tpu.dot_dimension_numbers<[1], [0], [0], [1], [0, 0, 1, 1], [], []>} : vector<8x32xf32>, vector<32x32xf32>, vector<8x32xf32> -> vector<8x32xf32>
    %593 = arith.addf %405, %592 : vector<8x32xf32>
    %594 = math.tanh %593 : vector<8x32xf32>
    %cst_185 = arith.constant dense<0.000000e+00> : vector<8x32xf32>
    %595 = tpu.matmul %577, %430, %cst_185 {dimension_numbers = #tpu.dot_dimension_numbers<[1], [0], [0], [1], [0, 0, 1, 1], [], []>} : vector<8x32xf32>, vector<32x32xf32>, vector<8x32xf32> -> vector<8x32xf32>
    %596 = arith.addf %420, %595 : vector<8x32xf32>
    %597 = arith.negf %596 : vector<8x32xf32>
    %598 = math.exp %597 : vector<8x32xf32>
    %cst_186 = arith.constant 1.000000e+00 : f32
    %599 = vector.broadcast %cst_186 : f32 to vector<8x32xf32>
    %600 = arith.addf %599, %598 : vector<8x32xf32>
    %601 = arith.divf %599, %600 : vector<8x32xf32>
    %602 = arith.mulf %591, %575 : vector<8x32xf32>
    %603 = arith.mulf %584, %594 : vector<8x32xf32>
    %604 = arith.addf %602, %603 : vector<8x32xf32>
    %605 = math.tanh %604 : vector<8x32xf32>
    %606 = arith.mulf %601, %605 : vector<8x32xf32>
    %cst_187 = arith.constant dense<0.000000e+00> : vector<8x32xf32>
    %607 = tpu.matmul %606, %424, %cst_187 {dimension_numbers = #tpu.dot_dimension_numbers<[1], [0], [0], [1], [0, 0, 1, 1], [], []>} : vector<8x32xf32>, vector<32x32xf32>, vector<8x32xf32> -> vector<8x32xf32>
    %608 = arith.addf %376, %607 : vector<8x32xf32>
    %609 = arith.negf %608 : vector<8x32xf32>
    %610 = math.exp %609 : vector<8x32xf32>
    %cst_188 = arith.constant 1.000000e+00 : f32
    %611 = vector.broadcast %cst_188 : f32 to vector<8x32xf32>
    %612 = arith.addf %611, %610 : vector<8x32xf32>
    %613 = arith.divf %611, %612 : vector<8x32xf32>
    %cst_189 = arith.constant dense<0.000000e+00> : vector<8x32xf32>
    %614 = tpu.matmul %606, %426, %cst_189 {dimension_numbers = #tpu.dot_dimension_numbers<[1], [0], [0], [1], [0, 0, 1, 1], [], []>} : vector<8x32xf32>, vector<32x32xf32>, vector<8x32xf32> -> vector<8x32xf32>
    %615 = arith.addf %391, %614 : vector<8x32xf32>
    %616 = arith.negf %615 : vector<8x32xf32>
    %617 = math.exp %616 : vector<8x32xf32>
    %cst_190 = arith.constant 1.000000e+00 : f32
    %618 = vector.broadcast %cst_190 : f32 to vector<8x32xf32>
    %619 = arith.addf %618, %617 : vector<8x32xf32>
    %620 = arith.divf %618, %619 : vector<8x32xf32>
    %cst_191 = arith.constant dense<0.000000e+00> : vector<8x32xf32>
    %621 = tpu.matmul %606, %428, %cst_191 {dimension_numbers = #tpu.dot_dimension_numbers<[1], [0], [0], [1], [0, 0, 1, 1], [], []>} : vector<8x32xf32>, vector<32x32xf32>, vector<8x32xf32> -> vector<8x32xf32>
    %622 = arith.addf %406, %621 : vector<8x32xf32>
    %623 = math.tanh %622 : vector<8x32xf32>
    %cst_192 = arith.constant dense<0.000000e+00> : vector<8x32xf32>
    %624 = tpu.matmul %606, %430, %cst_192 {dimension_numbers = #tpu.dot_dimension_numbers<[1], [0], [0], [1], [0, 0, 1, 1], [], []>} : vector<8x32xf32>, vector<32x32xf32>, vector<8x32xf32> -> vector<8x32xf32>
    %625 = arith.addf %421, %624 : vector<8x32xf32>
    %626 = arith.negf %625 : vector<8x32xf32>
    %627 = math.exp %626 : vector<8x32xf32>
    %cst_193 = arith.constant 1.000000e+00 : f32
    %628 = vector.broadcast %cst_193 : f32 to vector<8x32xf32>
    %629 = arith.addf %628, %627 : vector<8x32xf32>
    %630 = arith.divf %628, %629 : vector<8x32xf32>
    %631 = arith.mulf %620, %604 : vector<8x32xf32>
    %632 = arith.mulf %613, %623 : vector<8x32xf32>
    %633 = arith.addf %631, %632 : vector<8x32xf32>
    %634 = math.tanh %633 : vector<8x32xf32>
    %635 = arith.mulf %630, %634 : vector<8x32xf32>
    %cst_194 = arith.constant dense<0.000000e+00> : vector<8x32xf32>
    %636 = tpu.matmul %635, %424, %cst_194 {dimension_numbers = #tpu.dot_dimension_numbers<[1], [0], [0], [1], [0, 0, 1, 1], [], []>} : vector<8x32xf32>, vector<32x32xf32>, vector<8x32xf32> -> vector<8x32xf32>
    %637 = arith.addf %377, %636 : vector<8x32xf32>
    %638 = arith.negf %637 : vector<8x32xf32>
    %639 = math.exp %638 : vector<8x32xf32>
    %cst_195 = arith.constant 1.000000e+00 : f32
    %640 = vector.broadcast %cst_195 : f32 to vector<8x32xf32>
    %641 = arith.addf %640, %639 : vector<8x32xf32>
    %642 = arith.divf %640, %641 : vector<8x32xf32>
    %cst_196 = arith.constant dense<0.000000e+00> : vector<8x32xf32>
    %643 = tpu.matmul %635, %426, %cst_196 {dimension_numbers = #tpu.dot_dimension_numbers<[1], [0], [0], [1], [0, 0, 1, 1], [], []>} : vector<8x32xf32>, vector<32x32xf32>, vector<8x32xf32> -> vector<8x32xf32>
    %644 = arith.addf %392, %643 : vector<8x32xf32>
    %645 = arith.negf %644 : vector<8x32xf32>
    %646 = math.exp %645 : vector<8x32xf32>
    %cst_197 = arith.constant 1.000000e+00 : f32
    %647 = vector.broadcast %cst_197 : f32 to vector<8x32xf32>
    %648 = arith.addf %647, %646 : vector<8x32xf32>
    %649 = arith.divf %647, %648 : vector<8x32xf32>
    %cst_198 = arith.constant dense<0.000000e+00> : vector<8x32xf32>
    %650 = tpu.matmul %635, %428, %cst_198 {dimension_numbers = #tpu.dot_dimension_numbers<[1], [0], [0], [1], [0, 0, 1, 1], [], []>} : vector<8x32xf32>, vector<32x32xf32>, vector<8x32xf32> -> vector<8x32xf32>
    %651 = arith.addf %407, %650 : vector<8x32xf32>
    %652 = math.tanh %651 : vector<8x32xf32>
    %cst_199 = arith.constant dense<0.000000e+00> : vector<8x32xf32>
    %653 = tpu.matmul %635, %430, %cst_199 {dimension_numbers = #tpu.dot_dimension_numbers<[1], [0], [0], [1], [0, 0, 1, 1], [], []>} : vector<8x32xf32>, vector<32x32xf32>, vector<8x32xf32> -> vector<8x32xf32>
    %654 = arith.addf %422, %653 : vector<8x32xf32>
    %655 = arith.negf %654 : vector<8x32xf32>
    %656 = math.exp %655 : vector<8x32xf32>
    %cst_200 = arith.constant 1.000000e+00 : f32
    %657 = vector.broadcast %cst_200 : f32 to vector<8x32xf32>
    %658 = arith.addf %657, %656 : vector<8x32xf32>
    %659 = arith.divf %657, %658 : vector<8x32xf32>
    %660 = arith.mulf %649, %633 : vector<8x32xf32>
    %661 = arith.mulf %642, %652 : vector<8x32xf32>
    %662 = arith.addf %660, %661 : vector<8x32xf32>
    %663 = math.tanh %662 : vector<8x32xf32>
    %664 = arith.mulf %659, %663 : vector<8x32xf32>
    %cst_201 = arith.constant 0.000000e+00 : f32
    %665 = vector.broadcast %cst_201 : f32 to vector<8x32xf32>
    %666 = arith.maximumf %664, %665 : vector<8x32xf32>
    %c0_202 = arith.constant 0 : index
    %c0_203 = arith.constant 0 : index
    %667 = vector.load %arg7[%c0_202, %c0_203] : memref<64x128xf32, #tpu.memory_space<vmem>>, vector<64x128xf32>
    %cst_204 = arith.constant dense<0.000000e+00> : vector<8x128xf32>
    %668 = tpu.matmul %361, %667, %cst_204 {dimension_numbers = #tpu.dot_dimension_numbers<[1], [0], [0], [1], [0, 0, 1, 1], [], []>} : vector<8x64xf32>, vector<64x128xf32>, vector<8x128xf32> -> vector<8x128xf32>
    %c0_205 = arith.constant 0 : index
    %c0_206 = arith.constant 0 : index
    %669 = vector.load %arg8[%c0_205, %c0_206] : memref<1x128xf32, #tpu.memory_space<vmem>>, vector<1x128xf32>
    %670 = vector.broadcast %669 : vector<1x128xf32> to vector<8x128xf32>
    %671 = arith.addf %668, %670 : vector<8x128xf32>
    %672 = vector.extract_strided_slice %671 {offsets = [0, 0], sizes = [8, 32], strides = [1, 1]} : vector<8x128xf32> to vector<8x32xf32>
    %673 = arith.negf %672 : vector<8x32xf32>
    %674 = math.exp %673 : vector<8x32xf32>
    %cst_207 = arith.constant 1.000000e+00 : f32
    %675 = vector.broadcast %cst_207 : f32 to vector<8x32xf32>
    %676 = arith.addf %675, %674 : vector<8x32xf32>
    %677 = arith.divf %675, %676 : vector<8x32xf32>
    %678 = vector.extract_strided_slice %671 {offsets = [0, 64], sizes = [8, 32], strides = [1, 1]} : vector<8x128xf32> to vector<8x32xf32>
    %679 = math.tanh %678 : vector<8x32xf32>
    %680 = vector.extract_strided_slice %671 {offsets = [0, 96], sizes = [8, 32], strides = [1, 1]} : vector<8x128xf32> to vector<8x32xf32>
    %681 = arith.negf %680 : vector<8x32xf32>
    %682 = math.exp %681 : vector<8x32xf32>
    %cst_208 = arith.constant 1.000000e+00 : f32
    %683 = vector.broadcast %cst_208 : f32 to vector<8x32xf32>
    %684 = arith.addf %683, %682 : vector<8x32xf32>
    %685 = arith.divf %683, %684 : vector<8x32xf32>
    %686 = arith.mulf %677, %679 : vector<8x32xf32>
    %687 = math.tanh %686 : vector<8x32xf32>
    %688 = arith.mulf %685, %687 : vector<8x32xf32>
    %cst_209 = arith.constant 0.000000e+00 : f32
    %689 = vector.broadcast %cst_209 : f32 to vector<8x32xf32>
    %690 = arith.maximumf %688, %689 : vector<8x32xf32>
    %691 = tpu.concatenate %666, %690 in 1 : vector<8x32xf32>, vector<8x32xf32> -> vector<8x64xf32>
    %c0_210 = arith.constant 0 : index
    %c0_211 = arith.constant 0 : index
    %692 = vector.load %arg9[%c0_210, %c0_211] : memref<64x128xf32, #tpu.memory_space<vmem>>, vector<64x128xf32>
    %cst_212 = arith.constant dense<0.000000e+00> : vector<8x128xf32>
    %693 = tpu.matmul %691, %692, %cst_212 {dimension_numbers = #tpu.dot_dimension_numbers<[1], [0], [0], [1], [0, 0, 1, 1], [], []>} : vector<8x64xf32>, vector<64x128xf32>, vector<8x128xf32> -> vector<8x128xf32>
    %c0_213 = arith.constant 0 : index
    %c0_214 = arith.constant 0 : index
    %694 = vector.load %arg10[%c0_213, %c0_214] : memref<1x128xf32, #tpu.memory_space<vmem>>, vector<1x128xf32>
    %695 = vector.broadcast %694 : vector<1x128xf32> to vector<8x128xf32>
    %696 = arith.addf %693, %695 : vector<8x128xf32>
    %c0_215 = arith.constant 0 : index
    %c0_216 = arith.constant 0 : index
    %697 = vector.load %arg11[%c0_215, %c0_216] : memref<8x128xf32, #tpu.memory_space<vmem>>, vector<8x128xf32>
    tpu.vector_store %arg11[%c0_215, %c0_216], %696 {strides = array<i32>} : memref<8x128xf32, #tpu.memory_space<vmem>>, vector<8x128xf32>,
    return
  }
}

</mosaic_0001>

<llo_original>
// kernel: bitcoin_bilstm_forward.1
$region0: #{bitcoin_bilstm_forward.1}
  #allocation0 [shape = 'u32[]', space=smem, size = 0x4, offset = 0x4, fixed_abs, tag = 'smem constant byte address 0x4 - core index']
  #allocation1 [shape = 'u32[72,128]{1,0:T(1,128)}', space=vmem, size = 0x9000, scoped, tag = 'internal scratch']
  %s0 = inlined_call_operand.vmem [shape: f32[64,8], index: 0, kind: input, shape index: {}]
  %s1 = inlined_call_operand.hbm [shape: f32[4,8,64], index: 1, kind: input, shape index: {}]
  %s2 = inlined_call_operand.vmem [shape: f32[4,1,64], index: 2, kind: input, shape index: {}]
  %s3 = inlined_call_operand.vmem [shape: f32[4,64,64], index: 3, kind: input, shape index: {}]
  %s4 = inlined_call_operand.vmem [shape: f32[4,64,32], index: 4, kind: input, shape index: {}]
  %s5 = inlined_call_operand.vmem [shape: f32[4,1,32], index: 5, kind: input, shape index: {}]
  %s6 = inlined_call_operand.vmem [shape: f32[4,32,32], index: 6, kind: input, shape index: {}]
  %s7 = inlined_call_operand.vmem [shape: f32[64,128], index: 7, kind: input, shape index: {}]
  %s8 = inlined_call_operand.vmem [shape: f32[1,128], index: 8, kind: input, shape index: {}]
  %s9 = inlined_call_operand.hbm [shape: f32[64,128], index: 9, kind: input, shape index: {}]
  %s10 = inlined_call_operand.vmem [shape: f32[1,128], index: 10, kind: input, shape index: {}]
  %s11 = inlined_call_operand.vmem [shape: f32[8,128], index: 11, kind: output, shape index: {}]
  %s12 = sld [smem:[#allocation0]]
  $region62: #{bitcoin_bilstm_forward.1} parent=0
    _
  %s14 = ssub.s32 1, %s12
  %s15 = scalar_select 0, %s14, %s12
  $region1: #{bitcoin_bilstm_forward.1} parent=0
    #allocation2 [shape = 'u8[16384]{0}', space=vmem, size = 0x4000, scoped, tag = 'input window, operand 1, single buffered']
    #allocation3 [shape = 's32[1]{0}', space=sflag, size = 0x4, scoped, tag = 'scoped memory for bitcoin_bilstm_forward.1']
    #allocation4 [shape = 'u8[32768]{0}', space=vmem, size = 0x8000, scoped, tag = 'input window, operand 9, single buffered']
    #allocation5 [shape = 's32[1]{0}', space=sflag, size = 0x4, scoped, tag = 'scoped memory for bitcoin_bilstm_forward.1']
    %16 = vsyncpa [#allocation3], 0
    %17 = vsyncpa [#allocation5], 0
    // Predicated region
    $region2: #{bitcoin_bilstm_forward.1} parent=1 // pred_check
      _
    $region3: #{bitcoin_bilstm_forward.1} parent=1 // pred_check_branch
      %19 = sbr.rel (0) target = $region5
    $region4: #{bitcoin_bilstm_forward.1} parent=1 // pred_region
      _
    $region5: #{bitcoin_bilstm_forward.1} parent=1 // pred_fallthru
      _
    // Predicated region
    $region6: #{bitcoin_bilstm_forward.1} parent=1 // pred_check
      _
    $region7: #{bitcoin_bilstm_forward.1} parent=1 // pred_check_branch
      %21 = sbr.rel (0) target = $region9
    $region8: #{bitcoin_bilstm_forward.1} parent=1 // pred_region
      %23 = vsyncadd [#allocation3], 0
      %s24 = sshll.u32 %s1, 4
      %s25 = int_to_ptr.hbm [resolvable:$true] %s24
      %s26 = sshll.u32 [#allocation2], 4
      %s27 = int_to_ptr.vmem [resolvable:$true] %s26
      %32 = dma.hbm_to_vmem [thread:$0]  %s25, 512, %s27, [#allocation3], 128, 128, 8
    $region9: #{bitcoin_bilstm_forward.1} parent=1 // pred_fallthru
      _
    // Predicated region
    $region10: #{bitcoin_bilstm_forward.1} parent=1 // pred_check
      _
    $region11: #{bitcoin_bilstm_forward.1} parent=1 // pred_check_branch
      %34 = sbr.rel (0) target = $region13
    $region12: #{bitcoin_bilstm_forward.1} parent=1 // pred_region
      _
    $region13: #{bitcoin_bilstm_forward.1} parent=1 // pred_fallthru
      _
    // Predicated region
    $region14: #{bitcoin_bilstm_forward.1} parent=1 // pred_check
      _
    $region15: #{bitcoin_bilstm_forward.1} parent=1 // pred_check_branch
      %36 = sbr.rel (0) target = $region17
    $region16: #{bitcoin_bilstm_forward.1} parent=1 // pred_region
      _
    $region17: #{bitcoin_bilstm_forward.1} parent=1 // pred_fallthru
      _
    // Predicated region
    $region18: #{bitcoin_bilstm_forward.1} parent=1 // pred_check
      _
    $region19: #{bitcoin_bilstm_forward.1} parent=1 // pred_check_branch
      %38 = sbr.rel (0) target = $region21
    $region20: #{bitcoin_bilstm_forward.1} parent=1 // pred_region
      _
    $region21: #{bitcoin_bilstm_forward.1} parent=1 // pred_fallthru
      _
    // Predicated region
    $region22: #{bitcoin_bilstm_forward.1} parent=1 // pred_check
      _
    $region23: #{bitcoin_bilstm_forward.1} parent=1 // pred_check_branch
      %40 = sbr.rel (0) target = $region25
    $region24: #{bitcoin_bilstm_forward.1} parent=1 // pred_region
      _
    $region25: #{bitcoin_bilstm_forward.1} parent=1 // pred_fallthru
      _
    // Predicated region
    $region26: #{bitcoin_bilstm_forward.1} parent=1 // pred_check
      _
    $region27: #{bitcoin_bilstm_forward.1} parent=1 // pred_check_branch
      %42 = sbr.rel (0) target = $region29
    $region28: #{bitcoin_bilstm_forward.1} parent=1 // pred_region
      _
    $region29: #{bitcoin_bilstm_forward.1} parent=1 // pred_fallthru
      _
    // Predicated region
    $region30: #{bitcoin_bilstm_forward.1} parent=1 // pred_check
      _
    $region31: #{bitcoin_bilstm_forward.1} parent=1 // pred_check_branch
      %44 = sbr.rel (0) target = $region33
    $region32: #{bitcoin_bilstm_forward.1} parent=1 // pred_region
      _
    $region33: #{bitcoin_bilstm_forward.1} parent=1 // pred_fallthru
      _
    // Predicated region
    $region34: #{bitcoin_bilstm_forward.1} parent=1 // pred_check
      _
    $region35: #{bitcoin_bilstm_forward.1} parent=1 // pred_check_branch
      %46 = sbr.rel (0) target = $region37
    $region36: #{bitcoin_bilstm_forward.1} parent=1 // pred_region
      _
    $region37: #{bitcoin_bilstm_forward.1} parent=1 // pred_fallthru
      _
    // Predicated region
    $region38: #{bitcoin_bilstm_forward.1} parent=1 // pred_check
      _
    $region39: #{bitcoin_bilstm_forward.1} parent=1 // pred_check_branch
      %48 = sbr.rel (0) target = $region41
    $region40: #{bitcoin_bilstm_forward.1} parent=1 // pred_region
      %50 = vsyncadd [#allocation5], 0
      %s51 = sshll.u32 %s9, 4
      %s52 = int_to_ptr.hbm [resolvable:$true] %s51
      %s53 = sshll.u32 [#allocation4], 4
      %s54 = int_to_ptr.vmem [resolvable:$true] %s53
      %59 = dma.hbm_to_vmem [thread:$0]  %s52, 1024, %s54, [#allocation5], 128, 128, 8
    $region41: #{bitcoin_bilstm_forward.1} parent=1 // pred_fallthru
      _
    // Predicated region
    $region42: #{bitcoin_bilstm_forward.1} parent=1 // pred_check
      _
    $region43: #{bitcoin_bilstm_forward.1} parent=1 // pred_check_branch
      %61 = sbr.rel (0) target = $region45
    $region44: #{bitcoin_bilstm_forward.1} parent=1 // pred_region
      _
    $region45: #{bitcoin_bilstm_forward.1} parent=1 // pred_fallthru
      _
    // Predicated region
    $region46: #{bitcoin_bilstm_forward.1} parent=1 // pred_check
      _
    $region47: #{bitcoin_bilstm_forward.1} parent=1 // pred_check_branch
      %63 = sbr.rel (0) target = $region49
    $region48: #{bitcoin_bilstm_forward.1} parent=1 // pred_region
      %65 = dma.done [#allocation3], 512
    $region49: #{bitcoin_bilstm_forward.1} parent=1 // pred_fallthru
      _
    // Predicated region
    $region50: #{bitcoin_bilstm_forward.1} parent=1 // pred_check
      _
    $region51: #{bitcoin_bilstm_forward.1} parent=1 // pred_check_branch
      %67 = sbr.rel (0) target = $region53
    $region52: #{bitcoin_bilstm_forward.1} parent=1 // pred_region
      %69 = dma.done [#allocation5], 1024
    $region53: #{bitcoin_bilstm_forward.1} parent=1 // pred_fallthru
      _
    %v70 = vld [vmem:[%s0] sm:$0xff]
    %v71 = vld [vmem:[%s0 + $0x8] sm:$0xff]
    %v72 = vld [vmem:[%s0 + $0x10] sm:$0xff]
    %v73 = vld [vmem:[%s0 + $0x18] sm:$0xff]
    %v74 = vld [vmem:[%s0 + $0x20] sm:$0xff]
    %v75 = vld [vmem:[%s0 + $0x28] sm:$0xff]
    %v76 = vld [vmem:[%s0 + $0x30] sm:$0xff]
    %v77 = vld [vmem:[%s0 + $0x38] sm:$0xff]
    %v78 = vlaneseq
    %v79 = vand.u32 %v78, 127
    %vm80 = vcmp.lt.s32.totalorder %v79, 32
    %v81 = vld [vmem:[#allocation2] sm:$0xff]
    %v82 = vld [vmem:[%s2] sm:$0x1]
    %v84 = vperm.slane %v82, 0
    %vm86 = vcmask 64512
    %v88 = vsel %vm86, %v70, 0
    %v91 = vsel %vm86, %v71, 0
    %v94 = vsel %vm86, %v72, 0
    %v97 = vsel %vm86, %v73, 0
    %v100 = vsel %vm86, %v74, 0
    %v103 = vsel %vm86, %v75, 0
    %v106 = vsel %vm86, %v76, 0
    %v109 = vsel %vm86, %v77, 0
    %111 = vmatpush.msra.mxu0 0.0
    %112 = vmatpush.msra.mxu0 0.0
    %113 = vmatpush.msra.mxu0 0.0
    %114 = vmatpush.msra.mxu0 0.0
    %115 = vmatpush.msra.mxu0 0.0
    %116 = vmatpush.msra.mxu0 0.0
    %117 = vmatpush.msra.mxu0 0.0
    %118 = vmatpush.msra.mxu0 0.0
    %119 = vmatpush.msra.mxu0 0.0
    %120 = vmatpush.msra.mxu0 0.0
    %121 = vmatpush.msra.mxu0 0.0
    %122 = vmatpush.msra.mxu0 0.0
    %123 = vmatpush.msra.mxu0 0.0
    %124 = vmatpush.msra.mxu0 0.0
    %125 = vmatpush.msra.mxu0 0.0
    %126 = vmatpush.msra.mxu0 %v81
    %127 = vmatmul.f32.gmra.mxu0 %v88
    %v128 = vpop.f32.mrf.mxu0
    %v129 = vadd.f32 %v84, %v128
    %130 = vmatmul.f32.gmra.mxu0 %v91
    %v131 = vpop.f32.mrf.mxu0
    %v132 = vadd.f32 %v84, %v131
    %133 = vmatmul.f32.gmra.mxu0 %v94
    %v134 = vpop.f32.mrf.mxu0
    %v135 = vadd.f32 %v84, %v134
    %136 = vmatmul.f32.gmra.mxu0 %v97
    %v137 = vpop.f32.mrf.mxu0
    %v138 = vadd.f32 %v84, %v137
    %139 = vmatmul.f32.gmra.mxu0 %v100
    %v140 = vpop.f32.mrf.mxu0
    %v141 = vadd.f32 %v84, %v140
    %142 = vmatmul.f32.gmra.mxu0 %v103
    %v143 = vpop.f32.mrf.mxu0
    %v144 = vadd.f32 %v84, %v143
    %145 = vmatmul.f32.gmra.mxu0 %v106
    %v146 = vpop.f32.mrf.mxu0
    %v147 = vadd.f32 %v84, %v146
    %148 = vmatmul.f32.gmra.mxu0 %v109
    %v149 = vpop.f32.mrf.mxu0
    %v150 = vadd.f32 %v84, %v149
    %151 = vdwg.mxu0
    %v152 = vsel %vm80, %v129, %v150
    %v153 = vsel %vm80, %v132, %v147
    %v154 = vsel %vm80, %v135, %v144
    %v155 = vsel %vm80, %v138, %v141
    %v156 = vsel %vm80, %v141, %v138
    %v157 = vsel %vm80, %v144, %v135
    %v158 = vsel %vm80, %v147, %v132
    %v159 = vsel %vm80, %v150, %v129
    %s160 = scalar_lea.vmem [#allocation2], 8
    %v161 = vld [vmem:[%s160] sm:$0xff]
    %s162 = scalar_lea.vmem %s2, 1
    %v163 = vld [vmem:[%s162] sm:$0x1]
    %v165 = vperm.slane %v163, 0
    %167 = vmatpush.msra.mxu0 0.0
    %168 = vmatpush.msra.mxu0 0.0
    %169 = vmatpush.msra.mxu0 0.0
    %170 = vmatpush.msra.mxu0 0.0
    %171 = vmatpush.msra.mxu0 0.0
    %172 = vmatpush.msra.mxu0 0.0
    %173 = vmatpush.msra.mxu0 0.0
    %174 = vmatpush.msra.mxu0 0.0
    %175 = vmatpush.msra.mxu0 0.0
    %176 = vmatpush.msra.mxu0 0.0
    %177 = vmatpush.msra.mxu0 0.0
    %178 = vmatpush.msra.mxu0 0.0
    %179 = vmatpush.msra.mxu0 0.0
    %180 = vmatpush.msra.mxu0 0.0
    %181 = vmatpush.msra.mxu0 0.0
    %182 = vmatpush.msra.mxu0 %v161
    %183 = vmatmul.f32.gmra.mxu0 %v88
    %v184 = vpop.f32.mrf.mxu0
    %v185 = vadd.f32 %v165, %v184
    %186 = vmatmul.f32.gmra.mxu0 %v91
    %v187 = vpop.f32.mrf.mxu0
    %v188 = vadd.f32 %v165, %v187
    %189 = vmatmul.f32.gmra.mxu0 %v94
    %v190 = vpop.f32.mrf.mxu0
    %v191 = vadd.f32 %v165, %v190
    %192 = vmatmul.f32.gmra.mxu0 %v97
    %v193 = vpop.f32.mrf.mxu0
    %v194 = vadd.f32 %v165, %v193
    %195 = vmatmul.f32.gmra.mxu0 %v100
    %v196 = vpop.f32.mrf.mxu0
    %v197 = vadd.f32 %v165, %v196
    %198 = vmatmul.f32.gmra.mxu0 %v103
    %v199 = vpop.f32.mrf.mxu0
    %v200 = vadd.f32 %v165, %v199
    %201 = vmatmul.f32.gmra.mxu0 %v106
    %v202 = vpop.f32.mrf.mxu0
    %v203 = vadd.f32 %v165, %v202
    %204 = vmatmul.f32.gmra.mxu0 %v109
    %v205 = vpop.f32.mrf.mxu0
    %v206 = vadd.f32 %v165, %v205
    %207 = vdwg.mxu0
    %v208 = vsel %vm80, %v185, %v206
    %v209 = vsel %vm80, %v188, %v203
    %v210 = vsel %vm80, %v191, %v200
    %v211 = vsel %vm80, %v194, %v197
    %v212 = vsel %vm80, %v197, %v194
    %v213 = vsel %vm80, %v200, %v191
    %v214 = vsel %vm80, %v203, %v188
    %v215 = vsel %vm80, %v206, %v185
    %s216 = scalar_lea.vmem [#allocation2], 16
    %v217 = vld [vmem:[%s216] sm:$0xff]
    %s218 = scalar_lea.vmem %s2, 2
    %v219 = vld [vmem:[%s218] sm:$0x1]
    %v221 = vperm.slane %v219, 0
    %223 = vmatpush.msra.mxu0 0.0
    %224 = vmatpush.msra.mxu0 0.0
    %225 = vmatpush.msra.mxu0 0.0
    %226 = vmatpush.msra.mxu0 0.0
    %227 = vmatpush.msra.mxu0 0.0
    %228 = vmatpush.msra.mxu0 0.0
    %229 = vmatpush.msra.mxu0 0.0
    %230 = vmatpush.msra.mxu0 0.0
    %231 = vmatpush.msra.mxu0 0.0
    %232 = vmatpush.msra.mxu0 0.0
    %233 = vmatpush.msra.mxu0 0.0
    %234 = vmatpush.msra.mxu0 0.0
    %235 = vmatpush.msra.mxu0 0.0
    %236 = vmatpush.msra.mxu0 0.0
    %237 = vmatpush.msra.mxu0 0.0
    %238 = vmatpush.msra.mxu0 %v217
    %239 = vmatmul.f32.gmra.mxu0 %v88
    %v240 = vpop.f32.mrf.mxu0
    %v241 = vadd.f32 %v221, %v240
    %242 = vmatmul.f32.gmra.mxu0 %v91
    %v243 = vpop.f32.mrf.mxu0
    %v244 = vadd.f32 %v221, %v243
    %245 = vmatmul.f32.gmra.mxu0 %v94
    %v246 = vpop.f32.mrf.mxu0
    %v247 = vadd.f32 %v221, %v246
    %248 = vmatmul.f32.gmra.mxu0 %v97
    %v249 = vpop.f32.mrf.mxu0
    %v250 = vadd.f32 %v221, %v249
    %251 = vmatmul.f32.gmra.mxu0 %v100
    %v252 = vpop.f32.mrf.mxu0
    %v253 = vadd.f32 %v221, %v252
    %254 = vmatmul.f32.gmra.mxu0 %v103
    %v255 = vpop.f32.mrf.mxu0
    %v256 = vadd.f32 %v221, %v255
    %257 = vmatmul.f32.gmra.mxu0 %v106
    %v258 = vpop.f32.mrf.mxu0
    %v259 = vadd.f32 %v221, %v258
    %260 = vmatmul.f32.gmra.mxu0 %v109
    %v261 = vpop.f32.mrf.mxu0
    %v262 = vadd.f32 %v221, %v261
    %263 = vdwg.mxu0
    %v264 = vsel %vm80, %v241, %v262
    %v265 = vsel %vm80, %v244, %v259
    %v266 = vsel %vm80, %v247, %v256
    %v267 = vsel %vm80, %v250, %v253
    %v268 = vsel %vm80, %v253, %v250
    %v269 = vsel %vm80, %v256, %v247
    %v270 = vsel %vm80, %v259, %v244
    %v271 = vsel %vm80, %v262, %v241
    %s272 = scalar_lea.vmem [#allocation2], 24
    %v273 = vld [vmem:[%s272] sm:$0xff]
    %s274 = scalar_lea.vmem %s2, 3
    %v275 = vld [vmem:[%s274] sm:$0x1]
    %v277 = vperm.slane %v275, 0
    %279 = vmatpush.msra.mxu0 0.0
    %280 = vmatpush.msra.mxu0 0.0
    %281 = vmatpush.msra.mxu0 0.0
    %282 = vmatpush.msra.mxu0 0.0
    %283 = vmatpush.msra.mxu0 0.0
    %284 = vmatpush.msra.mxu0 0.0
    %285 = vmatpush.msra.mxu0 0.0
    %286 = vmatpush.msra.mxu0 0.0
    %287 = vmatpush.msra.mxu0 0.0
    %288 = vmatpush.msra.mxu0 0.0
    %289 = vmatpush.msra.mxu0 0.0
    %290 = vmatpush.msra.mxu0 0.0
    %291 = vmatpush.msra.mxu0 0.0
    %292 = vmatpush.msra.mxu0 0.0
    %293 = vmatpush.msra.mxu0 0.0
    %294 = vmatpush.msra.mxu0 %v273
    %295 = vmatmul.f32.gmra.mxu0 %v88
    %v296 = vpop.f32.mrf.mxu0
    %v297 = vadd.f32 %v277, %v296
    %298 = vmatmul.f32.gmra.mxu0 %v91
    %v299 = vpop.f32.mrf.mxu0
    %v300 = vadd.f32 %v277, %v299
    %301 = vmatmul.f32.gmra.mxu0 %v94
    %v302 = vpop.f32.mrf.mxu0
    %v303 = vadd.f32 %v277, %v302
    %304 = vmatmul.f32.gmra.mxu0 %v97
    %v305 = vpop.f32.mrf.mxu0
    %v306 = vadd.f32 %v277, %v305
    %307 = vmatmul.f32.gmra.mxu0 %v100
    %v308 = vpop.f32.mrf.mxu0
    %v309 = vadd.f32 %v277, %v308
    %310 = vmatmul.f32.gmra.mxu0 %v103
    %v311 = vpop.f32.mrf.mxu0
    %v312 = vadd.f32 %v277, %v311
    %313 = vmatmul.f32.gmra.mxu0 %v106
    %v314 = vpop.f32.mrf.mxu0
    %v315 = vadd.f32 %v277, %v314
    %316 = vmatmul.f32.gmra.mxu0 %v109
    %v317 = vpop.f32.mrf.mxu0
    %v318 = vadd.f32 %v277, %v317
    %319 = vdwg.mxu0
    %v320 = vsel %vm80, %v297, %v318
    %v321 = vsel %vm80, %v300, %v315
    %v322 = vsel %vm80, %v303, %v312
    %v323 = vsel %vm80, %v306, %v309
    %v324 = vsel %vm80, %v309, %v306
    %v325 = vsel %vm80, %v312, %v303
    %v326 = vsel %vm80, %v315, %v300
    %v327 = vsel %vm80, %v318, %v297
    %v328 = vld [vmem:[%s3] sm:$0xff]
    %v329 = vld [vmem:[%s3 + $0x8] sm:$0xff]
    %v330 = vld [vmem:[%s3 + $0x10] sm:$0xff]
    %v331 = vld [vmem:[%s3 + $0x18] sm:$0xff]
    %v332 = vld [vmem:[%s3 + $0x20] sm:$0xff]
    %v333 = vld [vmem:[%s3 + $0x28] sm:$0xff]
    %v334 = vld [vmem:[%s3 + $0x30] sm:$0xff]
    %v335 = vld [vmem:[%s3 + $0x38] sm:$0xff]
    %s336 = scalar_lea.vmem %s3, 64
    %v337 = vld [vmem:[%s336] sm:$0xff]
    %v338 = vld [vmem:[%s336 + $0x8] sm:$0xff]
    %v339 = vld [vmem:[%s336 + $0x10] sm:$0xff]
    %v340 = vld [vmem:[%s336 + $0x18] sm:$0xff]
    %v341 = vld [vmem:[%s336 + $0x20] sm:$0xff]
    %v342 = vld [vmem:[%s336 + $0x28] sm:$0xff]
    %v343 = vld [vmem:[%s336 + $0x30] sm:$0xff]
    %v344 = vld [vmem:[%s336 + $0x38] sm:$0xff]
    %s345 = scalar_lea.vmem %s3, 128
    %v346 = vld [vmem:[%s345] sm:$0xff]
    %v347 = vld [vmem:[%s345 + $0x8] sm:$0xff]
    %v348 = vld [vmem:[%s345 + $0x10] sm:$0xff]
    %v349 = vld [vmem:[%s345 + $0x18] sm:$0xff]
    %v350 = vld [vmem:[%s345 + $0x20] sm:$0xff]
    %v351 = vld [vmem:[%s345 + $0x28] sm:$0xff]
    %v352 = vld [vmem:[%s345 + $0x30] sm:$0xff]
    %v353 = vld [vmem:[%s345 + $0x38] sm:$0xff]
    %s354 = scalar_lea.vmem %s3, 192
    %v355 = vld [vmem:[%s354] sm:$0xff]
    %v356 = vld [vmem:[%s354 + $0x8] sm:$0xff]
    %v357 = vld [vmem:[%s354 + $0x10] sm:$0xff]
    %v358 = vld [vmem:[%s354 + $0x18] sm:$0xff]
    %v359 = vld [vmem:[%s354 + $0x20] sm:$0xff]
    %v360 = vld [vmem:[%s354 + $0x28] sm:$0xff]
    %v361 = vld [vmem:[%s354 + $0x30] sm:$0xff]
    %v362 = vld [vmem:[%s354 + $0x38] sm:$0xff]
    %vm363 = vcmask 523264
    %v365 = vsel %vm363, 0.0, 0
    %367 = vmatpush.msra.mxu0 0.0
    %368 = vmatpush.msra.mxu0 0.0
    %369 = vmatpush.msra.mxu0 0.0
    %370 = vmatpush.msra.mxu0 0.0
    %371 = vmatpush.msra.mxu0 0.0
    %372 = vmatpush.msra.mxu0 0.0
    %373 = vmatpush.msra.mxu0 0.0
    %374 = vmatpush.msra.mxu0 0.0
    %375 = vmatpush.msra.mxu0 %v335
    %376 = vmatpush.msra.mxu0 %v334
    %377 = vmatpush.msra.mxu0 %v333
    %378 = vmatpush.msra.mxu0 %v332
    %379 = vmatpush.msra.mxu0 %v331
    %380 = vmatpush.msra.mxu0 %v330
    %381 = vmatpush.msra.mxu0 %v329
    %382 = vmatpush.msra.mxu0 %v328
    %383 = vmatmul.f32.gmra.mxu0 %v365
    %v384 = vpop.f32.mrf.mxu0
    %v385 = vadd.f32 0.0, %v384
    %386 = vdwg.mxu0
    %v387 = vadd.f32 %v152, %v385
    %v388 = vxor.u32 %v387, 2147483648
    %v389 = vmul.f32 %v388, 1.442695
    %v390 = vpow.pop %v389
    %v391 = vadd.f32 %v390, 1.0
    %v392 = vrcp.pop %v391
    %v393 = vmul.f32 %v391, %v392
    %v394 = vsub.f32 1.0, %v393
    %v395 = vmul.f32 %v392, %v394
    %v396 = vadd.f32 %v392, %v395
    %vm397 = vweird.f32 %v391
    %vm398 = vweird.f32 %v392
    %vm399 = vmor %vm397, %vm398
    %v400 = vsel %vm399, %v392, %v396
    %v401 = vand.u32 2147483647, %v391
    %vm402 = vcmp.eq.f32.partialorder %v401, 8.507059e+37
    %v403 = vand.u32 %v391, 2147483648
    %v404 = vor.u32 1.1754944e-38, %v403
    %v405 = vsel %vm402, %v404, %v400
    %v406 = vmul.f32 1.0, %v405
    %407 = vmatpush.msra.mxu0 0.0
    %408 = vmatpush.msra.mxu0 0.0
    %409 = vmatpush.msra.mxu0 0.0
    %410 = vmatpush.msra.mxu0 0.0
    %411 = vmatpush.msra.mxu0 0.0
    %412 = vmatpush.msra.mxu0 0.0
    %413 = vmatpush.msra.mxu0 0.0
    %414 = vmatpush.msra.mxu0 0.0
    %415 = vmatpush.msra.mxu0 %v344
    %416 = vmatpush.msra.mxu0 %v343
    %417 = vmatpush.msra.mxu0 %v342
    %418 = vmatpush.msra.mxu0 %v341
    %419 = vmatpush.msra.mxu0 %v340
    %420 = vmatpush.msra.mxu0 %v339
    %421 = vmatpush.msra.mxu0 %v338
    %422 = vmatpush.msra.mxu0 %v337
    %423 = vmatmul.f32.gmra.mxu0 %v365
    %v424 = vpop.f32.mrf.mxu0
    %v425 = vadd.f32 0.0, %v424
    %426 = vdwg.mxu0
    %v427 = vadd.f32 %v208, %v425
    %v428 = vxor.u32 %v427, 2147483648
    %v429 = vmul.f32 %v428, 1.442695
    %v430 = vpow.pop %v429
    %v431 = vadd.f32 %v430, 1.0
    %v432 = vrcp.pop %v431
    %v433 = vmul.f32 %v431, %v432
    %v434 = vsub.f32 1.0, %v433
    %v435 = vmul.f32 %v432, %v434
    %v436 = vadd.f32 %v432, %v435
    %vm437 = vweird.f32 %v431
    %vm438 = vweird.f32 %v432
    %vm439 = vmor %vm437, %vm438
    %v440 = vsel %vm439, %v432, %v436
    %v441 = vand.u32 2147483647, %v431
    %vm442 = vcmp.eq.f32.partialorder %v441, 8.507059e+37
    %v443 = vand.u32 %v431, 2147483648
    %v444 = vor.u32 1.1754944e-38, %v443
    %v445 = vsel %vm442, %v444, %v440
    %v446 = vmul.f32 1.0, %v445
    %447 = vmatpush.msra.mxu0 0.0
    %448 = vmatpush.msra.mxu0 0.0
    %449 = vmatpush.msra.mxu0 0.0
    %450 = vmatpush.msra.mxu0 0.0
    %451 = vmatpush.msra.mxu0 0.0
    %452 = vmatpush.msra.mxu0 0.0
    %453 = vmatpush.msra.mxu0 0.0
    %454 = vmatpush.msra.mxu0 0.0
    %455 = vmatpush.msra.mxu0 %v353
    %456 = vmatpush.msra.mxu0 %v352
    %457 = vmatpush.msra.mxu0 %v351
    %458 = vmatpush.msra.mxu0 %v350
    %459 = vmatpush.msra.mxu0 %v349
    %460 = vmatpush.msra.mxu0 %v348
    %461 = vmatpush.msra.mxu0 %v347
    %462 = vmatpush.msra.mxu0 %v346
    %463 = vmatmul.f32.gmra.mxu0 %v365
    %v464 = vpop.f32.mrf.mxu0
    %v465 = vadd.f32 0.0, %v464
    %466 = vdwg.mxu0
    %v467 = vadd.f32 %v264, %v465
    %v468 = vtanh.pop %v467
    %469 = vmatpush.msra.mxu0 0.0
    %470 = vmatpush.msra.mxu0 0.0
    %471 = vmatpush.msra.mxu0 0.0
    %472 = vmatpush.msra.mxu0 0.0
    %473 = vmatpush.msra.mxu0 0.0
    %474 = vmatpush.msra.mxu0 0.0
    %475 = vmatpush.msra.mxu0 0.0
    %476 = vmatpush.msra.mxu0 0.0
    %477 = vmatpush.msra.mxu0 %v362
    %478 = vmatpush.msra.mxu0 %v361
    %479 = vmatpush.msra.mxu0 %v360
    %480 = vmatpush.msra.mxu0 %v359
    %481 = vmatpush.msra.mxu0 %v358
    %482 = vmatpush.msra.mxu0 %v357
    %483 = vmatpush.msra.mxu0 %v356
    %484 = vmatpush.msra.mxu0 %v355
    %485 = vmatmul.f32.gmra.mxu0 %v365
    %v486 = vpop.f32.mrf.mxu0
    %v487 = vadd.f32 0.0, %v486
    %488 = vdwg.mxu0
    %v489 = vadd.f32 %v320, %v487
    %v490 = vxor.u32 %v489, 2147483648
    %v491 = vmul.f32 %v490, 1.442695
    %v492 = vpow.pop %v491
    %v493 = vadd.f32 %v492, 1.0
    %v494 = vrcp.pop %v493
    %v495 = vmul.f32 %v493, %v494
    %v496 = vsub.f32 1.0, %v495
    %v497 = vmul.f32 %v494, %v496
    %v498 = vadd.f32 %v494, %v497
    %vm499 = vweird.f32 %v493
    %vm500 = vweird.f32 %v494
    %vm501 = vmor %vm499, %vm500
    %v502 = vsel %vm501, %v494, %v498
    %v503 = vand.u32 2147483647, %v493
    %vm504 = vcmp.eq.f32.partialorder %v503, 8.507059e+37
    %v505 = vand.u32 %v493, 2147483648
    %v506 = vor.u32 1.1754944e-38, %v505
    %v507 = vsel %vm504, %v506, %v502
    %v508 = vmul.f32 1.0, %v507
    %v509 = vmul.f32 %v446, 0.0
    %v510 = vmul.f32 %v406, %v468
    %v511 = vadd.f32 %v509, %v510
    %v512 = vtanh.pop %v511
    %v513 = vmul.f32 %v508, %v512
    %v515 = vsel %vm363, %v513, 0
    %517 = vmatpush.msra.mxu0 0.0
    %518 = vmatpush.msra.mxu0 0.0
    %519 = vmatpush.msra.mxu0 0.0
    %520 = vmatpush.msra.mxu0 0.0
    %521 = vmatpush.msra.mxu0 0.0
    %522 = vmatpush.msra.mxu0 0.0
    %523 = vmatpush.msra.mxu0 0.0
    %524 = vmatpush.msra.mxu0 0.0
    %525 = vmatpush.msra.mxu0 %v335
    %526 = vmatpush.msra.mxu0 %v334
    %527 = vmatpush.msra.mxu0 %v333
    %528 = vmatpush.msra.mxu0 %v332
    %529 = vmatpush.msra.mxu0 %v331
    %530 = vmatpush.msra.mxu0 %v330
    %531 = vmatpush.msra.mxu0 %v329
    %532 = vmatpush.msra.mxu0 %v328
    %533 = vmatmul.f32.gmra.mxu0 %v515
    %v534 = vpop.f32.mrf.mxu0
    %v535 = vadd.f32 0.0, %v534
    %536 = vdwg.mxu0
    %v537 = vadd.f32 %v153, %v535
    %v538 = vxor.u32 %v537, 2147483648
    %v539 = vmul.f32 %v538, 1.442695
    %v540 = vpow.pop %v539
    %v541 = vadd.f32 %v540, 1.0
    %v542 = vrcp.pop %v541
    %v543 = vmul.f32 %v541, %v542
    %v544 = vsub.f32 1.0, %v543
    %v545 = vmul.f32 %v542, %v544
    %v546 = vadd.f32 %v542, %v545
    %vm547 = vweird.f32 %v541
    %vm548 = vweird.f32 %v542
    %vm549 = vmor %vm547, %vm548
    %v550 = vsel %vm549, %v542, %v546
    %v551 = vand.u32 2147483647, %v541
    %vm552 = vcmp.eq.f32.partialorder %v551, 8.507059e+37
    %v553 = vand.u32 %v541, 2147483648
    %v554 = vor.u32 1.1754944e-38, %v553
    %v555 = vsel %vm552, %v554, %v550
    %v556 = vmul.f32 1.0, %v555
    %557 = vmatpush.msra.mxu0 0.0
    %558 = vmatpush.msra.mxu0 0.0
    %559 = vmatpush.msra.mxu0 0.0
    %560 = vmatpush.msra.mxu0 0.0
    %561 = vmatpush.msra.mxu0 0.0
    %562 = vmatpush.msra.mxu0 0.0
    %563 = vmatpush.msra.mxu0 0.0
    %564 = vmatpush.msra.mxu0 0.0
    %565 = vmatpush.msra.mxu0 %v344
    %566 = vmatpush.msra.mxu0 %v343
    %567 = vmatpush.msra.mxu0 %v342
    %568 = vmatpush.msra.mxu0 %v341
    %569 = vmatpush.msra.mxu0 %v340
    %570 = vmatpush.msra.mxu0 %v339
    %571 = vmatpush.msra.mxu0 %v338
    %572 = vmatpush.msra.mxu0 %v337
    %573 = vmatmul.f32.gmra.mxu0 %v515
    %v574 = vpop.f32.mrf.mxu0
    %v575 = vadd.f32 0.0, %v574
    %576 = vdwg.mxu0
    %v577 = vadd.f32 %v209, %v575
    %v578 = vxor.u32 %v577, 2147483648
    %v579 = vmul.f32 %v578, 1.442695
    %v580 = vpow.pop %v579
    %v581 = vadd.f32 %v580, 1.0
    %v582 = vrcp.pop %v581
    %v583 = vmul.f32 %v581, %v582
    %v584 = vsub.f32 1.0, %v583
    %v585 = vmul.f32 %v582, %v584
    %v586 = vadd.f32 %v582, %v585
    %vm587 = vweird.f32 %v581
    %vm588 = vweird.f32 %v582
    %vm589 = vmor %vm587, %vm588
    %v590 = vsel %vm589, %v582, %v586
    %v591 = vand.u32 2147483647, %v581
    %vm592 = vcmp.eq.f32.partialorder %v591, 8.507059e+37
    %v593 = vand.u32 %v581, 2147483648
    %v594 = vor.u32 1.1754944e-38, %v593
    %v595 = vsel %vm592, %v594, %v590
    %v596 = vmul.f32 1.0, %v595
    %597 = vmatpush.msra.mxu0 0.0
    %598 = vmatpush.msra.mxu0 0.0
    %599 = vmatpush.msra.mxu0 0.0
    %600 = vmatpush.msra.mxu0 0.0
    %601 = vmatpush.msra.mxu0 0.0
    %602 = vmatpush.msra.mxu0 0.0
    %603 = vmatpush.msra.mxu0 0.0
    %604 = vmatpush.msra.mxu0 0.0
    %605 = vmatpush.msra.mxu0 %v353
    %606 = vmatpush.msra.mxu0 %v352
    %607 = vmatpush.msra.mxu0 %v351
    %608 = vmatpush.msra.mxu0 %v350
    %609 = vmatpush.msra.mxu0 %v349
    %610 = vmatpush.msra.mxu0 %v348
    %611 = vmatpush.msra.mxu0 %v347
    %612 = vmatpush.msra.mxu0 %v346
    %613 = vmatmul.f32.gmra.mxu0 %v515
    %v614 = vpop.f32.mrf.mxu0
    %v615 = vadd.f32 0.0, %v614
    %616 = vdwg.mxu0
    %v617 = vadd.f32 %v265, %v615
    %v618 = vtanh.pop %v617
    %619 = vmatpush.msra.mxu0 0.0
    %620 = vmatpush.msra.mxu0 0.0
    %621 = vmatpush.msra.mxu0 0.0
    %622 = vmatpush.msra.mxu0 0.0
    %623 = vmatpush.msra.mxu0 0.0
    %624 = vmatpush.msra.mxu0 0.0
    %625 = vmatpush.msra.mxu0 0.0
    %626 = vmatpush.msra.mxu0 0.0
    %627 = vmatpush.msra.mxu0 %v362
    %628 = vmatpush.msra.mxu0 %v361
    %629 = vmatpush.msra.mxu0 %v360
    %630 = vmatpush.msra.mxu0 %v359
    %631 = vmatpush.msra.mxu0 %v358
    %632 = vmatpush.msra.mxu0 %v357
    %633 = vmatpush.msra.mxu0 %v356
    %634 = vmatpush.msra.mxu0 %v355
    %635 = vmatmul.f32.gmra.mxu0 %v515
    %v636 = vpop.f32.mrf.mxu0
    %v637 = vadd.f32 0.0, %v636
    %638 = vdwg.mxu0
    %v639 = vadd.f32 %v321, %v637
    %v640 = vxor.u32 %v639, 2147483648
    %v641 = vmul.f32 %v640, 1.442695
    %v642 = vpow.pop %v641
    %v643 = vadd.f32 %v642, 1.0
    %v644 = vrcp.pop %v643
    %v645 = vmul.f32 %v643, %v644
    %v646 = vsub.f32 1.0, %v645
    %v647 = vmul.f32 %v644, %v646
    %v648 = vadd.f32 %v644, %v647
    %vm649 = vweird.f32 %v643
    %vm650 = vweird.f32 %v644
    %vm651 = vmor %vm649, %vm650
    %v652 = vsel %vm651, %v644, %v648
    %v653 = vand.u32 2147483647, %v643
    %vm654 = vcmp.eq.f32.partialorder %v653, 8.507059e+37
    %v655 = vand.u32 %v643, 2147483648
    %v656 = vor.u32 1.1754944e-38, %v655
    %v657 = vsel %vm654, %v656, %v652
    %v658 = vmul.f32 1.0, %v657
    %v659 = vmul.f32 %v596, %v511
    %v660 = vmul.f32 %v556, %v618
    %v661 = vadd.f32 %v659, %v660
    %v662 = vtanh.pop %v661
    %v663 = vmul.f32 %v658, %v662
    %v665 = vsel %vm363, %v663, 0
    %667 = vmatpush.msra.mxu0 0.0
    %668 = vmatpush.msra.mxu0 0.0
    %669 = vmatpush.msra.mxu0 0.0
    %670 = vmatpush.msra.mxu0 0.0
    %671 = vmatpush.msra.mxu0 0.0
    %672 = vmatpush.msra.mxu0 0.0
    %673 = vmatpush.msra.mxu0 0.0
    %674 = vmatpush.msra.mxu0 0.0
    %675 = vmatpush.msra.mxu0 %v335
    %676 = vmatpush.msra.mxu0 %v334
    %677 = vmatpush.msra.mxu0 %v333
    %678 = vmatpush.msra.mxu0 %v332
    %679 = vmatpush.msra.mxu0 %v331
    %680 = vmatpush.msra.mxu0 %v330
    %681 = vmatpush.msra.mxu0 %v329
    %682 = vmatpush.msra.mxu0 %v328
    %683 = vmatmul.f32.gmra.mxu0 %v665
    %v684 = vpop.f32.mrf.mxu0
    %v685 = vadd.f32 0.0, %v684
    %686 = vdwg.mxu0
    %v687 = vadd.f32 %v154, %v685
    %v688 = vxor.u32 %v687, 2147483648
    %v689 = vmul.f32 %v688, 1.442695
    %v690 = vpow.pop %v689
    %v691 = vadd.f32 %v690, 1.0
    %v692 = vrcp.pop %v691
    %v693 = vmul.f32 %v691, %v692
    %v694 = vsub.f32 1.0, %v693
    %v695 = vmul.f32 %v692, %v694
    %v696 = vadd.f32 %v692, %v695
    %vm697 = vweird.f32 %v691
    %vm698 = vweird.f32 %v692
    %vm699 = vmor %vm697, %vm698
    %v700 = vsel %vm699, %v692, %v696
    %v701 = vand.u32 2147483647, %v691
    %vm702 = vcmp.eq.f32.partialorder %v701, 8.507059e+37
    %v703 = vand.u32 %v691, 2147483648
    %v704 = vor.u32 1.1754944e-38, %v703
    %v705 = vsel %vm702, %v704, %v700
    %v706 = vmul.f32 1.0, %v705
    %707 = vmatpush.msra.mxu0 0.0
    %708 = vmatpush.msra.mxu0 0.0
    %709 = vmatpush.msra.mxu0 0.0
    %710 = vmatpush.msra.mxu0 0.0
    %711 = vmatpush.msra.mxu0 0.0
    %712 = vmatpush.msra.mxu0 0.0
    %713 = vmatpush.msra.mxu0 0.0
    %714 = vmatpush.msra.mxu0 0.0
    %715 = vmatpush.msra.mxu0 %v344
    %716 = vmatpush.msra.mxu0 %v343
    %717 = vmatpush.msra.mxu0 %v342
    %718 = vmatpush.msra.mxu0 %v341
    %719 = vmatpush.msra.mxu0 %v340
    %720 = vmatpush.msra.mxu0 %v339
    %721 = vmatpush.msra.mxu0 %v338
    %722 = vmatpush.msra.mxu0 %v337
    %723 = vmatmul.f32.gmra.mxu0 %v665
    %v724 = vpop.f32.mrf.mxu0
    %v725 = vadd.f32 0.0, %v724
    %726 = vdwg.mxu0
    %v727 = vadd.f32 %v210, %v725
    %v728 = vxor.u32 %v727, 2147483648
    %v729 = vmul.f32 %v728, 1.442695
    %v730 = vpow.pop %v729
    %v731 = vadd.f32 %v730, 1.0
    %v732 = vrcp.pop %v731
    %v733 = vmul.f32 %v731, %v732
    %v734 = vsub.f32 1.0, %v733
    %v735 = vmul.f32 %v732, %v734
    %v736 = vadd.f32 %v732, %v735
    %vm737 = vweird.f32 %v731
    %vm738 = vweird.f32 %v732
    %vm739 = vmor %vm737, %vm738
    %v740 = vsel %vm739, %v732, %v736
    %v741 = vand.u32 2147483647, %v731
    %vm742 = vcmp.eq.f32.partialorder %v741, 8.507059e+37
    %v743 = vand.u32 %v731, 2147483648
    %v744 = vor.u32 1.1754944e-38, %v743
    %v745 = vsel %vm742, %v744, %v740
    %v746 = vmul.f32 1.0, %v745
    %747 = vmatpush.msra.mxu0 0.0
    %748 = vmatpush.msra.mxu0 0.0
    %749 = vmatpush.msra.mxu0 0.0
    %750 = vmatpush.msra.mxu0 0.0
    %751 = vmatpush.msra.mxu0 0.0
    %752 = vmatpush.msra.mxu0 0.0
    %753 = vmatpush.msra.mxu0 0.0
    %754 = vmatpush.msra.mxu0 0.0
    %755 = vmatpush.msra.mxu0 %v353
    %756 = vmatpush.msra.mxu0 %v352
    %757 = vmatpush.msra.mxu0 %v351
    %758 = vmatpush.msra.mxu0 %v350
    %759 = vmatpush.msra.mxu0 %v349
    %760 = vmatpush.msra.mxu0 %v348
    %761 = vmatpush.msra.mxu0 %v347
    %762 = vmatpush.msra.mxu0 %v346
    %763 = vmatmul.f32.gmra.mxu0 %v665
    %v764 = vpop.f32.mrf.mxu0
    %v765 = vadd.f32 0.0, %v764
    %766 = vdwg.mxu0
    %v767 = vadd.f32 %v266, %v765
    %v768 = vtanh.pop %v767
    %769 = vmatpush.msra.mxu0 0.0
    %770 = vmatpush.msra.mxu0 0.0
    %771 = vmatpush.msra.mxu0 0.0
    %772 = vmatpush.msra.mxu0 0.0
    %773 = vmatpush.msra.mxu0 0.0
    %774 = vmatpush.msra.mxu0 0.0
    %775 = vmatpush.msra.mxu0 0.0
    %776 = vmatpush.msra.mxu0 0.0
    %777 = vmatpush.msra.mxu0 %v362
    %778 = vmatpush.msra.mxu0 %v361
    %779 = vmatpush.msra.mxu0 %v360
    %780 = vmatpush.msra.mxu0 %v359
    %781 = vmatpush.msra.mxu0 %v358
    %782 = vmatpush.msra.mxu0 %v357
    %783 = vmatpush.msra.mxu0 %v356
    %784 = vmatpush.msra.mxu0 %v355
    %785 = vmatmul.f32.gmra.mxu0 %v665
    %v786 = vpop.f32.mrf.mxu0
    %v787 = vadd.f32 0.0, %v786
    %788 = vdwg.mxu0
    %v789 = vadd.f32 %v322, %v787
    %v790 = vxor.u32 %v789, 2147483648
    %v791 = vmul.f32 %v790, 1.442695
    %v792 = vpow.pop %v791
    %v793 = vadd.f32 %v792, 1.0
    %v794 = vrcp.pop %v793
    %v795 = vmul.f32 %v793, %v794
    %v796 = vsub.f32 1.0, %v795
    %v797 = vmul.f32 %v794, %v796
    %v798 = vadd.f32 %v794, %v797
    %vm799 = vweird.f32 %v793
    %vm800 = vweird.f32 %v794
    %vm801 = vmor %vm799, %vm800
    %v802 = vsel %vm801, %v794, %v798
    %v803 = vand.u32 2147483647, %v793
    %vm804 = vcmp.eq.f32.partialorder %v803, 8.507059e+37
    %v805 = vand.u32 %v793, 2147483648
    %v806 = vor.u32 1.1754944e-38, %v805
    %v807 = vsel %vm804, %v806, %v802
    %v808 = vmul.f32 1.0, %v807
    %v809 = vmul.f32 %v746, %v661
    %v810 = vmul.f32 %v706, %v768
    %v811 = vadd.f32 %v809, %v810
    %v812 = vtanh.pop %v811
    %v813 = vmul.f32 %v808, %v812
    %v815 = vsel %vm363, %v813, 0
    %817 = vmatpush.msra.mxu0 0.0
    %818 = vmatpush.msra.mxu0 0.0
    %819 = vmatpush.msra.mxu0 0.0
    %820 = vmatpush.msra.mxu0 0.0
    %821 = vmatpush.msra.mxu0 0.0
    %822 = vmatpush.msra.mxu0 0.0
    %823 = vmatpush.msra.mxu0 0.0
    %824 = vmatpush.msra.mxu0 0.0
    %825 = vmatpush.msra.mxu0 %v335
    %826 = vmatpush.msra.mxu0 %v334
    %827 = vmatpush.msra.mxu0 %v333
    %828 = vmatpush.msra.mxu0 %v332
    %829 = vmatpush.msra.mxu0 %v331
    %830 = vmatpush.msra.mxu0 %v330
    %831 = vmatpush.msra.mxu0 %v329
    %832 = vmatpush.msra.mxu0 %v328
    %833 = vmatmul.f32.gmra.mxu0 %v815
    %v834 = vpop.f32.mrf.mxu0
    %v835 = vadd.f32 0.0, %v834
    %836 = vdwg.mxu0
    %v837 = vadd.f32 %v155, %v835
    %v838 = vxor.u32 %v837, 2147483648
    %v839 = vmul.f32 %v838, 1.442695
    %v840 = vpow.pop %v839
    %v841 = vadd.f32 %v840, 1.0
    %v842 = vrcp.pop %v841
    %v843 = vmul.f32 %v841, %v842
    %v844 = vsub.f32 1.0, %v843
    %v845 = vmul.f32 %v842, %v844
    %v846 = vadd.f32 %v842, %v845
    %vm847 = vweird.f32 %v841
    %vm848 = vweird.f32 %v842
    %vm849 = vmor %vm847, %vm848
    %v850 = vsel %vm849, %v842, %v846
    %v851 = vand.u32 2147483647, %v841
    %vm852 = vcmp.eq.f32.partialorder %v851, 8.507059e+37
    %v853 = vand.u32 %v841, 2147483648
    %v854 = vor.u32 1.1754944e-38, %v853
    %v855 = vsel %vm852, %v854, %v850
    %v856 = vmul.f32 1.0, %v855
    %857 = vmatpush.msra.mxu0 0.0
    %858 = vmatpush.msra.mxu0 0.0
    %859 = vmatpush.msra.mxu0 0.0
    %860 = vmatpush.msra.mxu0 0.0
    %861 = vmatpush.msra.mxu0 0.0
    %862 = vmatpush.msra.mxu0 0.0
    %863 = vmatpush.msra.mxu0 0.0
    %864 = vmatpush.msra.mxu0 0.0
    %865 = vmatpush.msra.mxu0 %v344
    %866 = vmatpush.msra.mxu0 %v343
    %867 = vmatpush.msra.mxu0 %v342
    %868 = vmatpush.msra.mxu0 %v341
    %869 = vmatpush.msra.mxu0 %v340
    %870 = vmatpush.msra.mxu0 %v339
    %871 = vmatpush.msra.mxu0 %v338
    %872 = vmatpush.msra.mxu0 %v337
    %873 = vmatmul.f32.gmra.mxu0 %v815
    %v874 = vpop.f32.mrf.mxu0
    %v875 = vadd.f32 0.0, %v874
    %876 = vdwg.mxu0
    %v877 = vadd.f32 %v211, %v875
    %v878 = vxor.u32 %v877, 2147483648
    %v879 = vmul.f32 %v878, 1.442695
    %v880 = vpow.pop %v879
    %v881 = vadd.f32 %v880, 1.0
    %v882 = vrcp.pop %v881
    %v883 = vmul.f32 %v881, %v882
    %v884 = vsub.f32 1.0, %v883
    %v885 = vmul.f32 %v882, %v884
    %v886 = vadd.f32 %v882, %v885
    %vm887 = vweird.f32 %v881
    %vm888 = vweird.f32 %v882
    %vm889 = vmor %vm887, %vm888
    %v890 = vsel %vm889, %v882, %v886
    %v891 = vand.u32 2147483647, %v881
    %vm892 = vcmp.eq.f32.partialorder %v891, 8.507059e+37
    %v893 = vand.u32 %v881, 2147483648
    %v894 = vor.u32 1.1754944e-38, %v893
    %v895 = vsel %vm892, %v894, %v890
    %v896 = vmul.f32 1.0, %v895
    %897 = vmatpush.msra.mxu0 0.0
    %898 = vmatpush.msra.mxu0 0.0
    %899 = vmatpush.msra.mxu0 0.0
    %900 = vmatpush.msra.mxu0 0.0
    %901 = vmatpush.msra.mxu0 0.0
    %902 = vmatpush.msra.mxu0 0.0
    %903 = vmatpush.msra.mxu0 0.0
    %904 = vmatpush.msra.mxu0 0.0
    %905 = vmatpush.msra.mxu0 %v353
    %906 = vmatpush.msra.mxu0 %v352
    %907 = vmatpush.msra.mxu0 %v351
    %908 = vmatpush.msra.mxu0 %v350
    %909 = vmatpush.msra.mxu0 %v349
    %910 = vmatpush.msra.mxu0 %v348
    %911 = vmatpush.msra.mxu0 %v347
    %912 = vmatpush.msra.mxu0 %v346
    %913 = vmatmul.f32.gmra.mxu0 %v815
    %v914 = vpop.f32.mrf.mxu0
    %v915 = vadd.f32 0.0, %v914
    %916 = vdwg.mxu0
    %v917 = vadd.f32 %v267, %v915
    %v918 = vtanh.pop %v917
    %919 = vmatpush.msra.mxu0 0.0
    %920 = vmatpush.msra.mxu0 0.0
    %921 = vmatpush.msra.mxu0 0.0
    %922 = vmatpush.msra.mxu0 0.0
    %923 = vmatpush.msra.mxu0 0.0
    %924 = vmatpush.msra.mxu0 0.0
    %925 = vmatpush.msra.mxu0 0.0
    %926 = vmatpush.msra.mxu0 0.0
    %927 = vmatpush.msra.mxu0 %v362
    %928 = vmatpush.msra.mxu0 %v361
    %929 = vmatpush.msra.mxu0 %v360
    %930 = vmatpush.msra.mxu0 %v359
    %931 = vmatpush.msra.mxu0 %v358
    %932 = vmatpush.msra.mxu0 %v357
    %933 = vmatpush.msra.mxu0 %v356
    %934 = vmatpush.msra.mxu0 %v355
    %935 = vmatmul.f32.gmra.mxu0 %v815
    %v936 = vpop.f32.mrf.mxu0
    %v937 = vadd.f32 0.0, %v936
    %938 = vdwg.mxu0
    %v939 = vadd.f32 %v323, %v937
    %v940 = vxor.u32 %v939, 2147483648
    %v941 = vmul.f32 %v940, 1.442695
    %v942 = vpow.pop %v941
    %v943 = vadd.f32 %v942, 1.0
    %v944 = vrcp.pop %v943
    %v945 = vmul.f32 %v943, %v944
    %v946 = vsub.f32 1.0, %v945
    %v947 = vmul.f32 %v944, %v946
    %v948 = vadd.f32 %v944, %v947
    %vm949 = vweird.f32 %v943
    %vm950 = vweird.f32 %v944
    %vm951 = vmor %vm949, %vm950
    %v952 = vsel %vm951, %v944, %v948
    %v953 = vand.u32 2147483647, %v943
    %vm954 = vcmp.eq.f32.partialorder %v953, 8.507059e+37
    %v955 = vand.u32 %v943, 2147483648
    %v956 = vor.u32 1.1754944e-38, %v955
    %v957 = vsel %vm954, %v956, %v952
    %v958 = vmul.f32 1.0, %v957
    %v959 = vmul.f32 %v896, %v811
    %v960 = vmul.f32 %v856, %v918
    %v961 = vadd.f32 %v959, %v960
    %v962 = vtanh.pop %v961
    %v963 = vmul.f32 %v958, %v962
    %v965 = vsel %vm363, %v963, 0
    %967 = vmatpush.msra.mxu0 0.0
    %968 = vmatpush.msra.mxu0 0.0
    %969 = vmatpush.msra.mxu0 0.0
    %970 = vmatpush.msra.mxu0 0.0
    %971 = vmatpush.msra.mxu0 0.0
    %972 = vmatpush.msra.mxu0 0.0
    %973 = vmatpush.msra.mxu0 0.0
    %974 = vmatpush.msra.mxu0 0.0
    %975 = vmatpush.msra.mxu0 %v335
    %976 = vmatpush.msra.mxu0 %v334
    %977 = vmatpush.msra.mxu0 %v333
    %978 = vmatpush.msra.mxu0 %v332
    %979 = vmatpush.msra.mxu0 %v331
    %980 = vmatpush.msra.mxu0 %v330
    %981 = vmatpush.msra.mxu0 %v329
    %982 = vmatpush.msra.mxu0 %v328
    %983 = vmatmul.f32.gmra.mxu0 %v965
    %v984 = vpop.f32.mrf.mxu0
    %v985 = vadd.f32 0.0, %v984
    %986 = vdwg.mxu0
    %v987 = vadd.f32 %v156, %v985
    %v988 = vxor.u32 %v987, 2147483648
    %v989 = vmul.f32 %v988, 1.442695
    %v990 = vpow.pop %v989
    %v991 = vadd.f32 %v990, 1.0
    %v992 = vrcp.pop %v991
    %v993 = vmul.f32 %v991, %v992
    %v994 = vsub.f32 1.0, %v993
    %v995 = vmul.f32 %v992, %v994
    %v996 = vadd.f32 %v992, %v995
    %vm997 = vweird.f32 %v991
    %vm998 = vweird.f32 %v992
    %vm999 = vmor %vm997, %vm998
    %v1000 = vsel %vm999, %v992, %v996
    %v1001 = vand.u32 2147483647, %v991
    %vm1002 = vcmp.eq.f32.partialorder %v1001, 8.507059e+37
    %v1003 = vand.u32 %v991, 2147483648
    %v1004 = vor.u32 1.1754944e-38, %v1003
    %v1005 = vsel %vm1002, %v1004, %v1000
    %v1006 = vmul.f32 1.0, %v1005
    %1007 = vmatpush.msra.mxu0 0.0
    %1008 = vmatpush.msra.mxu0 0.0
    %1009 = vmatpush.msra.mxu0 0.0
    %1010 = vmatpush.msra.mxu0 0.0
    %1011 = vmatpush.msra.mxu0 0.0
    %1012 = vmatpush.msra.mxu0 0.0
    %1013 = vmatpush.msra.mxu0 0.0
    %1014 = vmatpush.msra.mxu0 0.0
    %1015 = vmatpush.msra.mxu0 %v344
    %1016 = vmatpush.msra.mxu0 %v343
    %1017 = vmatpush.msra.mxu0 %v342
    %1018 = vmatpush.msra.mxu0 %v341
    %1019 = vmatpush.msra.mxu0 %v340
    %1020 = vmatpush.msra.mxu0 %v339
    %1021 = vmatpush.msra.mxu0 %v338
    %1022 = vmatpush.msra.mxu0 %v337
    %1023 = vmatmul.f32.gmra.mxu0 %v965
    %v1024 = vpop.f32.mrf.mxu0
    %v1025 = vadd.f32 0.0, %v1024
    %1026 = vdwg.mxu0
    %v1027 = vadd.f32 %v212, %v1025
    %v1028 = vxor.u32 %v1027, 2147483648
    %v1029 = vmul.f32 %v1028, 1.442695
    %v1030 = vpow.pop %v1029
    %v1031 = vadd.f32 %v1030, 1.0
    %v1032 = vrcp.pop %v1031
    %v1033 = vmul.f32 %v1031, %v1032
    %v1034 = vsub.f32 1.0, %v1033
    %v1035 = vmul.f32 %v1032, %v1034
    %v1036 = vadd.f32 %v1032, %v1035
    %vm1037 = vweird.f32 %v1031
    %vm1038 = vweird.f32 %v1032
    %vm1039 = vmor %vm1037, %vm1038
    %v1040 = vsel %vm1039, %v1032, %v1036
    %v1041 = vand.u32 2147483647, %v1031
    %vm1042 = vcmp.eq.f32.partialorder %v1041, 8.507059e+37
    %v1043 = vand.u32 %v1031, 2147483648
    %v1044 = vor.u32 1.1754944e-38, %v1043
    %v1045 = vsel %vm1042, %v1044, %v1040
    %v1046 = vmul.f32 1.0, %v1045
    %1047 = vmatpush.msra.mxu0 0.0
    %1048 = vmatpush.msra.mxu0 0.0
    %1049 = vmatpush.msra.mxu0 0.0
    %1050 = vmatpush.msra.mxu0 0.0
    %1051 = vmatpush.msra.mxu0 0.0
    %1052 = vmatpush.msra.mxu0 0.0
    %1053 = vmatpush.msra.mxu0 0.0
    %1054 = vmatpush.msra.mxu0 0.0
    %1055 = vmatpush.msra.mxu0 %v353
    %1056 = vmatpush.msra.mxu0 %v352
    %1057 = vmatpush.msra.mxu0 %v351
    %1058 = vmatpush.msra.mxu0 %v350
    %1059 = vmatpush.msra.mxu0 %v349
    %1060 = vmatpush.msra.mxu0 %v348
    %1061 = vmatpush.msra.mxu0 %v347
    %1062 = vmatpush.msra.mxu0 %v346
    %1063 = vmatmul.f32.gmra.mxu0 %v965
    %v1064 = vpop.f32.mrf.mxu0
    %v1065 = vadd.f32 0.0, %v1064
    %1066 = vdwg.mxu0
    %v1067 = vadd.f32 %v268, %v1065
    %v1068 = vtanh.pop %v1067
    %1069 = vmatpush.msra.mxu0 0.0
    %1070 = vmatpush.msra.mxu0 0.0
    %1071 = vmatpush.msra.mxu0 0.0
    %1072 = vmatpush.msra.mxu0 0.0
    %1073 = vmatpush.msra.mxu0 0.0
    %1074 = vmatpush.msra.mxu0 0.0
    %1075 = vmatpush.msra.mxu0 0.0
    %1076 = vmatpush.msra.mxu0 0.0
    %1077 = vmatpush.msra.mxu0 %v362
    %1078 = vmatpush.msra.mxu0 %v361
    %1079 = vmatpush.msra.mxu0 %v360
    %1080 = vmatpush.msra.mxu0 %v359
    %1081 = vmatpush.msra.mxu0 %v358
    %1082 = vmatpush.msra.mxu0 %v357
    %1083 = vmatpush.msra.mxu0 %v356
    %1084 = vmatpush.msra.mxu0 %v355
    %1085 = vmatmul.f32.gmra.mxu0 %v965
    %v1086 = vpop.f32.mrf.mxu0
    %v1087 = vadd.f32 0.0, %v1086
    %1088 = vdwg.mxu0
    %v1089 = vadd.f32 %v324, %v1087
    %v1090 = vxor.u32 %v1089, 2147483648
    %v1091 = vmul.f32 %v1090, 1.442695
    %v1092 = vpow.pop %v1091
    %v1093 = vadd.f32 %v1092, 1.0
    %v1094 = vrcp.pop %v1093
    %v1095 = vmul.f32 %v1093, %v1094
    %v1096 = vsub.f32 1.0, %v1095
    %v1097 = vmul.f32 %v1094, %v1096
    %v1098 = vadd.f32 %v1094, %v1097
    %vm1099 = vweird.f32 %v1093
    %vm1100 = vweird.f32 %v1094
    %vm1101 = vmor %vm1099, %vm1100
    %v1102 = vsel %vm1101, %v1094, %v1098
    %v1103 = vand.u32 2147483647, %v1093
    %vm1104 = vcmp.eq.f32.partialorder %v1103, 8.507059e+37
    %v1105 = vand.u32 %v1093, 2147483648
    %v1106 = vor.u32 1.1754944e-38, %v1105
    %v1107 = vsel %vm1104, %v1106, %v1102
    %v1108 = vmul.f32 1.0, %v1107
    %v1109 = vmul.f32 %v1046, %v961
    %v1110 = vmul.f32 %v1006, %v1068
    %v1111 = vadd.f32 %v1109, %v1110
    %v1112 = vtanh.pop %v1111
    %v1113 = vmul.f32 %v1108, %v1112
    %v1115 = vsel %vm363, %v1113, 0
    %1117 = vmatpush.msra.mxu0 0.0
    %1118 = vmatpush.msra.mxu0 0.0
    %1119 = vmatpush.msra.mxu0 0.0
    %1120 = vmatpush.msra.mxu0 0.0
    %1121 = vmatpush.msra.mxu0 0.0
    %1122 = vmatpush.msra.mxu0 0.0
    %1123 = vmatpush.msra.mxu0 0.0
    %1124 = vmatpush.msra.mxu0 0.0
    %1125 = vmatpush.msra.mxu0 %v335
    %1126 = vmatpush.msra.mxu0 %v334
    %1127 = vmatpush.msra.mxu0 %v333
    %1128 = vmatpush.msra.mxu0 %v332
    %1129 = vmatpush.msra.mxu0 %v331
    %1130 = vmatpush.msra.mxu0 %v330
    %1131 = vmatpush.msra.mxu0 %v329
    %1132 = vmatpush.msra.mxu0 %v328
    %1133 = vmatmul.f32.gmra.mxu0 %v1115
    %v1134 = vpop.f32.mrf.mxu0
    %v1135 = vadd.f32 0.0, %v1134
    %1136 = vdwg.mxu0
    %v1137 = vadd.f32 %v157, %v1135
    %v1138 = vxor.u32 %v1137, 2147483648
    %v1139 = vmul.f32 %v1138, 1.442695
    %v1140 = vpow.pop %v1139
    %v1141 = vadd.f32 %v1140, 1.0
    %v1142 = vrcp.pop %v1141
    %v1143 = vmul.f32 %v1141, %v1142
    %v1144 = vsub.f32 1.0, %v1143
    %v1145 = vmul.f32 %v1142, %v1144
    %v1146 = vadd.f32 %v1142, %v1145
    %vm1147 = vweird.f32 %v1141
    %vm1148 = vweird.f32 %v1142
    %vm1149 = vmor %vm1147, %vm1148
    %v1150 = vsel %vm1149, %v1142, %v1146
    %v1151 = vand.u32 2147483647, %v1141
    %vm1152 = vcmp.eq.f32.partialorder %v1151, 8.507059e+37
    %v1153 = vand.u32 %v1141, 2147483648
    %v1154 = vor.u32 1.1754944e-38, %v1153
    %v1155 = vsel %vm1152, %v1154, %v1150
    %v1156 = vmul.f32 1.0, %v1155
    %1157 = vmatpush.msra.mxu0 0.0
    %1158 = vmatpush.msra.mxu0 0.0
    %1159 = vmatpush.msra.mxu0 0.0
    %1160 = vmatpush.msra.mxu0 0.0
    %1161 = vmatpush.msra.mxu0 0.0
    %1162 = vmatpush.msra.mxu0 0.0
    %1163 = vmatpush.msra.mxu0 0.0
    %1164 = vmatpush.msra.mxu0 0.0
    %1165 = vmatpush.msra.mxu0 %v344
    %1166 = vmatpush.msra.mxu0 %v343
    %1167 = vmatpush.msra.mxu0 %v342
    %1168 = vmatpush.msra.mxu0 %v341
    %1169 = vmatpush.msra.mxu0 %v340
    %1170 = vmatpush.msra.mxu0 %v339
    %1171 = vmatpush.msra.mxu0 %v338
    %1172 = vmatpush.msra.mxu0 %v337
    %1173 = vmatmul.f32.gmra.mxu0 %v1115
    %v1174 = vpop.f32.mrf.mxu0
    %v1175 = vadd.f32 0.0, %v1174
    %1176 = vdwg.mxu0
    %v1177 = vadd.f32 %v213, %v1175
    %v1178 = vxor.u32 %v1177, 2147483648
    %v1179 = vmul.f32 %v1178, 1.442695
    %v1180 = vpow.pop %v1179
    %v1181 = vadd.f32 %v1180, 1.0
    %v1182 = vrcp.pop %v1181
    %v1183 = vmul.f32 %v1181, %v1182
    %v1184 = vsub.f32 1.0, %v1183
    %v1185 = vmul.f32 %v1182, %v1184
    %v1186 = vadd.f32 %v1182, %v1185
    %vm1187 = vweird.f32 %v1181
    %vm1188 = vweird.f32 %v1182
    %vm1189 = vmor %vm1187, %vm1188
    %v1190 = vsel %vm1189, %v1182, %v1186
    %v1191 = vand.u32 2147483647, %v1181
    %vm1192 = vcmp.eq.f32.partialorder %v1191, 8.507059e+37
    %v1193 = vand.u32 %v1181, 2147483648
    %v1194 = vor.u32 1.1754944e-38, %v1193
    %v1195 = vsel %vm1192, %v1194, %v1190
    %v1196 = vmul.f32 1.0, %v1195
    %1197 = vmatpush.msra.mxu0 0.0
    %1198 = vmatpush.msra.mxu0 0.0
    %1199 = vmatpush.msra.mxu0 0.0
    %1200 = vmatpush.msra.mxu0 0.0
    %1201 = vmatpush.msra.mxu0 0.0
    %1202 = vmatpush.msra.mxu0 0.0
    %1203 = vmatpush.msra.mxu0 0.0
    %1204 = vmatpush.msra.mxu0 0.0
    %1205 = vmatpush.msra.mxu0 %v353
    %1206 = vmatpush.msra.mxu0 %v352
    %1207 = vmatpush.msra.mxu0 %v351
    %1208 = vmatpush.msra.mxu0 %v350
    %1209 = vmatpush.msra.mxu0 %v349
    %1210 = vmatpush.msra.mxu0 %v348
    %1211 = vmatpush.msra.mxu0 %v347
    %1212 = vmatpush.msra.mxu0 %v346
    %1213 = vmatmul.f32.gmra.mxu0 %v1115
    %v1214 = vpop.f32.mrf.mxu0
    %v1215 = vadd.f32 0.0, %v1214
    %1216 = vdwg.mxu0
    %v1217 = vadd.f32 %v269, %v1215
    %v1218 = vtanh.pop %v1217
    %1219 = vmatpush.msra.mxu0 0.0
    %1220 = vmatpush.msra.mxu0 0.0
    %1221 = vmatpush.msra.mxu0 0.0
    %1222 = vmatpush.msra.mxu0 0.0
    %1223 = vmatpush.msra.mxu0 0.0
    %1224 = vmatpush.msra.mxu0 0.0
    %1225 = vmatpush.msra.mxu0 0.0
    %1226 = vmatpush.msra.mxu0 0.0
    %1227 = vmatpush.msra.mxu0 %v362
    %1228 = vmatpush.msra.mxu0 %v361
    %1229 = vmatpush.msra.mxu0 %v360
    %1230 = vmatpush.msra.mxu0 %v359
    %1231 = vmatpush.msra.mxu0 %v358
    %1232 = vmatpush.msra.mxu0 %v357
    %1233 = vmatpush.msra.mxu0 %v356
    %1234 = vmatpush.msra.mxu0 %v355
    %1235 = vmatmul.f32.gmra.mxu0 %v1115
    %v1236 = vpop.f32.mrf.mxu0
    %v1237 = vadd.f32 0.0, %v1236
    %1238 = vdwg.mxu0
    %v1239 = vadd.f32 %v325, %v1237
    %v1240 = vxor.u32 %v1239, 2147483648
    %v1241 = vmul.f32 %v1240, 1.442695
    %v1242 = vpow.pop %v1241
    %v1243 = vadd.f32 %v1242, 1.0
    %v1244 = vrcp.pop %v1243
    %v1245 = vmul.f32 %v1243, %v1244
    %v1246 = vsub.f32 1.0, %v1245
    %v1247 = vmul.f32 %v1244, %v1246
    %v1248 = vadd.f32 %v1244, %v1247
    %vm1249 = vweird.f32 %v1243
    %vm1250 = vweird.f32 %v1244
    %vm1251 = vmor %vm1249, %vm1250
    %v1252 = vsel %vm1251, %v1244, %v1248
    %v1253 = vand.u32 2147483647, %v1243
    %vm1254 = vcmp.eq.f32.partialorder %v1253, 8.507059e+37
    %v1255 = vand.u32 %v1243, 2147483648
    %v1256 = vor.u32 1.1754944e-38, %v1255
    %v1257 = vsel %vm1254, %v1256, %v1252
    %v1258 = vmul.f32 1.0, %v1257
    %v1259 = vmul.f32 %v1196, %v1111
    %v1260 = vmul.f32 %v1156, %v1218
    %v1261 = vadd.f32 %v1259, %v1260
    %v1262 = vtanh.pop %v1261
    %v1263 = vmul.f32 %v1258, %v1262
    %v1265 = vsel %vm363, %v1263, 0
    %1267 = vmatpush.msra.mxu0 0.0
    %1268 = vmatpush.msra.mxu0 0.0
    %1269 = vmatpush.msra.mxu0 0.0
    %1270 = vmatpush.msra.mxu0 0.0
    %1271 = vmatpush.msra.mxu0 0.0
    %1272 = vmatpush.msra.mxu0 0.0
    %1273 = vmatpush.msra.mxu0 0.0
    %1274 = vmatpush.msra.mxu0 0.0
    %1275 = vmatpush.msra.mxu0 %v335
    %1276 = vmatpush.msra.mxu0 %v334
    %1277 = vmatpush.msra.mxu0 %v333
    %1278 = vmatpush.msra.mxu0 %v332
    %1279 = vmatpush.msra.mxu0 %v331
    %1280 = vmatpush.msra.mxu0 %v330
    %1281 = vmatpush.msra.mxu0 %v329
    %1282 = vmatpush.msra.mxu0 %v328
    %1283 = vmatmul.f32.gmra.mxu0 %v1265
    %v1284 = vpop.f32.mrf.mxu0
    %v1285 = vadd.f32 0.0, %v1284
    %1286 = vdwg.mxu0
    %v1287 = vadd.f32 %v158, %v1285
    %v1288 = vxor.u32 %v1287, 2147483648
    %v1289 = vmul.f32 %v1288, 1.442695
    %v1290 = vpow.pop %v1289
    %v1291 = vadd.f32 %v1290, 1.0
    %v1292 = vrcp.pop %v1291
    %v1293 = vmul.f32 %v1291, %v1292
    %v1294 = vsub.f32 1.0, %v1293
    %v1295 = vmul.f32 %v1292, %v1294
    %v1296 = vadd.f32 %v1292, %v1295
    %vm1297 = vweird.f32 %v1291
    %vm1298 = vweird.f32 %v1292
    %vm1299 = vmor %vm1297, %vm1298
    %v1300 = vsel %vm1299, %v1292, %v1296
    %v1301 = vand.u32 2147483647, %v1291
    %vm1302 = vcmp.eq.f32.partialorder %v1301, 8.507059e+37
    %v1303 = vand.u32 %v1291, 2147483648
    %v1304 = vor.u32 1.1754944e-38, %v1303
    %v1305 = vsel %vm1302, %v1304, %v1300
    %v1306 = vmul.f32 1.0, %v1305
    %1307 = vmatpush.msra.mxu0 0.0
    %1308 = vmatpush.msra.mxu0 0.0
    %1309 = vmatpush.msra.mxu0 0.0
    %1310 = vmatpush.msra.mxu0 0.0
    %1311 = vmatpush.msra.mxu0 0.0
    %1312 = vmatpush.msra.mxu0 0.0
    %1313 = vmatpush.msra.mxu0 0.0
    %1314 = vmatpush.msra.mxu0 0.0
    %1315 = vmatpush.msra.mxu0 %v344
    %1316 = vmatpush.msra.mxu0 %v343
    %1317 = vmatpush.msra.mxu0 %v342
    %1318 = vmatpush.msra.mxu0 %v341
    %1319 = vmatpush.msra.mxu0 %v340
    %1320 = vmatpush.msra.mxu0 %v339
    %1321 = vmatpush.msra.mxu0 %v338
    %1322 = vmatpush.msra.mxu0 %v337
    %1323 = vmatmul.f32.gmra.mxu0 %v1265
    %v1324 = vpop.f32.mrf.mxu0
    %v1325 = vadd.f32 0.0, %v1324
    %1326 = vdwg.mxu0
    %v1327 = vadd.f32 %v214, %v1325
    %v1328 = vxor.u32 %v1327, 2147483648
    %v1329 = vmul.f32 %v1328, 1.442695
    %v1330 = vpow.pop %v1329
    %v1331 = vadd.f32 %v1330, 1.0
    %v1332 = vrcp.pop %v1331
    %v1333 = vmul.f32 %v1331, %v1332
    %v1334 = vsub.f32 1.0, %v1333
    %v1335 = vmul.f32 %v1332, %v1334
    %v1336 = vadd.f32 %v1332, %v1335
    %vm1337 = vweird.f32 %v1331
    %vm1338 = vweird.f32 %v1332
    %vm1339 = vmor %vm1337, %vm1338
    %v1340 = vsel %vm1339, %v1332, %v1336
    %v1341 = vand.u32 2147483647, %v1331
    %vm1342 = vcmp.eq.f32.partialorder %v1341, 8.507059e+37
    %v1343 = vand.u32 %v1331, 2147483648
    %v1344 = vor.u32 1.1754944e-38, %v1343
    %v1345 = vsel %vm1342, %v1344, %v1340
    %v1346 = vmul.f32 1.0, %v1345
    %1347 = vmatpush.msra.mxu0 0.0
    %1348 = vmatpush.msra.mxu0 0.0
    %1349 = vmatpush.msra.mxu0 0.0
    %1350 = vmatpush.msra.mxu0 0.0
    %1351 = vmatpush.msra.mxu0 0.0
    %1352 = vmatpush.msra.mxu0 0.0
    %1353 = vmatpush.msra.mxu0 0.0
    %1354 = vmatpush.msra.mxu0 0.0
    %1355 = vmatpush.msra.mxu0 %v353
    %1356 = vmatpush.msra.mxu0 %v352
    %1357 = vmatpush.msra.mxu0 %v351
    %1358 = vmatpush.msra.mxu0 %v350
    %1359 = vmatpush.msra.mxu0 %v349
    %1360 = vmatpush.msra.mxu0 %v348
    %1361 = vmatpush.msra.mxu0 %v347
    %1362 = vmatpush.msra.mxu0 %v346
    %1363 = vmatmul.f32.gmra.mxu0 %v1265
    %v1364 = vpop.f32.mrf.mxu0
    %v1365 = vadd.f32 0.0, %v1364
    %1366 = vdwg.mxu0
    %v1367 = vadd.f32 %v270, %v1365
    %v1368 = vtanh.pop %v1367
    %1369 = vmatpush.msra.mxu0 0.0
    %1370 = vmatpush.msra.mxu0 0.0
    %1371 = vmatpush.msra.mxu0 0.0
    %1372 = vmatpush.msra.mxu0 0.0
    %1373 = vmatpush.msra.mxu0 0.0
    %1374 = vmatpush.msra.mxu0 0.0
    %1375 = vmatpush.msra.mxu0 0.0
    %1376 = vmatpush.msra.mxu0 0.0
    %1377 = vmatpush.msra.mxu0 %v362
    %1378 = vmatpush.msra.mxu0 %v361
    %1379 = vmatpush.msra.mxu0 %v360
    %1380 = vmatpush.msra.mxu0 %v359
    %1381 = vmatpush.msra.mxu0 %v358
    %1382 = vmatpush.msra.mxu0 %v357
    %1383 = vmatpush.msra.mxu0 %v356
    %1384 = vmatpush.msra.mxu0 %v355
    %1385 = vmatmul.f32.gmra.mxu0 %v1265
    %v1386 = vpop.f32.mrf.mxu0
    %v1387 = vadd.f32 0.0, %v1386
    %1388 = vdwg.mxu0
    %v1389 = vadd.f32 %v326, %v1387
    %v1390 = vxor.u32 %v1389, 2147483648
    %v1391 = vmul.f32 %v1390, 1.442695
    %v1392 = vpow.pop %v1391
    %v1393 = vadd.f32 %v1392, 1.0
    %v1394 = vrcp.pop %v1393
    %v1395 = vmul.f32 %v1393, %v1394
    %v1396 = vsub.f32 1.0, %v1395
    %v1397 = vmul.f32 %v1394, %v1396
    %v1398 = vadd.f32 %v1394, %v1397
    %vm1399 = vweird.f32 %v1393
    %vm1400 = vweird.f32 %v1394
    %vm1401 = vmor %vm1399, %vm1400
    %v1402 = vsel %vm1401, %v1394, %v1398
    %v1403 = vand.u32 2147483647, %v1393
    %vm1404 = vcmp.eq.f32.partialorder %v1403, 8.507059e+37
    %v1405 = vand.u32 %v1393, 2147483648
    %v1406 = vor.u32 1.1754944e-38, %v1405
    %v1407 = vsel %vm1404, %v1406, %v1402
    %v1408 = vmul.f32 1.0, %v1407
    %v1409 = vmul.f32 %v1346, %v1261
    %v1410 = vmul.f32 %v1306, %v1368
    %v1411 = vadd.f32 %v1409, %v1410
    %v1412 = vtanh.pop %v1411
    %v1413 = vmul.f32 %v1408, %v1412
    %v1415 = vsel %vm363, %v1413, 0
    %1417 = vmatpush.msra.mxu0 0.0
    %1418 = vmatpush.msra.mxu0 0.0
    %1419 = vmatpush.msra.mxu0 0.0
    %1420 = vmatpush.msra.mxu0 0.0
    %1421 = vmatpush.msra.mxu0 0.0
    %1422 = vmatpush.msra.mxu0 0.0
    %1423 = vmatpush.msra.mxu0 0.0
    %1424 = vmatpush.msra.mxu0 0.0
    %1425 = vmatpush.msra.mxu0 %v335
    %1426 = vmatpush.msra.mxu0 %v334
    %1427 = vmatpush.msra.mxu0 %v333
    %1428 = vmatpush.msra.mxu0 %v332
    %1429 = vmatpush.msra.mxu0 %v331
    %1430 = vmatpush.msra.mxu0 %v330
    %1431 = vmatpush.msra.mxu0 %v329
    %1432 = vmatpush.msra.mxu0 %v328
    %1433 = vmatmul.f32.gmra.mxu0 %v1415
    %v1434 = vpop.f32.mrf.mxu0
    %v1435 = vadd.f32 0.0, %v1434
    %1436 = vdwg.mxu0
    %v1437 = vadd.f32 %v159, %v1435
    %v1438 = vxor.u32 %v1437, 2147483648
    %v1439 = vmul.f32 %v1438, 1.442695
    %v1440 = vpow.pop %v1439
    %v1441 = vadd.f32 %v1440, 1.0
    %v1442 = vrcp.pop %v1441
    %v1443 = vmul.f32 %v1441, %v1442
    %v1444 = vsub.f32 1.0, %v1443
    %v1445 = vmul.f32 %v1442, %v1444
    %v1446 = vadd.f32 %v1442, %v1445
    %vm1447 = vweird.f32 %v1441
    %vm1448 = vweird.f32 %v1442
    %vm1449 = vmor %vm1447, %vm1448
    %v1450 = vsel %vm1449, %v1442, %v1446
    %v1451 = vand.u32 2147483647, %v1441
    %vm1452 = vcmp.eq.f32.partialorder %v1451, 8.507059e+37
    %v1453 = vand.u32 %v1441, 2147483648
    %v1454 = vor.u32 1.1754944e-38, %v1453
    %v1455 = vsel %vm1452, %v1454, %v1450
    %v1456 = vmul.f32 1.0, %v1455
    %1457 = vmatpush.msra.mxu0 0.0
    %1458 = vmatpush.msra.mxu0 0.0
    %1459 = vmatpush.msra.mxu0 0.0
    %1460 = vmatpush.msra.mxu0 0.0
    %1461 = vmatpush.msra.mxu0 0.0
    %1462 = vmatpush.msra.mxu0 0.0
    %1463 = vmatpush.msra.mxu0 0.0
    %1464 = vmatpush.msra.mxu0 0.0
    %1465 = vmatpush.msra.mxu0 %v344
    %1466 = vmatpush.msra.mxu0 %v343
    %1467 = vmatpush.msra.mxu0 %v342
    %1468 = vmatpush.msra.mxu0 %v341
    %1469 = vmatpush.msra.mxu0 %v340
    %1470 = vmatpush.msra.mxu0 %v339
    %1471 = vmatpush.msra.mxu0 %v338
    %1472 = vmatpush.msra.mxu0 %v337
    %1473 = vmatmul.f32.gmra.mxu0 %v1415
    %v1474 = vpop.f32.mrf.mxu0
    %v1475 = vadd.f32 0.0, %v1474
    %1476 = vdwg.mxu0
    %v1477 = vadd.f32 %v215, %v1475
    %v1478 = vxor.u32 %v1477, 2147483648
    %v1479 = vmul.f32 %v1478, 1.442695
    %v1480 = vpow.pop %v1479
    %v1481 = vadd.f32 %v1480, 1.0
    %v1482 = vrcp.pop %v1481
    %v1483 = vmul.f32 %v1481, %v1482
    %v1484 = vsub.f32 1.0, %v1483
    %v1485 = vmul.f32 %v1482, %v1484
    %v1486 = vadd.f32 %v1482, %v1485
    %vm1487 = vweird.f32 %v1481
    %vm1488 = vweird.f32 %v1482
    %vm1489 = vmor %vm1487, %vm1488
    %v1490 = vsel %vm1489, %v1482, %v1486
    %v1491 = vand.u32 2147483647, %v1481
    %vm1492 = vcmp.eq.f32.partialorder %v1491, 8.507059e+37
    %v1493 = vand.u32 %v1481, 2147483648
    %v1494 = vor.u32 1.1754944e-38, %v1493
    %v1495 = vsel %vm1492, %v1494, %v1490
    %v1496 = vmul.f32 1.0, %v1495
    %1497 = vmatpush.msra.mxu0 0.0
    %1498 = vmatpush.msra.mxu0 0.0
    %1499 = vmatpush.msra.mxu0 0.0
    %1500 = vmatpush.msra.mxu0 0.0
    %1501 = vmatpush.msra.mxu0 0.0
    %1502 = vmatpush.msra.mxu0 0.0
    %1503 = vmatpush.msra.mxu0 0.0
    %1504 = vmatpush.msra.mxu0 0.0
    %1505 = vmatpush.msra.mxu0 %v353
    %1506 = vmatpush.msra.mxu0 %v352
    %1507 = vmatpush.msra.mxu0 %v351
    %1508 = vmatpush.msra.mxu0 %v350
    %1509 = vmatpush.msra.mxu0 %v349
    %1510 = vmatpush.msra.mxu0 %v348
    %1511 = vmatpush.msra.mxu0 %v347
    %1512 = vmatpush.msra.mxu0 %v346
    %1513 = vmatmul.f32.gmra.mxu0 %v1415
    %v1514 = vpop.f32.mrf.mxu0
    %v1515 = vadd.f32 0.0, %v1514
    %1516 = vdwg.mxu0
    %v1517 = vadd.f32 %v271, %v1515
    %v1518 = vtanh.pop %v1517
    %1519 = vmatpush.msra.mxu0 0.0
    %1520 = vmatpush.msra.mxu0 0.0
    %1521 = vmatpush.msra.mxu0 0.0
    %1522 = vmatpush.msra.mxu0 0.0
    %1523 = vmatpush.msra.mxu0 0.0
    %1524 = vmatpush.msra.mxu0 0.0
    %1525 = vmatpush.msra.mxu0 0.0
    %1526 = vmatpush.msra.mxu0 0.0
    %1527 = vmatpush.msra.mxu0 %v362
    %1528 = vmatpush.msra.mxu0 %v361
    %1529 = vmatpush.msra.mxu0 %v360
    %1530 = vmatpush.msra.mxu0 %v359
    %1531 = vmatpush.msra.mxu0 %v358
    %1532 = vmatpush.msra.mxu0 %v357
    %1533 = vmatpush.msra.mxu0 %v356
    %1534 = vmatpush.msra.mxu0 %v355
    %1535 = vmatmul.f32.gmra.mxu0 %v1415
    %v1536 = vpop.f32.mrf.mxu0
    %v1537 = vadd.f32 0.0, %v1536
    %1538 = vdwg.mxu0
    %v1539 = vadd.f32 %v327, %v1537
    %v1540 = vxor.u32 %v1539, 2147483648
    %v1541 = vmul.f32 %v1540, 1.442695
    %v1542 = vpow.pop %v1541
    %v1543 = vadd.f32 %v1542, 1.0
    %v1544 = vrcp.pop %v1543
    %v1545 = vmul.f32 %v1543, %v1544
    %v1546 = vsub.f32 1.0, %v1545
    %v1547 = vmul.f32 %v1544, %v1546
    %v1548 = vadd.f32 %v1544, %v1547
    %vm1549 = vweird.f32 %v1543
    %vm1550 = vweird.f32 %v1544
    %vm1551 = vmor %vm1549, %vm1550
    %v1552 = vsel %vm1551, %v1544, %v1548
    %v1553 = vand.u32 2147483647, %v1543
    %vm1554 = vcmp.eq.f32.partialorder %v1553, 8.507059e+37
    %v1555 = vand.u32 %v1543, 2147483648
    %v1556 = vor.u32 1.1754944e-38, %v1555
    %v1557 = vsel %vm1554, %v1556, %v1552
    %v1558 = vmul.f32 1.0, %v1557
    %v1559 = vmul.f32 %v1496, %v1411
    %v1560 = vmul.f32 %v1456, %v1518
    %v1561 = vadd.f32 %v1559, %v1560
    %v1562 = vtanh.pop %v1561
    %v1563 = vmul.f32 %v1558, %v1562
    %v1564 = vmax.f32 %v513, 0.0
    %v1565 = vmax.f32 %v663, 0.0
    %v1566 = vmax.f32 %v813, 0.0
    %v1567 = vmax.f32 %v963, 0.0
    %v1568 = vmax.f32 %v1113, 0.0
    %v1569 = vmax.f32 %v1263, 0.0
    %v1570 = vmax.f32 %v1413, 0.0
    %v1571 = vmax.f32 %v1563, 0.0
    %v1572 = vsel %vm80, %v1564, %v1571
    %v1573 = vsel %vm80, %v1565, %v1570
    %v1574 = vsel %vm80, %v1566, %v1569
    %v1575 = vsel %vm80, %v1567, %v1568
    %v1576 = vsel %vm80, %v1568, %v1567
    %v1577 = vsel %vm80, %v1569, %v1566
    %v1578 = vsel %vm80, %v1570, %v1565
    %v1579 = vsel %vm80, %v1571, %v1564
    %v1580 = vld [vmem:[%s4] sm:$0xff]
    %v1581 = vld [vmem:[%s4 + $0x8] sm:$0xff]
    %v1582 = vld [vmem:[%s4 + $0x10] sm:$0xff]
    %v1583 = vld [vmem:[%s4 + $0x18] sm:$0xff]
    %v1584 = vld [vmem:[%s4 + $0x20] sm:$0xff]
    %v1585 = vld [vmem:[%s4 + $0x28] sm:$0xff]
    %v1586 = vld [vmem:[%s4 + $0x30] sm:$0xff]
    %v1587 = vld [vmem:[%s4 + $0x38] sm:$0xff]
    %v1588 = vld [vmem:[%s5] sm:$0x1]
    %v1590 = vperm.slane %v1588, 0
    %v1593 = vsel %vm363, %v1572, 0
    %v1596 = vsel %vm363, %v1573, 0
    %v1599 = vsel %vm363, %v1574, 0
    %v1602 = vsel %vm363, %v1575, 0
    %v1605 = vsel %vm363, %v1576, 0
    %v1608 = vsel %vm363, %v1577, 0
    %v1611 = vsel %vm363, %v1578, 0
    %v1614 = vsel %vm363, %v1579, 0
    %1616 = vmatpush.msra.mxu0 0.0
    %1617 = vmatpush.msra.mxu0 0.0
    %1618 = vmatpush.msra.mxu0 0.0
    %1619 = vmatpush.msra.mxu0 0.0
    %1620 = vmatpush.msra.mxu0 0.0
    %1621 = vmatpush.msra.mxu0 0.0
    %1622 = vmatpush.msra.mxu0 0.0
    %1623 = vmatpush.msra.mxu0 0.0
    %1624 = vmatpush.msra.mxu0 %v1587
    %1625 = vmatpush.msra.mxu0 %v1586
    %1626 = vmatpush.msra.mxu0 %v1585
    %1627 = vmatpush.msra.mxu0 %v1584
    %1628 = vmatpush.msra.mxu0 %v1583
    %1629 = vmatpush.msra.mxu0 %v1582
    %1630 = vmatpush.msra.mxu0 %v1581
    %1631 = vmatpush.msra.mxu0 %v1580
    %1632 = vmatmul.f32.gmra.mxu0 %v1593
    %v1633 = vpop.f32.mrf.mxu0
    %v1634 = vadd.f32 %v1590, %v1633
    %1635 = vmatmul.f32.gmra.mxu0 %v1596
    %v1636 = vpop.f32.mrf.mxu0
    %v1637 = vadd.f32 %v1590, %v1636
    %1638 = vmatmul.f32.gmra.mxu0 %v1599
    %v1639 = vpop.f32.mrf.mxu0
    %v1640 = vadd.f32 %v1590, %v1639
    %1641 = vmatmul.f32.gmra.mxu0 %v1602
    %v1642 = vpop.f32.mrf.mxu0
    %v1643 = vadd.f32 %v1590, %v1642
    %1644 = vmatmul.f32.gmra.mxu0 %v1605
    %v1645 = vpop.f32.mrf.mxu0
    %v1646 = vadd.f32 %v1590, %v1645
    %1647 = vmatmul.f32.gmra.mxu0 %v1608
    %v1648 = vpop.f32.mrf.mxu0
    %v1649 = vadd.f32 %v1590, %v1648
    %1650 = vmatmul.f32.gmra.mxu0 %v1611
    %v1651 = vpop.f32.mrf.mxu0
    %v1652 = vadd.f32 %v1590, %v1651
    %1653 = vmatmul.f32.gmra.mxu0 %v1614
    %v1654 = vpop.f32.mrf.mxu0
    %v1655 = vadd.f32 %v1590, %v1654
    %1656 = vdwg.mxu0
    %s1657 = scalar_lea.vmem %s4, 64
    %v1658 = vld [vmem:[%s1657] sm:$0xff]
    %v1659 = vld [vmem:[%s1657 + $0x8] sm:$0xff]
    %v1660 = vld [vmem:[%s1657 + $0x10] sm:$0xff]
    %v1661 = vld [vmem:[%s1657 + $0x18] sm:$0xff]
    %v1662 = vld [vmem:[%s1657 + $0x20] sm:$0xff]
    %v1663 = vld [vmem:[%s1657 + $0x28] sm:$0xff]
    %v1664 = vld [vmem:[%s1657 + $0x30] sm:$0xff]
    %v1665 = vld [vmem:[%s1657 + $0x38] sm:$0xff]
    %s1666 = scalar_lea.vmem %s5, 1
    %v1667 = vld [vmem:[%s1666] sm:$0x1]
    %v1669 = vperm.slane %v1667, 0
    %1671 = vmatpush.msra.mxu0 0.0
    %1672 = vmatpush.msra.mxu0 0.0
    %1673 = vmatpush.msra.mxu0 0.0
    %1674 = vmatpush.msra.mxu0 0.0
    %1675 = vmatpush.msra.mxu0 0.0
    %1676 = vmatpush.msra.mxu0 0.0
    %1677 = vmatpush.msra.mxu0 0.0
    %1678 = vmatpush.msra.mxu0 0.0
    %1679 = vmatpush.msra.mxu0 %v1665
    %1680 = vmatpush.msra.mxu0 %v1664
    %1681 = vmatpush.msra.mxu0 %v1663
    %1682 = vmatpush.msra.mxu0 %v1662
    %1683 = vmatpush.msra.mxu0 %v1661
    %1684 = vmatpush.msra.mxu0 %v1660
    %1685 = vmatpush.msra.mxu0 %v1659
    %1686 = vmatpush.msra.mxu0 %v1658
    %1687 = vmatmul.f32.gmra.mxu0 %v1593
    %v1688 = vpop.f32.mrf.mxu0
    %v1689 = vadd.f32 %v1669, %v1688
    %1690 = vmatmul.f32.gmra.mxu0 %v1596
    %v1691 = vpop.f32.mrf.mxu0
    %v1692 = vadd.f32 %v1669, %v1691
    %1693 = vmatmul.f32.gmra.mxu0 %v1599
    %v1694 = vpop.f32.mrf.mxu0
    %v1695 = vadd.f32 %v1669, %v1694
    %1696 = vmatmul.f32.gmra.mxu0 %v1602
    %v1697 = vpop.f32.mrf.mxu0
    %v1698 = vadd.f32 %v1669, %v1697
    %1699 = vmatmul.f32.gmra.mxu0 %v1605
    %v1700 = vpop.f32.mrf.mxu0
    %v1701 = vadd.f32 %v1669, %v1700
    %1702 = vmatmul.f32.gmra.mxu0 %v1608
    %v1703 = vpop.f32.mrf.mxu0
    %v1704 = vadd.f32 %v1669, %v1703
    %1705 = vmatmul.f32.gmra.mxu0 %v1611
    %v1706 = vpop.f32.mrf.mxu0
    %v1707 = vadd.f32 %v1669, %v1706
    %1708 = vmatmul.f32.gmra.mxu0 %v1614
    %v1709 = vpop.f32.mrf.mxu0
    %v1710 = vadd.f32 %v1669, %v1709
    %1711 = vdwg.mxu0
    %s1712 = scalar_lea.vmem %s4, 128
    %v1713 = vld [vmem:[%s1712] sm:$0xff]
    %v1714 = vld [vmem:[%s1712 + $0x8] sm:$0xff]
    %v1715 = vld [vmem:[%s1712 + $0x10] sm:$0xff]
    %v1716 = vld [vmem:[%s1712 + $0x18] sm:$0xff]
    %v1717 = vld [vmem:[%s1712 + $0x20] sm:$0xff]
    %v1718 = vld [vmem:[%s1712 + $0x28] sm:$0xff]
    %v1719 = vld [vmem:[%s1712 + $0x30] sm:$0xff]
    %v1720 = vld [vmem:[%s1712 + $0x38] sm:$0xff]
    %s1721 = scalar_lea.vmem %s5, 2
    %v1722 = vld [vmem:[%s1721] sm:$0x1]
    %v1724 = vperm.slane %v1722, 0
    %1726 = vmatpush.msra.mxu0 0.0
    %1727 = vmatpush.msra.mxu0 0.0
    %1728 = vmatpush.msra.mxu0 0.0
    %1729 = vmatpush.msra.mxu0 0.0
    %1730 = vmatpush.msra.mxu0 0.0
    %1731 = vmatpush.msra.mxu0 0.0
    %1732 = vmatpush.msra.mxu0 0.0
    %1733 = vmatpush.msra.mxu0 0.0
    %1734 = vmatpush.msra.mxu0 %v1720
    %1735 = vmatpush.msra.mxu0 %v1719
    %1736 = vmatpush.msra.mxu0 %v1718
    %1737 = vmatpush.msra.mxu0 %v1717
    %1738 = vmatpush.msra.mxu0 %v1716
    %1739 = vmatpush.msra.mxu0 %v1715
    %1740 = vmatpush.msra.mxu0 %v1714
    %1741 = vmatpush.msra.mxu0 %v1713
    %1742 = vmatmul.f32.gmra.mxu0 %v1593
    %v1743 = vpop.f32.mrf.mxu0
    %v1744 = vadd.f32 %v1724, %v1743
    %1745 = vmatmul.f32.gmra.mxu0 %v1596
    %v1746 = vpop.f32.mrf.mxu0
    %v1747 = vadd.f32 %v1724, %v1746
    %1748 = vmatmul.f32.gmra.mxu0 %v1599
    %v1749 = vpop.f32.mrf.mxu0
    %v1750 = vadd.f32 %v1724, %v1749
    %1751 = vmatmul.f32.gmra.mxu0 %v1602
    %v1752 = vpop.f32.mrf.mxu0
    %v1753 = vadd.f32 %v1724, %v1752
    %1754 = vmatmul.f32.gmra.mxu0 %v1605
    %v1755 = vpop.f32.mrf.mxu0
    %v1756 = vadd.f32 %v1724, %v1755
    %1757 = vmatmul.f32.gmra.mxu0 %v1608
    %v1758 = vpop.f32.mrf.mxu0
    %v1759 = vadd.f32 %v1724, %v1758
    %1760 = vmatmul.f32.gmra.mxu0 %v1611
    %v1761 = vpop.f32.mrf.mxu0
    %v1762 = vadd.f32 %v1724, %v1761
    %1763 = vmatmul.f32.gmra.mxu0 %v1614
    %v1764 = vpop.f32.mrf.mxu0
    %v1765 = vadd.f32 %v1724, %v1764
    %1766 = vdwg.mxu0
    %s1767 = scalar_lea.vmem %s4, 192
    %v1768 = vld [vmem:[%s1767] sm:$0xff]
    %v1769 = vld [vmem:[%s1767 + $0x8] sm:$0xff]
    %v1770 = vld [vmem:[%s1767 + $0x10] sm:$0xff]
    %v1771 = vld [vmem:[%s1767 + $0x18] sm:$0xff]
    %v1772 = vld [vmem:[%s1767 + $0x20] sm:$0xff]
    %v1773 = vld [vmem:[%s1767 + $0x28] sm:$0xff]
    %v1774 = vld [vmem:[%s1767 + $0x30] sm:$0xff]
    %v1775 = vld [vmem:[%s1767 + $0x38] sm:$0xff]
    %s1776 = scalar_lea.vmem %s5, 3
    %v1777 = vld [vmem:[%s1776] sm:$0x1]
    %v1779 = vperm.slane %v1777, 0
    %1781 = vmatpush.msra.mxu0 0.0
    %1782 = vmatpush.msra.mxu0 0.0
    %1783 = vmatpush.msra.mxu0 0.0
    %1784 = vmatpush.msra.mxu0 0.0
    %1785 = vmatpush.msra.mxu0 0.0
    %1786 = vmatpush.msra.mxu0 0.0
    %1787 = vmatpush.msra.mxu0 0.0
    %1788 = vmatpush.msra.mxu0 0.0
    %1789 = vmatpush.msra.mxu0 %v1775
    %1790 = vmatpush.msra.mxu0 %v1774
    %1791 = vmatpush.msra.mxu0 %v1773
    %1792 = vmatpush.msra.mxu0 %v1772
    %1793 = vmatpush.msra.mxu0 %v1771
    %1794 = vmatpush.msra.mxu0 %v1770
    %1795 = vmatpush.msra.mxu0 %v1769
    %1796 = vmatpush.msra.mxu0 %v1768
    %1797 = vmatmul.f32.gmra.mxu0 %v1593
    %v1798 = vpop.f32.mrf.mxu0
    %v1799 = vadd.f32 %v1779, %v1798
    %1800 = vmatmul.f32.gmra.mxu0 %v1596
    %v1801 = vpop.f32.mrf.mxu0
    %v1802 = vadd.f32 %v1779, %v1801
    %1803 = vmatmul.f32.gmra.mxu0 %v1599
    %v1804 = vpop.f32.mrf.mxu0
    %v1805 = vadd.f32 %v1779, %v1804
    %1806 = vmatmul.f32.gmra.mxu0 %v1602
    %v1807 = vpop.f32.mrf.mxu0
    %v1808 = vadd.f32 %v1779, %v1807
    %1809 = vmatmul.f32.gmra.mxu0 %v1605
    %v1810 = vpop.f32.mrf.mxu0
    %v1811 = vadd.f32 %v1779, %v1810
    %1812 = vmatmul.f32.gmra.mxu0 %v1608
    %v1813 = vpop.f32.mrf.mxu0
    %v1814 = vadd.f32 %v1779, %v1813
    %1815 = vmatmul.f32.gmra.mxu0 %v1611
    %v1816 = vpop.f32.mrf.mxu0
    %v1817 = vadd.f32 %v1779, %v1816
    %1818 = vmatmul.f32.gmra.mxu0 %v1614
    %v1819 = vpop.f32.mrf.mxu0
    %v1820 = vadd.f32 %v1779, %v1819
    %1821 = vdwg.mxu0
    %v1822 = vld [vmem:[%s6] sm:$0xff]
    %v1823 = vld [vmem:[%s6 + $0x8] sm:$0xff]
    %v1824 = vld [vmem:[%s6 + $0x10] sm:$0xff]
    %v1825 = vld [vmem:[%s6 + $0x18] sm:$0xff]
    %s1826 = scalar_lea.vmem %s6, 32
    %v1827 = vld [vmem:[%s1826] sm:$0xff]
    %v1828 = vld [vmem:[%s1826 + $0x8] sm:$0xff]
    %v1829 = vld [vmem:[%s1826 + $0x10] sm:$0xff]
    %v1830 = vld [vmem:[%s1826 + $0x18] sm:$0xff]
    %s1831 = scalar_lea.vmem %s6, 64
    %v1832 = vld [vmem:[%s1831] sm:$0xff]
    %v1833 = vld [vmem:[%s1831 + $0x8] sm:$0xff]
    %v1834 = vld [vmem:[%s1831 + $0x10] sm:$0xff]
    %v1835 = vld [vmem:[%s1831 + $0x18] sm:$0xff]
    %s1836 = scalar_lea.vmem %s6, 96
    %v1837 = vld [vmem:[%s1836] sm:$0xff]
    %v1838 = vld [vmem:[%s1836 + $0x8] sm:$0xff]
    %v1839 = vld [vmem:[%s1836 + $0x10] sm:$0xff]
    %v1840 = vld [vmem:[%s1836 + $0x18] sm:$0xff]
    %vm1841 = vcmask 261120
    %v1842 = vsel %vm1841, 0.0, 0
    %1844 = vmatpush.msra.mxu0 0.0
    %1845 = vmatpush.msra.mxu0 0.0
    %1846 = vmatpush.msra.mxu0 0.0
    %1847 = vmatpush.msra.mxu0 0.0
    %1848 = vmatpush.msra.mxu0 0.0
    %1849 = vmatpush.msra.mxu0 0.0
    %1850 = vmatpush.msra.mxu0 0.0
    %1851 = vmatpush.msra.mxu0 0.0
    %1852 = vmatpush.msra.mxu0 0.0
    %1853 = vmatpush.msra.mxu0 0.0
    %1854 = vmatpush.msra.mxu0 0.0
    %1855 = vmatpush.msra.mxu0 0.0
    %1856 = vmatpush.msra.mxu0 %v1825
    %1857 = vmatpush.msra.mxu0 %v1824
    %1858 = vmatpush.msra.mxu0 %v1823
    %1859 = vmatpush.msra.mxu0 %v1822
    %1860 = vmatmul.f32.gmra.mxu0 %v1842
    %v1861 = vpop.f32.mrf.mxu0
    %v1862 = vadd.f32 0.0, %v1861
    %1863 = vdwg.mxu0
    %v1864 = vadd.f32 %v1634, %v1862
    %v1865 = vxor.u32 %v1864, 2147483648
    %v1866 = vmul.f32 %v1865, 1.442695
    %v1867 = vpow.pop %v1866
    %v1868 = vadd.f32 %v1867, 1.0
    %v1869 = vrcp.pop %v1868
    %v1870 = vmul.f32 %v1868, %v1869
    %v1871 = vsub.f32 1.0, %v1870
    %v1872 = vmul.f32 %v1869, %v1871
    %v1873 = vadd.f32 %v1869, %v1872
    %vm1874 = vweird.f32 %v1868
    %vm1875 = vweird.f32 %v1869
    %vm1876 = vmor %vm1874, %vm1875
    %v1877 = vsel %vm1876, %v1869, %v1873
    %v1878 = vand.u32 2147483647, %v1868
    %vm1879 = vcmp.eq.f32.partialorder %v1878, 8.507059e+37
    %v1880 = vand.u32 %v1868, 2147483648
    %v1881 = vor.u32 1.1754944e-38, %v1880
    %v1882 = vsel %vm1879, %v1881, %v1877
    %v1883 = vmul.f32 1.0, %v1882
    %1884 = vmatpush.msra.mxu0 0.0
    %1885 = vmatpush.msra.mxu0 0.0
    %1886 = vmatpush.msra.mxu0 0.0
    %1887 = vmatpush.msra.mxu0 0.0
    %1888 = vmatpush.msra.mxu0 0.0
    %1889 = vmatpush.msra.mxu0 0.0
    %1890 = vmatpush.msra.mxu0 0.0
    %1891 = vmatpush.msra.mxu0 0.0
    %1892 = vmatpush.msra.mxu0 0.0
    %1893 = vmatpush.msra.mxu0 0.0
    %1894 = vmatpush.msra.mxu0 0.0
    %1895 = vmatpush.msra.mxu0 0.0
    %1896 = vmatpush.msra.mxu0 %v1830
    %1897 = vmatpush.msra.mxu0 %v1829
    %1898 = vmatpush.msra.mxu0 %v1828
    %1899 = vmatpush.msra.mxu0 %v1827
    %1900 = vmatmul.f32.gmra.mxu0 %v1842
    %v1901 = vpop.f32.mrf.mxu0
    %v1902 = vadd.f32 0.0, %v1901
    %1903 = vdwg.mxu0
    %v1904 = vadd.f32 %v1689, %v1902
    %v1905 = vxor.u32 %v1904, 2147483648
    %v1906 = vmul.f32 %v1905, 1.442695
    %v1907 = vpow.pop %v1906
    %v1908 = vadd.f32 %v1907, 1.0
    %v1909 = vrcp.pop %v1908
    %v1910 = vmul.f32 %v1908, %v1909
    %v1911 = vsub.f32 1.0, %v1910
    %v1912 = vmul.f32 %v1909, %v1911
    %v1913 = vadd.f32 %v1909, %v1912
    %vm1914 = vweird.f32 %v1908
    %vm1915 = vweird.f32 %v1909
    %vm1916 = vmor %vm1914, %vm1915
    %v1917 = vsel %vm1916, %v1909, %v1913
    %v1918 = vand.u32 2147483647, %v1908
    %vm1919 = vcmp.eq.f32.partialorder %v1918, 8.507059e+37
    %v1920 = vand.u32 %v1908, 2147483648
    %v1921 = vor.u32 1.1754944e-38, %v1920
    %v1922 = vsel %vm1919, %v1921, %v1917
    %v1923 = vmul.f32 1.0, %v1922
    %1924 = vmatpush.msra.mxu0 0.0
    %1925 = vmatpush.msra.mxu0 0.0
    %1926 = vmatpush.msra.mxu0 0.0
    %1927 = vmatpush.msra.mxu0 0.0
    %1928 = vmatpush.msra.mxu0 0.0
    %1929 = vmatpush.msra.mxu0 0.0
    %1930 = vmatpush.msra.mxu0 0.0
    %1931 = vmatpush.msra.mxu0 0.0
    %1932 = vmatpush.msra.mxu0 0.0
    %1933 = vmatpush.msra.mxu0 0.0
    %1934 = vmatpush.msra.mxu0 0.0
    %1935 = vmatpush.msra.mxu0 0.0
    %1936 = vmatpush.msra.mxu0 %v1835
    %1937 = vmatpush.msra.mxu0 %v1834
    %1938 = vmatpush.msra.mxu0 %v1833
    %1939 = vmatpush.msra.mxu0 %v1832
    %1940 = vmatmul.f32.gmra.mxu0 %v1842
    %v1941 = vpop.f32.mrf.mxu0
    %v1942 = vadd.f32 0.0, %v1941
    %1943 = vdwg.mxu0
    %v1944 = vadd.f32 %v1744, %v1942
    %v1945 = vtanh.pop %v1944
    %1946 = vmatpush.msra.mxu0 0.0
    %1947 = vmatpush.msra.mxu0 0.0
    %1948 = vmatpush.msra.mxu0 0.0
    %1949 = vmatpush.msra.mxu0 0.0
    %1950 = vmatpush.msra.mxu0 0.0
    %1951 = vmatpush.msra.mxu0 0.0
    %1952 = vmatpush.msra.mxu0 0.0
    %1953 = vmatpush.msra.mxu0 0.0
    %1954 = vmatpush.msra.mxu0 0.0
    %1955 = vmatpush.msra.mxu0 0.0
    %1956 = vmatpush.msra.mxu0 0.0
    %1957 = vmatpush.msra.mxu0 0.0
    %1958 = vmatpush.msra.mxu0 %v1840
    %1959 = vmatpush.msra.mxu0 %v1839
    %1960 = vmatpush.msra.mxu0 %v1838
    %1961 = vmatpush.msra.mxu0 %v1837
    %1962 = vmatmul.f32.gmra.mxu0 %v1842
    %v1963 = vpop.f32.mrf.mxu0
    %v1964 = vadd.f32 0.0, %v1963
    %1965 = vdwg.mxu0
    %v1966 = vadd.f32 %v1799, %v1964
    %v1967 = vxor.u32 %v1966, 2147483648
    %v1968 = vmul.f32 %v1967, 1.442695
    %v1969 = vpow.pop %v1968
    %v1970 = vadd.f32 %v1969, 1.0
    %v1971 = vrcp.pop %v1970
    %v1972 = vmul.f32 %v1970, %v1971
    %v1973 = vsub.f32 1.0, %v1972
    %v1974 = vmul.f32 %v1971, %v1973
    %v1975 = vadd.f32 %v1971, %v1974
    %vm1976 = vweird.f32 %v1970
    %vm1977 = vweird.f32 %v1971
    %vm1978 = vmor %vm1976, %vm1977
    %v1979 = vsel %vm1978, %v1971, %v1975
    %v1980 = vand.u32 2147483647, %v1970
    %vm1981 = vcmp.eq.f32.partialorder %v1980, 8.507059e+37
    %v1982 = vand.u32 %v1970, 2147483648
    %v1983 = vor.u32 1.1754944e-38, %v1982
    %v1984 = vsel %vm1981, %v1983, %v1979
    %v1985 = vmul.f32 1.0, %v1984
    %v1986 = vmul.f32 %v1923, 0.0
    %v1987 = vmul.f32 %v1883, %v1945
    %v1988 = vadd.f32 %v1986, %v1987
    %v1989 = vtanh.pop %v1988
    %v1990 = vmul.f32 %v1985, %v1989
    %v1992 = vsel %vm1841, %v1990, 0
    %1994 = vmatpush.msra.mxu0 0.0
    %1995 = vmatpush.msra.mxu0 0.0
    %1996 = vmatpush.msra.mxu0 0.0
    %1997 = vmatpush.msra.mxu0 0.0
    %1998 = vmatpush.msra.mxu0 0.0
    %1999 = vmatpush.msra.mxu0 0.0
    %2000 = vmatpush.msra.mxu0 0.0
    %2001 = vmatpush.msra.mxu0 0.0
    %2002 = vmatpush.msra.mxu0 0.0
    %2003 = vmatpush.msra.mxu0 0.0
    %2004 = vmatpush.msra.mxu0 0.0
    %2005 = vmatpush.msra.mxu0 0.0
    %2006 = vmatpush.msra.mxu0 %v1825
    %2007 = vmatpush.msra.mxu0 %v1824
    %2008 = vmatpush.msra.mxu0 %v1823
    %2009 = vmatpush.msra.mxu0 %v1822
    %2010 = vmatmul.f32.gmra.mxu0 %v1992
    %v2011 = vpop.f32.mrf.mxu0
    %v2012 = vadd.f32 0.0, %v2011
    %2013 = vdwg.mxu0
    %v2014 = vadd.f32 %v1637, %v2012
    %v2015 = vxor.u32 %v2014, 2147483648
    %v2016 = vmul.f32 %v2015, 1.442695
    %v2017 = vpow.pop %v2016
    %v2018 = vadd.f32 %v2017, 1.0
    %v2019 = vrcp.pop %v2018
    %v2020 = vmul.f32 %v2018, %v2019
    %v2021 = vsub.f32 1.0, %v2020
    %v2022 = vmul.f32 %v2019, %v2021
    %v2023 = vadd.f32 %v2019, %v2022
    %vm2024 = vweird.f32 %v2018
    %vm2025 = vweird.f32 %v2019
    %vm2026 = vmor %vm2024, %vm2025
    %v2027 = vsel %vm2026, %v2019, %v2023
    %v2028 = vand.u32 2147483647, %v2018
    %vm2029 = vcmp.eq.f32.partialorder %v2028, 8.507059e+37
    %v2030 = vand.u32 %v2018, 2147483648
    %v2031 = vor.u32 1.1754944e-38, %v2030
    %v2032 = vsel %vm2029, %v2031, %v2027
    %v2033 = vmul.f32 1.0, %v2032
    %2034 = vmatpush.msra.mxu0 0.0
    %2035 = vmatpush.msra.mxu0 0.0
    %2036 = vmatpush.msra.mxu0 0.0
    %2037 = vmatpush.msra.mxu0 0.0
    %2038 = vmatpush.msra.mxu0 0.0
    %2039 = vmatpush.msra.mxu0 0.0
    %2040 = vmatpush.msra.mxu0 0.0
    %2041 = vmatpush.msra.mxu0 0.0
    %2042 = vmatpush.msra.mxu0 0.0
    %2043 = vmatpush.msra.mxu0 0.0
    %2044 = vmatpush.msra.mxu0 0.0
    %2045 = vmatpush.msra.mxu0 0.0
    %2046 = vmatpush.msra.mxu0 %v1830
    %2047 = vmatpush.msra.mxu0 %v1829
    %2048 = vmatpush.msra.mxu0 %v1828
    %2049 = vmatpush.msra.mxu0 %v1827
    %2050 = vmatmul.f32.gmra.mxu0 %v1992
    %v2051 = vpop.f32.mrf.mxu0
    %v2052 = vadd.f32 0.0, %v2051
    %2053 = vdwg.mxu0
    %v2054 = vadd.f32 %v1692, %v2052
    %v2055 = vxor.u32 %v2054, 2147483648
    %v2056 = vmul.f32 %v2055, 1.442695
    %v2057 = vpow.pop %v2056
    %v2058 = vadd.f32 %v2057, 1.0
    %v2059 = vrcp.pop %v2058
    %v2060 = vmul.f32 %v2058, %v2059
    %v2061 = vsub.f32 1.0, %v2060
    %v2062 = vmul.f32 %v2059, %v2061
    %v2063 = vadd.f32 %v2059, %v2062
    %vm2064 = vweird.f32 %v2058
    %vm2065 = vweird.f32 %v2059
    %vm2066 = vmor %vm2064, %vm2065
    %v2067 = vsel %vm2066, %v2059, %v2063
    %v2068 = vand.u32 2147483647, %v2058
    %vm2069 = vcmp.eq.f32.partialorder %v2068, 8.507059e+37
    %v2070 = vand.u32 %v2058, 2147483648
    %v2071 = vor.u32 1.1754944e-38, %v2070
    %v2072 = vsel %vm2069, %v2071, %v2067
    %v2073 = vmul.f32 1.0, %v2072
    %2074 = vmatpush.msra.mxu0 0.0
    %2075 = vmatpush.msra.mxu0 0.0
    %2076 = vmatpush.msra.mxu0 0.0
    %2077 = vmatpush.msra.mxu0 0.0
    %2078 = vmatpush.msra.mxu0 0.0
    %2079 = vmatpush.msra.mxu0 0.0
    %2080 = vmatpush.msra.mxu0 0.0
    %2081 = vmatpush.msra.mxu0 0.0
    %2082 = vmatpush.msra.mxu0 0.0
    %2083 = vmatpush.msra.mxu0 0.0
    %2084 = vmatpush.msra.mxu0 0.0
    %2085 = vmatpush.msra.mxu0 0.0
    %2086 = vmatpush.msra.mxu0 %v1835
    %2087 = vmatpush.msra.mxu0 %v1834
    %2088 = vmatpush.msra.mxu0 %v1833
    %2089 = vmatpush.msra.mxu0 %v1832
    %2090 = vmatmul.f32.gmra.mxu0 %v1992
    %v2091 = vpop.f32.mrf.mxu0
    %v2092 = vadd.f32 0.0, %v2091
    %2093 = vdwg.mxu0
    %v2094 = vadd.f32 %v1747, %v2092
    %v2095 = vtanh.pop %v2094
    %2096 = vmatpush.msra.mxu0 0.0
    %2097 = vmatpush.msra.mxu0 0.0
    %2098 = vmatpush.msra.mxu0 0.0
    %2099 = vmatpush.msra.mxu0 0.0
    %2100 = vmatpush.msra.mxu0 0.0
    %2101 = vmatpush.msra.mxu0 0.0
    %2102 = vmatpush.msra.mxu0 0.0
    %2103 = vmatpush.msra.mxu0 0.0
    %2104 = vmatpush.msra.mxu0 0.0
    %2105 = vmatpush.msra.mxu0 0.0
    %2106 = vmatpush.msra.mxu0 0.0
    %2107 = vmatpush.msra.mxu0 0.0
    %2108 = vmatpush.msra.mxu0 %v1840
    %2109 = vmatpush.msra.mxu0 %v1839
    %2110 = vmatpush.msra.mxu0 %v1838
    %2111 = vmatpush.msra.mxu0 %v1837
    %2112 = vmatmul.f32.gmra.mxu0 %v1992
    %v2113 = vpop.f32.mrf.mxu0
    %v2114 = vadd.f32 0.0, %v2113
    %2115 = vdwg.mxu0
    %v2116 = vadd.f32 %v1802, %v2114
    %v2117 = vxor.u32 %v2116, 2147483648
    %v2118 = vmul.f32 %v2117, 1.442695
    %v2119 = vpow.pop %v2118
    %v2120 = vadd.f32 %v2119, 1.0
    %v2121 = vrcp.pop %v2120
    %v2122 = vmul.f32 %v2120, %v2121
    %v2123 = vsub.f32 1.0, %v2122
    %v2124 = vmul.f32 %v2121, %v2123
    %v2125 = vadd.f32 %v2121, %v2124
    %vm2126 = vweird.f32 %v2120
    %vm2127 = vweird.f32 %v2121
    %vm2128 = vmor %vm2126, %vm2127
    %v2129 = vsel %vm2128, %v2121, %v2125
    %v2130 = vand.u32 2147483647, %v2120
    %vm2131 = vcmp.eq.f32.partialorder %v2130, 8.507059e+37
    %v2132 = vand.u32 %v2120, 2147483648
    %v2133 = vor.u32 1.1754944e-38, %v2132
    %v2134 = vsel %vm2131, %v2133, %v2129
    %v2135 = vmul.f32 1.0, %v2134
    %v2136 = vmul.f32 %v2073, %v1988
    %v2137 = vmul.f32 %v2033, %v2095
    %v2138 = vadd.f32 %v2136, %v2137
    %v2139 = vtanh.pop %v2138
    %v2140 = vmul.f32 %v2135, %v2139
    %v2142 = vsel %vm1841, %v2140, 0
    %2144 = vmatpush.msra.mxu0 0.0
    %2145 = vmatpush.msra.mxu0 0.0
    %2146 = vmatpush.msra.mxu0 0.0
    %2147 = vmatpush.msra.mxu0 0.0
    %2148 = vmatpush.msra.mxu0 0.0
    %2149 = vmatpush.msra.mxu0 0.0
    %2150 = vmatpush.msra.mxu0 0.0
    %2151 = vmatpush.msra.mxu0 0.0
    %2152 = vmatpush.msra.mxu0 0.0
    %2153 = vmatpush.msra.mxu0 0.0
    %2154 = vmatpush.msra.mxu0 0.0
    %2155 = vmatpush.msra.mxu0 0.0
    %2156 = vmatpush.msra.mxu0 %v1825
    %2157 = vmatpush.msra.mxu0 %v1824
    %2158 = vmatpush.msra.mxu0 %v1823
    %2159 = vmatpush.msra.mxu0 %v1822
    %2160 = vmatmul.f32.gmra.mxu0 %v2142
    %v2161 = vpop.f32.mrf.mxu0
    %v2162 = vadd.f32 0.0, %v2161
    %2163 = vdwg.mxu0
    %v2164 = vadd.f32 %v1640, %v2162
    %v2165 = vxor.u32 %v2164, 2147483648
    %v2166 = vmul.f32 %v2165, 1.442695
    %v2167 = vpow.pop %v2166
    %v2168 = vadd.f32 %v2167, 1.0
    %v2169 = vrcp.pop %v2168
    %v2170 = vmul.f32 %v2168, %v2169
    %v2171 = vsub.f32 1.0, %v2170
    %v2172 = vmul.f32 %v2169, %v2171
    %v2173 = vadd.f32 %v2169, %v2172
    %vm2174 = vweird.f32 %v2168
    %vm2175 = vweird.f32 %v2169
    %vm2176 = vmor %vm2174, %vm2175
    %v2177 = vsel %vm2176, %v2169, %v2173
    %v2178 = vand.u32 2147483647, %v2168
    %vm2179 = vcmp.eq.f32.partialorder %v2178, 8.507059e+37
    %v2180 = vand.u32 %v2168, 2147483648
    %v2181 = vor.u32 1.1754944e-38, %v2180
    %v2182 = vsel %vm2179, %v2181, %v2177
    %v2183 = vmul.f32 1.0, %v2182
    %2184 = vmatpush.msra.mxu0 0.0
    %2185 = vmatpush.msra.mxu0 0.0
    %2186 = vmatpush.msra.mxu0 0.0
    %2187 = vmatpush.msra.mxu0 0.0
    %2188 = vmatpush.msra.mxu0 0.0
    %2189 = vmatpush.msra.mxu0 0.0
    %2190 = vmatpush.msra.mxu0 0.0
    %2191 = vmatpush.msra.mxu0 0.0
    %2192 = vmatpush.msra.mxu0 0.0
    %2193 = vmatpush.msra.mxu0 0.0
    %2194 = vmatpush.msra.mxu0 0.0
    %2195 = vmatpush.msra.mxu0 0.0
    %2196 = vmatpush.msra.mxu0 %v1830
    %2197 = vmatpush.msra.mxu0 %v1829
    %2198 = vmatpush.msra.mxu0 %v1828
    %2199 = vmatpush.msra.mxu0 %v1827
    %2200 = vmatmul.f32.gmra.mxu0 %v2142
    %v2201 = vpop.f32.mrf.mxu0
    %v2202 = vadd.f32 0.0, %v2201
    %2203 = vdwg.mxu0
    %v2204 = vadd.f32 %v1695, %v2202
    %v2205 = vxor.u32 %v2204, 2147483648
    %v2206 = vmul.f32 %v2205, 1.442695
    %v2207 = vpow.pop %v2206
    %v2208 = vadd.f32 %v2207, 1.0
    %v2209 = vrcp.pop %v2208
    %v2210 = vmul.f32 %v2208, %v2209
    %v2211 = vsub.f32 1.0, %v2210
    %v2212 = vmul.f32 %v2209, %v2211
    %v2213 = vadd.f32 %v2209, %v2212
    %vm2214 = vweird.f32 %v2208
    %vm2215 = vweird.f32 %v2209
    %vm2216 = vmor %vm2214, %vm2215
    %v2217 = vsel %vm2216, %v2209, %v2213
    %v2218 = vand.u32 2147483647, %v2208
    %vm2219 = vcmp.eq.f32.partialorder %v2218, 8.507059e+37
    %v2220 = vand.u32 %v2208, 2147483648
    %v2221 = vor.u32 1.1754944e-38, %v2220
    %v2222 = vsel %vm2219, %v2221, %v2217
    %v2223 = vmul.f32 1.0, %v2222
    %2224 = vmatpush.msra.mxu0 0.0
    %2225 = vmatpush.msra.mxu0 0.0
    %2226 = vmatpush.msra.mxu0 0.0
    %2227 = vmatpush.msra.mxu0 0.0
    %2228 = vmatpush.msra.mxu0 0.0
    %2229 = vmatpush.msra.mxu0 0.0
    %2230 = vmatpush.msra.mxu0 0.0
    %2231 = vmatpush.msra.mxu0 0.0
    %2232 = vmatpush.msra.mxu0 0.0
    %2233 = vmatpush.msra.mxu0 0.0
    %2234 = vmatpush.msra.mxu0 0.0
    %2235 = vmatpush.msra.mxu0 0.0
    %2236 = vmatpush.msra.mxu0 %v1835
    %2237 = vmatpush.msra.mxu0 %v1834
    %2238 = vmatpush.msra.mxu0 %v1833
    %2239 = vmatpush.msra.mxu0 %v1832
    %2240 = vmatmul.f32.gmra.mxu0 %v2142
    %v2241 = vpop.f32.mrf.mxu0
    %v2242 = vadd.f32 0.0, %v2241
    %2243 = vdwg.mxu0
    %v2244 = vadd.f32 %v1750, %v2242
    %v2245 = vtanh.pop %v2244
    %2246 = vmatpush.msra.mxu0 0.0
    %2247 = vmatpush.msra.mxu0 0.0
    %2248 = vmatpush.msra.mxu0 0.0
    %2249 = vmatpush.msra.mxu0 0.0
    %2250 = vmatpush.msra.mxu0 0.0
    %2251 = vmatpush.msra.mxu0 0.0
    %2252 = vmatpush.msra.mxu0 0.0
    %2253 = vmatpush.msra.mxu0 0.0
    %2254 = vmatpush.msra.mxu0 0.0
    %2255 = vmatpush.msra.mxu0 0.0
    %2256 = vmatpush.msra.mxu0 0.0
    %2257 = vmatpush.msra.mxu0 0.0
    %2258 = vmatpush.msra.mxu0 %v1840
    %2259 = vmatpush.msra.mxu0 %v1839
    %2260 = vmatpush.msra.mxu0 %v1838
    %2261 = vmatpush.msra.mxu0 %v1837
    %2262 = vmatmul.f32.gmra.mxu0 %v2142
    %v2263 = vpop.f32.mrf.mxu0
    %v2264 = vadd.f32 0.0, %v2263
    %2265 = vdwg.mxu0
    %v2266 = vadd.f32 %v1805, %v2264
    %v2267 = vxor.u32 %v2266, 2147483648
    %v2268 = vmul.f32 %v2267, 1.442695
    %v2269 = vpow.pop %v2268
    %v2270 = vadd.f32 %v2269, 1.0
    %v2271 = vrcp.pop %v2270
    %v2272 = vmul.f32 %v2270, %v2271
    %v2273 = vsub.f32 1.0, %v2272
    %v2274 = vmul.f32 %v2271, %v2273
    %v2275 = vadd.f32 %v2271, %v2274
    %vm2276 = vweird.f32 %v2270
    %vm2277 = vweird.f32 %v2271
    %vm2278 = vmor %vm2276, %vm2277
    %v2279 = vsel %vm2278, %v2271, %v2275
    %v2280 = vand.u32 2147483647, %v2270
    %vm2281 = vcmp.eq.f32.partialorder %v2280, 8.507059e+37
    %v2282 = vand.u32 %v2270, 2147483648
    %v2283 = vor.u32 1.1754944e-38, %v2282
    %v2284 = vsel %vm2281, %v2283, %v2279
    %v2285 = vmul.f32 1.0, %v2284
    %v2286 = vmul.f32 %v2223, %v2138
    %v2287 = vmul.f32 %v2183, %v2245
    %v2288 = vadd.f32 %v2286, %v2287
    %v2289 = vtanh.pop %v2288
    %v2290 = vmul.f32 %v2285, %v2289
    %v2292 = vsel %vm1841, %v2290, 0
    %2294 = vmatpush.msra.mxu0 0.0
    %2295 = vmatpush.msra.mxu0 0.0
    %2296 = vmatpush.msra.mxu0 0.0
    %2297 = vmatpush.msra.mxu0 0.0
    %2298 = vmatpush.msra.mxu0 0.0
    %2299 = vmatpush.msra.mxu0 0.0
    %2300 = vmatpush.msra.mxu0 0.0
    %2301 = vmatpush.msra.mxu0 0.0
    %2302 = vmatpush.msra.mxu0 0.0
    %2303 = vmatpush.msra.mxu0 0.0
    %2304 = vmatpush.msra.mxu0 0.0
    %2305 = vmatpush.msra.mxu0 0.0
    %2306 = vmatpush.msra.mxu0 %v1825
    %2307 = vmatpush.msra.mxu0 %v1824
    %2308 = vmatpush.msra.mxu0 %v1823
    %2309 = vmatpush.msra.mxu0 %v1822
    %2310 = vmatmul.f32.gmra.mxu0 %v2292
    %v2311 = vpop.f32.mrf.mxu0
    %v2312 = vadd.f32 0.0, %v2311
    %2313 = vdwg.mxu0
    %v2314 = vadd.f32 %v1643, %v2312
    %v2315 = vxor.u32 %v2314, 2147483648
    %v2316 = vmul.f32 %v2315, 1.442695
    %v2317 = vpow.pop %v2316
    %v2318 = vadd.f32 %v2317, 1.0
    %v2319 = vrcp.pop %v2318
    %v2320 = vmul.f32 %v2318, %v2319
    %v2321 = vsub.f32 1.0, %v2320
    %v2322 = vmul.f32 %v2319, %v2321
    %v2323 = vadd.f32 %v2319, %v2322
    %vm2324 = vweird.f32 %v2318
    %vm2325 = vweird.f32 %v2319
    %vm2326 = vmor %vm2324, %vm2325
    %v2327 = vsel %vm2326, %v2319, %v2323
    %v2328 = vand.u32 2147483647, %v2318
    %vm2329 = vcmp.eq.f32.partialorder %v2328, 8.507059e+37
    %v2330 = vand.u32 %v2318, 2147483648
    %v2331 = vor.u32 1.1754944e-38, %v2330
    %v2332 = vsel %vm2329, %v2331, %v2327
    %v2333 = vmul.f32 1.0, %v2332
    %2334 = vmatpush.msra.mxu0 0.0
    %2335 = vmatpush.msra.mxu0 0.0
    %2336 = vmatpush.msra.mxu0 0.0
    %2337 = vmatpush.msra.mxu0 0.0
    %2338 = vmatpush.msra.mxu0 0.0
    %2339 = vmatpush.msra.mxu0 0.0
    %2340 = vmatpush.msra.mxu0 0.0
    %2341 = vmatpush.msra.mxu0 0.0
    %2342 = vmatpush.msra.mxu0 0.0
    %2343 = vmatpush.msra.mxu0 0.0
    %2344 = vmatpush.msra.mxu0 0.0
    %2345 = vmatpush.msra.mxu0 0.0
    %2346 = vmatpush.msra.mxu0 %v1830
    %2347 = vmatpush.msra.mxu0 %v1829
    %2348 = vmatpush.msra.mxu0 %v1828
    %2349 = vmatpush.msra.mxu0 %v1827
    %2350 = vmatmul.f32.gmra.mxu0 %v2292
    %v2351 = vpop.f32.mrf.mxu0
    %v2352 = vadd.f32 0.0, %v2351
    %2353 = vdwg.mxu0
    %v2354 = vadd.f32 %v1698, %v2352
    %v2355 = vxor.u32 %v2354, 2147483648
    %v2356 = vmul.f32 %v2355, 1.442695
    %v2357 = vpow.pop %v2356
    %v2358 = vadd.f32 %v2357, 1.0
    %v2359 = vrcp.pop %v2358
    %v2360 = vmul.f32 %v2358, %v2359
    %v2361 = vsub.f32 1.0, %v2360
    %v2362 = vmul.f32 %v2359, %v2361
    %v2363 = vadd.f32 %v2359, %v2362
    %vm2364 = vweird.f32 %v2358
    %vm2365 = vweird.f32 %v2359
    %vm2366 = vmor %vm2364, %vm2365
    %v2367 = vsel %vm2366, %v2359, %v2363
    %v2368 = vand.u32 2147483647, %v2358
    %vm2369 = vcmp.eq.f32.partialorder %v2368, 8.507059e+37
    %v2370 = vand.u32 %v2358, 2147483648
    %v2371 = vor.u32 1.1754944e-38, %v2370
    %v2372 = vsel %vm2369, %v2371, %v2367
    %v2373 = vmul.f32 1.0, %v2372
    %2374 = vmatpush.msra.mxu0 0.0
    %2375 = vmatpush.msra.mxu0 0.0
    %2376 = vmatpush.msra.mxu0 0.0
    %2377 = vmatpush.msra.mxu0 0.0
    %2378 = vmatpush.msra.mxu0 0.0
    %2379 = vmatpush.msra.mxu0 0.0
    %2380 = vmatpush.msra.mxu0 0.0
    %2381 = vmatpush.msra.mxu0 0.0
    %2382 = vmatpush.msra.mxu0 0.0
    %2383 = vmatpush.msra.mxu0 0.0
    %2384 = vmatpush.msra.mxu0 0.0
    %2385 = vmatpush.msra.mxu0 0.0
    %2386 = vmatpush.msra.mxu0 %v1835
    %2387 = vmatpush.msra.mxu0 %v1834
    %2388 = vmatpush.msra.mxu0 %v1833
    %2389 = vmatpush.msra.mxu0 %v1832
    %2390 = vmatmul.f32.gmra.mxu0 %v2292
    %v2391 = vpop.f32.mrf.mxu0
    %v2392 = vadd.f32 0.0, %v2391
    %2393 = vdwg.mxu0
    %v2394 = vadd.f32 %v1753, %v2392
    %v2395 = vtanh.pop %v2394
    %2396 = vmatpush.msra.mxu0 0.0
    %2397 = vmatpush.msra.mxu0 0.0
    %2398 = vmatpush.msra.mxu0 0.0
    %2399 = vmatpush.msra.mxu0 0.0
    %2400 = vmatpush.msra.mxu0 0.0
    %2401 = vmatpush.msra.mxu0 0.0
    %2402 = vmatpush.msra.mxu0 0.0
    %2403 = vmatpush.msra.mxu0 0.0
    %2404 = vmatpush.msra.mxu0 0.0
    %2405 = vmatpush.msra.mxu0 0.0
    %2406 = vmatpush.msra.mxu0 0.0
    %2407 = vmatpush.msra.mxu0 0.0
    %2408 = vmatpush.msra.mxu0 %v1840
    %2409 = vmatpush.msra.mxu0 %v1839
    %2410 = vmatpush.msra.mxu0 %v1838
    %2411 = vmatpush.msra.mxu0 %v1837
    %2412 = vmatmul.f32.gmra.mxu0 %v2292
    %v2413 = vpop.f32.mrf.mxu0
    %v2414 = vadd.f32 0.0, %v2413
    %2415 = vdwg.mxu0
    %v2416 = vadd.f32 %v1808, %v2414
    %v2417 = vxor.u32 %v2416, 2147483648
    %v2418 = vmul.f32 %v2417, 1.442695
    %v2419 = vpow.pop %v2418
    %v2420 = vadd.f32 %v2419, 1.0
    %v2421 = vrcp.pop %v2420
    %v2422 = vmul.f32 %v2420, %v2421
    %v2423 = vsub.f32 1.0, %v2422
    %v2424 = vmul.f32 %v2421, %v2423
    %v2425 = vadd.f32 %v2421, %v2424
    %vm2426 = vweird.f32 %v2420
    %vm2427 = vweird.f32 %v2421
    %vm2428 = vmor %vm2426, %vm2427
    %v2429 = vsel %vm2428, %v2421, %v2425
    %v2430 = vand.u32 2147483647, %v2420
    %vm2431 = vcmp.eq.f32.partialorder %v2430, 8.507059e+37
    %v2432 = vand.u32 %v2420, 2147483648
    %v2433 = vor.u32 1.1754944e-38, %v2432
    %v2434 = vsel %vm2431, %v2433, %v2429
    %v2435 = vmul.f32 1.0, %v2434
    %v2436 = vmul.f32 %v2373, %v2288
    %v2437 = vmul.f32 %v2333, %v2395
    %v2438 = vadd.f32 %v2436, %v2437
    %v2439 = vtanh.pop %v2438
    %v2440 = vmul.f32 %v2435, %v2439
    %v2442 = vsel %vm1841, %v2440, 0
    %2444 = vmatpush.msra.mxu0 0.0
    %2445 = vmatpush.msra.mxu0 0.0
    %2446 = vmatpush.msra.mxu0 0.0
    %2447 = vmatpush.msra.mxu0 0.0
    %2448 = vmatpush.msra.mxu0 0.0
    %2449 = vmatpush.msra.mxu0 0.0
    %2450 = vmatpush.msra.mxu0 0.0
    %2451 = vmatpush.msra.mxu0 0.0
    %2452 = vmatpush.msra.mxu0 0.0
    %2453 = vmatpush.msra.mxu0 0.0
    %2454 = vmatpush.msra.mxu0 0.0
    %2455 = vmatpush.msra.mxu0 0.0
    %2456 = vmatpush.msra.mxu0 %v1825
    %2457 = vmatpush.msra.mxu0 %v1824
    %2458 = vmatpush.msra.mxu0 %v1823
    %2459 = vmatpush.msra.mxu0 %v1822
    %2460 = vmatmul.f32.gmra.mxu0 %v2442
    %v2461 = vpop.f32.mrf.mxu0
    %v2462 = vadd.f32 0.0, %v2461
    %2463 = vdwg.mxu0
    %v2464 = vadd.f32 %v1646, %v2462
    %v2465 = vxor.u32 %v2464, 2147483648
    %v2466 = vmul.f32 %v2465, 1.442695
    %v2467 = vpow.pop %v2466
    %v2468 = vadd.f32 %v2467, 1.0
    %v2469 = vrcp.pop %v2468
    %v2470 = vmul.f32 %v2468, %v2469
    %v2471 = vsub.f32 1.0, %v2470
    %v2472 = vmul.f32 %v2469, %v2471
    %v2473 = vadd.f32 %v2469, %v2472
    %vm2474 = vweird.f32 %v2468
    %vm2475 = vweird.f32 %v2469
    %vm2476 = vmor %vm2474, %vm2475
    %v2477 = vsel %vm2476, %v2469, %v2473
    %v2478 = vand.u32 2147483647, %v2468
    %vm2479 = vcmp.eq.f32.partialorder %v2478, 8.507059e+37
    %v2480 = vand.u32 %v2468, 2147483648
    %v2481 = vor.u32 1.1754944e-38, %v2480
    %v2482 = vsel %vm2479, %v2481, %v2477
    %v2483 = vmul.f32 1.0, %v2482
    %2484 = vmatpush.msra.mxu0 0.0
    %2485 = vmatpush.msra.mxu0 0.0
    %2486 = vmatpush.msra.mxu0 0.0
    %2487 = vmatpush.msra.mxu0 0.0
    %2488 = vmatpush.msra.mxu0 0.0
    %2489 = vmatpush.msra.mxu0 0.0
    %2490 = vmatpush.msra.mxu0 0.0
    %2491 = vmatpush.msra.mxu0 0.0
    %2492 = vmatpush.msra.mxu0 0.0
    %2493 = vmatpush.msra.mxu0 0.0
    %2494 = vmatpush.msra.mxu0 0.0
    %2495 = vmatpush.msra.mxu0 0.0
    %2496 = vmatpush.msra.mxu0 %v1830
    %2497 = vmatpush.msra.mxu0 %v1829
    %2498 = vmatpush.msra.mxu0 %v1828
    %2499 = vmatpush.msra.mxu0 %v1827
    %2500 = vmatmul.f32.gmra.mxu0 %v2442
    %v2501 = vpop.f32.mrf.mxu0
    %v2502 = vadd.f32 0.0, %v2501
    %2503 = vdwg.mxu0
    %v2504 = vadd.f32 %v1701, %v2502
    %v2505 = vxor.u32 %v2504, 2147483648
    %v2506 = vmul.f32 %v2505, 1.442695
    %v2507 = vpow.pop %v2506
    %v2508 = vadd.f32 %v2507, 1.0
    %v2509 = vrcp.pop %v2508
    %v2510 = vmul.f32 %v2508, %v2509
    %v2511 = vsub.f32 1.0, %v2510
    %v2512 = vmul.f32 %v2509, %v2511
    %v2513 = vadd.f32 %v2509, %v2512
    %vm2514 = vweird.f32 %v2508
    %vm2515 = vweird.f32 %v2509
    %vm2516 = vmor %vm2514, %vm2515
    %v2517 = vsel %vm2516, %v2509, %v2513
    %v2518 = vand.u32 2147483647, %v2508
    %vm2519 = vcmp.eq.f32.partialorder %v2518, 8.507059e+37
    %v2520 = vand.u32 %v2508, 2147483648
    %v2521 = vor.u32 1.1754944e-38, %v2520
    %v2522 = vsel %vm2519, %v2521, %v2517
    %v2523 = vmul.f32 1.0, %v2522
    %2524 = vmatpush.msra.mxu0 0.0
    %2525 = vmatpush.msra.mxu0 0.0
    %2526 = vmatpush.msra.mxu0 0.0
    %2527 = vmatpush.msra.mxu0 0.0
    %2528 = vmatpush.msra.mxu0 0.0
    %2529 = vmatpush.msra.mxu0 0.0
    %2530 = vmatpush.msra.mxu0 0.0
    %2531 = vmatpush.msra.mxu0 0.0
    %2532 = vmatpush.msra.mxu0 0.0
    %2533 = vmatpush.msra.mxu0 0.0
    %2534 = vmatpush.msra.mxu0 0.0
    %2535 = vmatpush.msra.mxu0 0.0
    %2536 = vmatpush.msra.mxu0 %v1835
    %2537 = vmatpush.msra.mxu0 %v1834
    %2538 = vmatpush.msra.mxu0 %v1833
    %2539 = vmatpush.msra.mxu0 %v1832
    %2540 = vmatmul.f32.gmra.mxu0 %v2442
    %v2541 = vpop.f32.mrf.mxu0
    %v2542 = vadd.f32 0.0, %v2541
    %2543 = vdwg.mxu0
    %v2544 = vadd.f32 %v1756, %v2542
    %v2545 = vtanh.pop %v2544
    %2546 = vmatpush.msra.mxu0 0.0
    %2547 = vmatpush.msra.mxu0 0.0
    %2548 = vmatpush.msra.mxu0 0.0
    %2549 = vmatpush.msra.mxu0 0.0
    %2550 = vmatpush.msra.mxu0 0.0
    %2551 = vmatpush.msra.mxu0 0.0
    %2552 = vmatpush.msra.mxu0 0.0
    %2553 = vmatpush.msra.mxu0 0.0
    %2554 = vmatpush.msra.mxu0 0.0
    %2555 = vmatpush.msra.mxu0 0.0
    %2556 = vmatpush.msra.mxu0 0.0
    %2557 = vmatpush.msra.mxu0 0.0
    %2558 = vmatpush.msra.mxu0 %v1840
    %2559 = vmatpush.msra.mxu0 %v1839
    %2560 = vmatpush.msra.mxu0 %v1838
    %2561 = vmatpush.msra.mxu0 %v1837
    %2562 = vmatmul.f32.gmra.mxu0 %v2442
    %v2563 = vpop.f32.mrf.mxu0
    %v2564 = vadd.f32 0.0, %v2563
    %2565 = vdwg.mxu0
    %v2566 = vadd.f32 %v1811, %v2564
    %v2567 = vxor.u32 %v2566, 2147483648
    %v2568 = vmul.f32 %v2567, 1.442695
    %v2569 = vpow.pop %v2568
    %v2570 = vadd.f32 %v2569, 1.0
    %v2571 = vrcp.pop %v2570
    %v2572 = vmul.f32 %v2570, %v2571
    %v2573 = vsub.f32 1.0, %v2572
    %v2574 = vmul.f32 %v2571, %v2573
    %v2575 = vadd.f32 %v2571, %v2574
    %vm2576 = vweird.f32 %v2570
    %vm2577 = vweird.f32 %v2571
    %vm2578 = vmor %vm2576, %vm2577
    %v2579 = vsel %vm2578, %v2571, %v2575
    %v2580 = vand.u32 2147483647, %v2570
    %vm2581 = vcmp.eq.f32.partialorder %v2580, 8.507059e+37
    %v2582 = vand.u32 %v2570, 2147483648
    %v2583 = vor.u32 1.1754944e-38, %v2582
    %v2584 = vsel %vm2581, %v2583, %v2579
    %v2585 = vmul.f32 1.0, %v2584
    %v2586 = vmul.f32 %v2523, %v2438
    %v2587 = vmul.f32 %v2483, %v2545
    %v2588 = vadd.f32 %v2586, %v2587
    %v2589 = vtanh.pop %v2588
    %v2590 = vmul.f32 %v2585, %v2589
    %v2592 = vsel %vm1841, %v2590, 0
    %2594 = vmatpush.msra.mxu0 0.0
    %2595 = vmatpush.msra.mxu0 0.0
    %2596 = vmatpush.msra.mxu0 0.0
    %2597 = vmatpush.msra.mxu0 0.0
    %2598 = vmatpush.msra.mxu0 0.0
    %2599 = vmatpush.msra.mxu0 0.0
    %2600 = vmatpush.msra.mxu0 0.0
    %2601 = vmatpush.msra.mxu0 0.0
    %2602 = vmatpush.msra.mxu0 0.0
    %2603 = vmatpush.msra.mxu0 0.0
    %2604 = vmatpush.msra.mxu0 0.0
    %2605 = vmatpush.msra.mxu0 0.0
    %2606 = vmatpush.msra.mxu0 %v1825
    %2607 = vmatpush.msra.mxu0 %v1824
    %2608 = vmatpush.msra.mxu0 %v1823
    %2609 = vmatpush.msra.mxu0 %v1822
    %2610 = vmatmul.f32.gmra.mxu0 %v2592
    %v2611 = vpop.f32.mrf.mxu0
    %v2612 = vadd.f32 0.0, %v2611
    %2613 = vdwg.mxu0
    %v2614 = vadd.f32 %v1649, %v2612
    %v2615 = vxor.u32 %v2614, 2147483648
    %v2616 = vmul.f32 %v2615, 1.442695
    %v2617 = vpow.pop %v2616
    %v2618 = vadd.f32 %v2617, 1.0
    %v2619 = vrcp.pop %v2618
    %v2620 = vmul.f32 %v2618, %v2619
    %v2621 = vsub.f32 1.0, %v2620
    %v2622 = vmul.f32 %v2619, %v2621
    %v2623 = vadd.f32 %v2619, %v2622
    %vm2624 = vweird.f32 %v2618
    %vm2625 = vweird.f32 %v2619
    %vm2626 = vmor %vm2624, %vm2625
    %v2627 = vsel %vm2626, %v2619, %v2623
    %v2628 = vand.u32 2147483647, %v2618
    %vm2629 = vcmp.eq.f32.partialorder %v2628, 8.507059e+37
    %v2630 = vand.u32 %v2618, 2147483648
    %v2631 = vor.u32 1.1754944e-38, %v2630
    %v2632 = vsel %vm2629, %v2631, %v2627
    %v2633 = vmul.f32 1.0, %v2632
    %2634 = vmatpush.msra.mxu0 0.0
    %2635 = vmatpush.msra.mxu0 0.0
    %2636 = vmatpush.msra.mxu0 0.0
    %2637 = vmatpush.msra.mxu0 0.0
    %2638 = vmatpush.msra.mxu0 0.0
    %2639 = vmatpush.msra.mxu0 0.0
    %2640 = vmatpush.msra.mxu0 0.0
    %2641 = vmatpush.msra.mxu0 0.0
    %2642 = vmatpush.msra.mxu0 0.0
    %2643 = vmatpush.msra.mxu0 0.0
    %2644 = vmatpush.msra.mxu0 0.0
    %2645 = vmatpush.msra.mxu0 0.0
    %2646 = vmatpush.msra.mxu0 %v1830
    %2647 = vmatpush.msra.mxu0 %v1829
    %2648 = vmatpush.msra.mxu0 %v1828
    %2649 = vmatpush.msra.mxu0 %v1827
    %2650 = vmatmul.f32.gmra.mxu0 %v2592
    %v2651 = vpop.f32.mrf.mxu0
    %v2652 = vadd.f32 0.0, %v2651
    %2653 = vdwg.mxu0
    %v2654 = vadd.f32 %v1704, %v2652
    %v2655 = vxor.u32 %v2654, 2147483648
    %v2656 = vmul.f32 %v2655, 1.442695
    %v2657 = vpow.pop %v2656
    %v2658 = vadd.f32 %v2657, 1.0
    %v2659 = vrcp.pop %v2658
    %v2660 = vmul.f32 %v2658, %v2659
    %v2661 = vsub.f32 1.0, %v2660
    %v2662 = vmul.f32 %v2659, %v2661
    %v2663 = vadd.f32 %v2659, %v2662
    %vm2664 = vweird.f32 %v2658
    %vm2665 = vweird.f32 %v2659
    %vm2666 = vmor %vm2664, %vm2665
    %v2667 = vsel %vm2666, %v2659, %v2663
    %v2668 = vand.u32 2147483647, %v2658
    %vm2669 = vcmp.eq.f32.partialorder %v2668, 8.507059e+37
    %v2670 = vand.u32 %v2658, 2147483648
    %v2671 = vor.u32 1.1754944e-38, %v2670
    %v2672 = vsel %vm2669, %v2671, %v2667
    %v2673 = vmul.f32 1.0, %v2672
    %2674 = vmatpush.msra.mxu0 0.0
    %2675 = vmatpush.msra.mxu0 0.0
    %2676 = vmatpush.msra.mxu0 0.0
    %2677 = vmatpush.msra.mxu0 0.0
    %2678 = vmatpush.msra.mxu0 0.0
    %2679 = vmatpush.msra.mxu0 0.0
    %2680 = vmatpush.msra.mxu0 0.0
    %2681 = vmatpush.msra.mxu0 0.0
    %2682 = vmatpush.msra.mxu0 0.0
    %2683 = vmatpush.msra.mxu0 0.0
    %2684 = vmatpush.msra.mxu0 0.0
    %2685 = vmatpush.msra.mxu0 0.0
    %2686 = vmatpush.msra.mxu0 %v1835
    %2687 = vmatpush.msra.mxu0 %v1834
    %2688 = vmatpush.msra.mxu0 %v1833
    %2689 = vmatpush.msra.mxu0 %v1832
    %2690 = vmatmul.f32.gmra.mxu0 %v2592
    %v2691 = vpop.f32.mrf.mxu0
    %v2692 = vadd.f32 0.0, %v2691
    %2693 = vdwg.mxu0
    %v2694 = vadd.f32 %v1759, %v2692
    %v2695 = vtanh.pop %v2694
    %2696 = vmatpush.msra.mxu0 0.0
    %2697 = vmatpush.msra.mxu0 0.0
    %2698 = vmatpush.msra.mxu0 0.0
    %2699 = vmatpush.msra.mxu0 0.0
    %2700 = vmatpush.msra.mxu0 0.0
    %2701 = vmatpush.msra.mxu0 0.0
    %2702 = vmatpush.msra.mxu0 0.0
    %2703 = vmatpush.msra.mxu0 0.0
    %2704 = vmatpush.msra.mxu0 0.0
    %2705 = vmatpush.msra.mxu0 0.0
    %2706 = vmatpush.msra.mxu0 0.0
    %2707 = vmatpush.msra.mxu0 0.0
    %2708 = vmatpush.msra.mxu0 %v1840
    %2709 = vmatpush.msra.mxu0 %v1839
    %2710 = vmatpush.msra.mxu0 %v1838
    %2711 = vmatpush.msra.mxu0 %v1837
    %2712 = vmatmul.f32.gmra.mxu0 %v2592
    %v2713 = vpop.f32.mrf.mxu0
    %v2714 = vadd.f32 0.0, %v2713
    %2715 = vdwg.mxu0
    %v2716 = vadd.f32 %v1814, %v2714
    %v2717 = vxor.u32 %v2716, 2147483648
    %v2718 = vmul.f32 %v2717, 1.442695
    %v2719 = vpow.pop %v2718
    %v2720 = vadd.f32 %v2719, 1.0
    %v2721 = vrcp.pop %v2720
    %v2722 = vmul.f32 %v2720, %v2721
    %v2723 = vsub.f32 1.0, %v2722
    %v2724 = vmul.f32 %v2721, %v2723
    %v2725 = vadd.f32 %v2721, %v2724
    %vm2726 = vweird.f32 %v2720
    %vm2727 = vweird.f32 %v2721
    %vm2728 = vmor %vm2726, %vm2727
    %v2729 = vsel %vm2728, %v2721, %v2725
    %v2730 = vand.u32 2147483647, %v2720
    %vm2731 = vcmp.eq.f32.partialorder %v2730, 8.507059e+37
    %v2732 = vand.u32 %v2720, 2147483648
    %v2733 = vor.u32 1.1754944e-38, %v2732
    %v2734 = vsel %vm2731, %v2733, %v2729
    %v2735 = vmul.f32 1.0, %v2734
    %v2736 = vmul.f32 %v2673, %v2588
    %v2737 = vmul.f32 %v2633, %v2695
    %v2738 = vadd.f32 %v2736, %v2737
    %v2739 = vtanh.pop %v2738
    %v2740 = vmul.f32 %v2735, %v2739
    %v2742 = vsel %vm1841, %v2740, 0
    %2744 = vmatpush.msra.mxu0 0.0
    %2745 = vmatpush.msra.mxu0 0.0
    %2746 = vmatpush.msra.mxu0 0.0
    %2747 = vmatpush.msra.mxu0 0.0
    %2748 = vmatpush.msra.mxu0 0.0
    %2749 = vmatpush.msra.mxu0 0.0
    %2750 = vmatpush.msra.mxu0 0.0
    %2751 = vmatpush.msra.mxu0 0.0
    %2752 = vmatpush.msra.mxu0 0.0
    %2753 = vmatpush.msra.mxu0 0.0
    %2754 = vmatpush.msra.mxu0 0.0
    %2755 = vmatpush.msra.mxu0 0.0
    %2756 = vmatpush.msra.mxu0 %v1825
    %2757 = vmatpush.msra.mxu0 %v1824
    %2758 = vmatpush.msra.mxu0 %v1823
    %2759 = vmatpush.msra.mxu0 %v1822
    %2760 = vmatmul.f32.gmra.mxu0 %v2742
    %v2761 = vpop.f32.mrf.mxu0
    %v2762 = vadd.f32 0.0, %v2761
    %2763 = vdwg.mxu0
    %v2764 = vadd.f32 %v1652, %v2762
    %v2765 = vxor.u32 %v2764, 2147483648
    %v2766 = vmul.f32 %v2765, 1.442695
    %v2767 = vpow.pop %v2766
    %v2768 = vadd.f32 %v2767, 1.0
    %v2769 = vrcp.pop %v2768
    %v2770 = vmul.f32 %v2768, %v2769
    %v2771 = vsub.f32 1.0, %v2770
    %v2772 = vmul.f32 %v2769, %v2771
    %v2773 = vadd.f32 %v2769, %v2772
    %vm2774 = vweird.f32 %v2768
    %vm2775 = vweird.f32 %v2769
    %vm2776 = vmor %vm2774, %vm2775
    %v2777 = vsel %vm2776, %v2769, %v2773
    %v2778 = vand.u32 2147483647, %v2768
    %vm2779 = vcmp.eq.f32.partialorder %v2778, 8.507059e+37
    %v2780 = vand.u32 %v2768, 2147483648
    %v2781 = vor.u32 1.1754944e-38, %v2780
    %v2782 = vsel %vm2779, %v2781, %v2777
    %v2783 = vmul.f32 1.0, %v2782
    %2784 = vmatpush.msra.mxu0 0.0
    %2785 = vmatpush.msra.mxu0 0.0
    %2786 = vmatpush.msra.mxu0 0.0
    %2787 = vmatpush.msra.mxu0 0.0
    %2788 = vmatpush.msra.mxu0 0.0
    %2789 = vmatpush.msra.mxu0 0.0
    %2790 = vmatpush.msra.mxu0 0.0
    %2791 = vmatpush.msra.mxu0 0.0
    %2792 = vmatpush.msra.mxu0 0.0
    %2793 = vmatpush.msra.mxu0 0.0
    %2794 = vmatpush.msra.mxu0 0.0
    %2795 = vmatpush.msra.mxu0 0.0
    %2796 = vmatpush.msra.mxu0 %v1830
    %2797 = vmatpush.msra.mxu0 %v1829
    %2798 = vmatpush.msra.mxu0 %v1828
    %2799 = vmatpush.msra.mxu0 %v1827
    %2800 = vmatmul.f32.gmra.mxu0 %v2742
    %v2801 = vpop.f32.mrf.mxu0
    %v2802 = vadd.f32 0.0, %v2801
    %2803 = vdwg.mxu0
    %v2804 = vadd.f32 %v1707, %v2802
    %v2805 = vxor.u32 %v2804, 2147483648
    %v2806 = vmul.f32 %v2805, 1.442695
    %v2807 = vpow.pop %v2806
    %v2808 = vadd.f32 %v2807, 1.0
    %v2809 = vrcp.pop %v2808
    %v2810 = vmul.f32 %v2808, %v2809
    %v2811 = vsub.f32 1.0, %v2810
    %v2812 = vmul.f32 %v2809, %v2811
    %v2813 = vadd.f32 %v2809, %v2812
    %vm2814 = vweird.f32 %v2808
    %vm2815 = vweird.f32 %v2809
    %vm2816 = vmor %vm2814, %vm2815
    %v2817 = vsel %vm2816, %v2809, %v2813
    %v2818 = vand.u32 2147483647, %v2808
    %vm2819 = vcmp.eq.f32.partialorder %v2818, 8.507059e+37
    %v2820 = vand.u32 %v2808, 2147483648
    %v2821 = vor.u32 1.1754944e-38, %v2820
    %v2822 = vsel %vm2819, %v2821, %v2817
    %v2823 = vmul.f32 1.0, %v2822
    %2824 = vmatpush.msra.mxu0 0.0
    %2825 = vmatpush.msra.mxu0 0.0
    %2826 = vmatpush.msra.mxu0 0.0
    %2827 = vmatpush.msra.mxu0 0.0
    %2828 = vmatpush.msra.mxu0 0.0
    %2829 = vmatpush.msra.mxu0 0.0
    %2830 = vmatpush.msra.mxu0 0.0
    %2831 = vmatpush.msra.mxu0 0.0
    %2832 = vmatpush.msra.mxu0 0.0
    %2833 = vmatpush.msra.mxu0 0.0
    %2834 = vmatpush.msra.mxu0 0.0
    %2835 = vmatpush.msra.mxu0 0.0
    %2836 = vmatpush.msra.mxu0 %v1835
    %2837 = vmatpush.msra.mxu0 %v1834
    %2838 = vmatpush.msra.mxu0 %v1833
    %2839 = vmatpush.msra.mxu0 %v1832
    %2840 = vmatmul.f32.gmra.mxu0 %v2742
    %v2841 = vpop.f32.mrf.mxu0
    %v2842 = vadd.f32 0.0, %v2841
    %2843 = vdwg.mxu0
    %v2844 = vadd.f32 %v1762, %v2842
    %v2845 = vtanh.pop %v2844
    %2846 = vmatpush.msra.mxu0 0.0
    %2847 = vmatpush.msra.mxu0 0.0
    %2848 = vmatpush.msra.mxu0 0.0
    %2849 = vmatpush.msra.mxu0 0.0
    %2850 = vmatpush.msra.mxu0 0.0
    %2851 = vmatpush.msra.mxu0 0.0
    %2852 = vmatpush.msra.mxu0 0.0
    %2853 = vmatpush.msra.mxu0 0.0
    %2854 = vmatpush.msra.mxu0 0.0
    %2855 = vmatpush.msra.mxu0 0.0
    %2856 = vmatpush.msra.mxu0 0.0
    %2857 = vmatpush.msra.mxu0 0.0
    %2858 = vmatpush.msra.mxu0 %v1840
    %2859 = vmatpush.msra.mxu0 %v1839
    %2860 = vmatpush.msra.mxu0 %v1838
    %2861 = vmatpush.msra.mxu0 %v1837
    %2862 = vmatmul.f32.gmra.mxu0 %v2742
    %v2863 = vpop.f32.mrf.mxu0
    %v2864 = vadd.f32 0.0, %v2863
    %2865 = vdwg.mxu0
    %v2866 = vadd.f32 %v1817, %v2864
    %v2867 = vxor.u32 %v2866, 2147483648
    %v2868 = vmul.f32 %v2867, 1.442695
    %v2869 = vpow.pop %v2868
    %v2870 = vadd.f32 %v2869, 1.0
    %v2871 = vrcp.pop %v2870
    %v2872 = vmul.f32 %v2870, %v2871
    %v2873 = vsub.f32 1.0, %v2872
    %v2874 = vmul.f32 %v2871, %v2873
    %v2875 = vadd.f32 %v2871, %v2874
    %vm2876 = vweird.f32 %v2870
    %vm2877 = vweird.f32 %v2871
    %vm2878 = vmor %vm2876, %vm2877
    %v2879 = vsel %vm2878, %v2871, %v2875
    %v2880 = vand.u32 2147483647, %v2870
    %vm2881 = vcmp.eq.f32.partialorder %v2880, 8.507059e+37
    %v2882 = vand.u32 %v2870, 2147483648
    %v2883 = vor.u32 1.1754944e-38, %v2882
    %v2884 = vsel %vm2881, %v2883, %v2879
    %v2885 = vmul.f32 1.0, %v2884
    %v2886 = vmul.f32 %v2823, %v2738
    %v2887 = vmul.f32 %v2783, %v2845
    %v2888 = vadd.f32 %v2886, %v2887
    %v2889 = vtanh.pop %v2888
    %v2890 = vmul.f32 %v2885, %v2889
    %v2892 = vsel %vm1841, %v2890, 0
    %2894 = vmatpush.msra.mxu0 0.0
    %2895 = vmatpush.msra.mxu0 0.0
    %2896 = vmatpush.msra.mxu0 0.0
    %2897 = vmatpush.msra.mxu0 0.0
    %2898 = vmatpush.msra.mxu0 0.0
    %2899 = vmatpush.msra.mxu0 0.0
    %2900 = vmatpush.msra.mxu0 0.0
    %2901 = vmatpush.msra.mxu0 0.0
    %2902 = vmatpush.msra.mxu0 0.0
    %2903 = vmatpush.msra.mxu0 0.0
    %2904 = vmatpush.msra.mxu0 0.0
    %2905 = vmatpush.msra.mxu0 0.0
    %2906 = vmatpush.msra.mxu0 %v1825
    %2907 = vmatpush.msra.mxu0 %v1824
    %2908 = vmatpush.msra.mxu0 %v1823
    %2909 = vmatpush.msra.mxu0 %v1822
    %2910 = vmatmul.f32.gmra.mxu0 %v2892
    %v2911 = vpop.f32.mrf.mxu0
    %v2912 = vadd.f32 0.0, %v2911
    %2913 = vdwg.mxu0
    %v2914 = vadd.f32 %v1655, %v2912
    %v2915 = vxor.u32 %v2914, 2147483648
    %v2916 = vmul.f32 %v2915, 1.442695
    %v2917 = vpow.pop %v2916
    %v2918 = vadd.f32 %v2917, 1.0
    %v2919 = vrcp.pop %v2918
    %v2920 = vmul.f32 %v2918, %v2919
    %v2921 = vsub.f32 1.0, %v2920
    %v2922 = vmul.f32 %v2919, %v2921
    %v2923 = vadd.f32 %v2919, %v2922
    %vm2924 = vweird.f32 %v2918
    %vm2925 = vweird.f32 %v2919
    %vm2926 = vmor %vm2924, %vm2925
    %v2927 = vsel %vm2926, %v2919, %v2923
    %v2928 = vand.u32 2147483647, %v2918
    %vm2929 = vcmp.eq.f32.partialorder %v2928, 8.507059e+37
    %v2930 = vand.u32 %v2918, 2147483648
    %v2931 = vor.u32 1.1754944e-38, %v2930
    %v2932 = vsel %vm2929, %v2931, %v2927
    %v2933 = vmul.f32 1.0, %v2932
    %2934 = vmatpush.msra.mxu0 0.0
    %2935 = vmatpush.msra.mxu0 0.0
    %2936 = vmatpush.msra.mxu0 0.0
    %2937 = vmatpush.msra.mxu0 0.0
    %2938 = vmatpush.msra.mxu0 0.0
    %2939 = vmatpush.msra.mxu0 0.0
    %2940 = vmatpush.msra.mxu0 0.0
    %2941 = vmatpush.msra.mxu0 0.0
    %2942 = vmatpush.msra.mxu0 0.0
    %2943 = vmatpush.msra.mxu0 0.0
    %2944 = vmatpush.msra.mxu0 0.0
    %2945 = vmatpush.msra.mxu0 0.0
    %2946 = vmatpush.msra.mxu0 %v1830
    %2947 = vmatpush.msra.mxu0 %v1829
    %2948 = vmatpush.msra.mxu0 %v1828
    %2949 = vmatpush.msra.mxu0 %v1827
    %2950 = vmatmul.f32.gmra.mxu0 %v2892
    %v2951 = vpop.f32.mrf.mxu0
    %v2952 = vadd.f32 0.0, %v2951
    %2953 = vdwg.mxu0
    %v2954 = vadd.f32 %v1710, %v2952
    %v2955 = vxor.u32 %v2954, 2147483648
    %v2956 = vmul.f32 %v2955, 1.442695
    %v2957 = vpow.pop %v2956
    %v2958 = vadd.f32 %v2957, 1.0
    %v2959 = vrcp.pop %v2958
    %v2960 = vmul.f32 %v2958, %v2959
    %v2961 = vsub.f32 1.0, %v2960
    %v2962 = vmul.f32 %v2959, %v2961
    %v2963 = vadd.f32 %v2959, %v2962
    %vm2964 = vweird.f32 %v2958
    %vm2965 = vweird.f32 %v2959
    %vm2966 = vmor %vm2964, %vm2965
    %v2967 = vsel %vm2966, %v2959, %v2963
    %v2968 = vand.u32 2147483647, %v2958
    %vm2969 = vcmp.eq.f32.partialorder %v2968, 8.507059e+37
    %v2970 = vand.u32 %v2958, 2147483648
    %v2971 = vor.u32 1.1754944e-38, %v2970
    %v2972 = vsel %vm2969, %v2971, %v2967
    %v2973 = vmul.f32 1.0, %v2972
    %2974 = vmatpush.msra.mxu0 0.0
    %2975 = vmatpush.msra.mxu0 0.0
    %2976 = vmatpush.msra.mxu0 0.0
    %2977 = vmatpush.msra.mxu0 0.0
    %2978 = vmatpush.msra.mxu0 0.0
    %2979 = vmatpush.msra.mxu0 0.0
    %2980 = vmatpush.msra.mxu0 0.0
    %2981 = vmatpush.msra.mxu0 0.0
    %2982 = vmatpush.msra.mxu0 0.0
    %2983 = vmatpush.msra.mxu0 0.0
    %2984 = vmatpush.msra.mxu0 0.0
    %2985 = vmatpush.msra.mxu0 0.0
    %2986 = vmatpush.msra.mxu0 %v1835
    %2987 = vmatpush.msra.mxu0 %v1834
    %2988 = vmatpush.msra.mxu0 %v1833
    %2989 = vmatpush.msra.mxu0 %v1832
    %2990 = vmatmul.f32.gmra.mxu0 %v2892
    %v2991 = vpop.f32.mrf.mxu0
    %v2992 = vadd.f32 0.0, %v2991
    %2993 = vdwg.mxu0
    %v2994 = vadd.f32 %v1765, %v2992
    %v2995 = vtanh.pop %v2994
    %2996 = vmatpush.msra.mxu0 0.0
    %2997 = vmatpush.msra.mxu0 0.0
    %2998 = vmatpush.msra.mxu0 0.0
    %2999 = vmatpush.msra.mxu0 0.0
    %3000 = vmatpush.msra.mxu0 0.0
    %3001 = vmatpush.msra.mxu0 0.0
    %3002 = vmatpush.msra.mxu0 0.0
    %3003 = vmatpush.msra.mxu0 0.0
    %3004 = vmatpush.msra.mxu0 0.0
    %3005 = vmatpush.msra.mxu0 0.0
    %3006 = vmatpush.msra.mxu0 0.0
    %3007 = vmatpush.msra.mxu0 0.0
    %3008 = vmatpush.msra.mxu0 %v1840
    %3009 = vmatpush.msra.mxu0 %v1839
    %3010 = vmatpush.msra.mxu0 %v1838
    %3011 = vmatpush.msra.mxu0 %v1837
    %3012 = vmatmul.f32.gmra.mxu0 %v2892
    %v3013 = vpop.f32.mrf.mxu0
    %v3014 = vadd.f32 0.0, %v3013
    %3015 = vdwg.mxu0
    %v3016 = vadd.f32 %v1820, %v3014
    %v3017 = vxor.u32 %v3016, 2147483648
    %v3018 = vmul.f32 %v3017, 1.442695
    %v3019 = vpow.pop %v3018
    %v3020 = vadd.f32 %v3019, 1.0
    %v3021 = vrcp.pop %v3020
    %v3022 = vmul.f32 %v3020, %v3021
    %v3023 = vsub.f32 1.0, %v3022
    %v3024 = vmul.f32 %v3021, %v3023
    %v3025 = vadd.f32 %v3021, %v3024
    %vm3026 = vweird.f32 %v3020
    %vm3027 = vweird.f32 %v3021
    %vm3028 = vmor %vm3026, %vm3027
    %v3029 = vsel %vm3028, %v3021, %v3025
    %v3030 = vand.u32 2147483647, %v3020
    %vm3031 = vcmp.eq.f32.partialorder %v3030, 8.507059e+37
    %v3032 = vand.u32 %v3020, 2147483648
    %v3033 = vor.u32 1.1754944e-38, %v3032
    %v3034 = vsel %vm3031, %v3033, %v3029
    %v3035 = vmul.f32 1.0, %v3034
    %v3036 = vmul.f32 %v2973, %v2888
    %v3037 = vmul.f32 %v2933, %v2995
    %v3038 = vadd.f32 %v3036, %v3037
    %v3039 = vtanh.pop %v3038
    %v3040 = vmul.f32 %v3035, %v3039
    %v3041 = vmax.f32 %v3040, 0.0
    %v3042 = vld [vmem:[%s7] sm:$0xff]
    %v3043 = vld [vmem:[%s7 + $0x8] sm:$0xff]
    %v3044 = vld [vmem:[%s7 + $0x10] sm:$0xff]
    %v3045 = vld [vmem:[%s7 + $0x18] sm:$0xff]
    %v3046 = vld [vmem:[%s7 + $0x20] sm:$0xff]
    %v3047 = vld [vmem:[%s7 + $0x28] sm:$0xff]
    %v3048 = vld [vmem:[%s7 + $0x30] sm:$0xff]
    %v3049 = vld [vmem:[%s7 + $0x38] sm:$0xff]
    %v3050 = vld [vmem:[%s8] sm:$0x1]
    %v3052 = vperm.slane %v3050, 0
    %3054 = vmatpush.msra.mxu0 0.0
    %3055 = vmatpush.msra.mxu0 0.0
    %3056 = vmatpush.msra.mxu0 0.0
    %3057 = vmatpush.msra.mxu0 0.0
    %3058 = vmatpush.msra.mxu0 0.0
    %3059 = vmatpush.msra.mxu0 0.0
    %3060 = vmatpush.msra.mxu0 0.0
    %3061 = vmatpush.msra.mxu0 0.0
    %3062 = vmatpush.msra.mxu0 %v3049
    %3063 = vmatpush.msra.mxu0 %v3048
    %3064 = vmatpush.msra.mxu0 %v3047
    %3065 = vmatpush.msra.mxu0 %v3046
    %3066 = vmatpush.msra.mxu0 %v3045
    %3067 = vmatpush.msra.mxu0 %v3044
    %3068 = vmatpush.msra.mxu0 %v3043
    %3069 = vmatpush.msra.mxu0 %v3042
    %3070 = vmatmul.f32.gmra.mxu0 %v1614
    %v3071 = vpop.f32.mrf.mxu0
    %v3072 = vadd.f32 %v3052, %v3071
    %3073 = vdwg.mxu0
    %v3074 = vxor.u32 %v3072, 2147483648
    %v3075 = vmul.f32 %v3074, 1.442695
    %v3076 = vpow.pop %v3075
    %v3077 = vadd.f32 %v3076, 1.0
    %v3078 = vrcp.pop %v3077
    %v3079 = vmul.f32 %v3077, %v3078
    %v3080 = vsub.f32 1.0, %v3079
    %v3081 = vmul.f32 %v3078, %v3080
    %v3082 = vadd.f32 %v3078, %v3081
    %vm3083 = vweird.f32 %v3077
    %vm3084 = vweird.f32 %v3078
    %vm3085 = vmor %vm3083, %vm3084
    %v3086 = vsel %vm3085, %v3078, %v3082
    %v3087 = vand.u32 2147483647, %v3077
    %vm3088 = vcmp.eq.f32.partialorder %v3087, 8.507059e+37
    %v3089 = vand.u32 %v3077, 2147483648
    %v3090 = vor.u32 1.1754944e-38, %v3089
    %v3091 = vsel %vm3088, %v3090, %v3086
    %v3092 = vmul.f32 1.0, %v3091
    %v3093 = vtanh.pop %v3072
    %3095 = vrot.lane.b32.xlu0 %v3093, 64
    %v3096 = vpop.permute.xlu0 %3095
    %v3098 = vmul.f32 %v3092, %v3096
    %v3099 = vtanh.pop %v3098
    %3101 = vrot.lane.b32.xlu0 %v3099, 96
    %v3102 = vpop.permute.xlu0 %3101
    %v3104 = vmul.f32 %v3092, %v3102
    %v3105 = vmax.f32 %v3104, 0.0
    %3107 = vrot.lane.b32.xlu0 %v3105, 64
    %v3108 = vpop.permute.xlu0 %3107
    %v3110 = vsel %vm1841, %v3041, %v3108
    %v3111 = vld [vmem:[#allocation4] sm:$0xff]
    %v3112 = vld [vmem:[#allocation4 + $0x8] sm:$0xff]
    %v3113 = vld [vmem:[#allocation4 + $0x10] sm:$0xff]
    %v3114 = vld [vmem:[#allocation4 + $0x18] sm:$0xff]
    %v3115 = vld [vmem:[#allocation4 + $0x20] sm:$0xff]
    %v3116 = vld [vmem:[#allocation4 + $0x28] sm:$0xff]
    %v3117 = vld [vmem:[#allocation4 + $0x30] sm:$0xff]
    %v3118 = vld [vmem:[#allocation4 + $0x38] sm:$0xff]
    %v3119 = vld [vmem:[%s10] sm:$0x1]
    %v3121 = vperm.slane %v3119, 0
    %v3124 = vsel %vm363, %v3110, 0
    %3126 = vmatpush.msra.mxu0 0.0
    %3127 = vmatpush.msra.mxu0 0.0
    %3128 = vmatpush.msra.mxu0 0.0
    %3129 = vmatpush.msra.mxu0 0.0
    %3130 = vmatpush.msra.mxu0 0.0
    %3131 = vmatpush.msra.mxu0 0.0
    %3132 = vmatpush.msra.mxu0 0.0
    %3133 = vmatpush.msra.mxu0 0.0
    %3134 = vmatpush.msra.mxu0 %v3118
    %3135 = vmatpush.msra.mxu0 %v3117
    %3136 = vmatpush.msra.mxu0 %v3116
    %3137 = vmatpush.msra.mxu0 %v3115
    %3138 = vmatpush.msra.mxu0 %v3114
    %3139 = vmatpush.msra.mxu0 %v3113
    %3140 = vmatpush.msra.mxu0 %v3112
    %3141 = vmatpush.msra.mxu0 %v3111
    %3142 = vmatmul.f32.gmra.mxu0 %v3124
    %v3143 = vpop.f32.mrf.mxu0
    %v3144 = vadd.f32 %v3121, %v3143
    %3145 = vdwg.mxu0
    %3146 = vst [vmem:[%s11] sm:$0xff] %v3144
    // Predicated region
    $region54: #{bitcoin_bilstm_forward.1} parent=1 // pred_check
      _
    $region55: #{bitcoin_bilstm_forward.1} parent=1 // pred_check_branch
      %3148 = sbr.rel (0) target = $region57
    $region56: #{bitcoin_bilstm_forward.1} parent=1 // pred_region
      _
    $region57: #{bitcoin_bilstm_forward.1} parent=1 // pred_fallthru
      _
    // Predicated region
    $region58: #{bitcoin_bilstm_forward.1} parent=1 // pred_check
      _
    $region59: #{bitcoin_bilstm_forward.1} parent=1 // pred_check_branch
      %3150 = sbr.rel (0) target = $region61
    $region60: #{bitcoin_bilstm_forward.1} parent=1 // pred_region
      _
    $region61: #{bitcoin_bilstm_forward.1} parent=1 // pred_fallthru
      _
    %3151 = vsyncpa [#allocation3], 1
    %3152 = vsyncpa [#allocation5], 1

</llo_original>
